<compile_context>
chip_gen: v6e
topology: v6e:2x2x1
jax: 0.10.0
libtpu: 0.0.40
codegen_flags: <defaults>
</compile_context>

<pallas_src>
import functools

import jax
import jax.numpy as jnp
from jax import lax
from jax.experimental import pallas as pl
from jax.experimental.pallas import tpu as pltpu

# ---- small synthetic Mamba2 config ----
D_MODEL = 32
EXPAND = 2
D_INNER = EXPAND * D_MODEL                        # 64
HEADDIM = 32
NHEADS = D_INNER // HEADDIM                       # 2
D_STATE = 16
D_CONV = 4
NGROUPS = 1                                       # single B/C group
EPS = 1e-5

CONV_DIM = D_INNER + 2 * NGROUPS * D_STATE        # 96  ([x | B | C] conv channels)
IN_WIDTH = 2 * D_INNER + 2 * NGROUPS * D_STATE + NHEADS   # 162 ([z | x | B | C | dt])

PARAM_ORDER = ('Win', 'conv_w', 'conv_b', 'dt_bias', 'A_log', 'D_ch', 'norm_w', 'Wout')


# ---------- shared math helpers (used by kernel and reference) ----------
def _softplus(x):
    return jnp.where(x > 20.0, x, jnp.log(1.0 + jnp.exp(jnp.minimum(x, 20.0))))


def _silu(x):
    return x * (1.0 / (1.0 + jnp.exp(-x)))


def _causal_conv(val, w, b):
    # reference-only helper.  val: (L, C), w[k, c] == torch_conv_weight[c, 0, k], b: (1, C)
    L, C = val.shape
    padded = jnp.concatenate([jnp.zeros((D_CONV - 1, C), val.dtype), val], axis=0)
    acc = jnp.broadcast_to(b, (L, C))
    for k in range(D_CONV):
        acc = acc + w[k:k + 1, :] * padded[k:k + L, :]
    return acc


# ---------- Pallas kernel: chunked bidirectional Mamba2 (SSD form) ----------
def _genomix_kernel(*refs, bidirectional, bt, q, mm_dtype):
    f32 = jnp.float32
    if bidirectional:
        (u_f_ref, u_b_ref, Win, convw, convb, dtb, Alog, Dch, nw, Wout,
         out_f_ref, out_b_ref, st_f, cc_f, st_b, cc_b) = refs
    else:
        (u_f_ref, Win, convw, convb, dtb, Alog, Dch, nw, Wout,
         out_f_ref, st_f, cc_f) = refs
        u_b_ref = out_b_ref = st_b = cc_b = None

    Q = q
    c_idx = pl.program_id(1)

    # chunk 0 (per batch tile): reset the carried SSM state and conv boundary rows
    @pl.when(c_idx == 0)
    def _():
        st_f[...] = jnp.zeros_like(st_f)
        cc_f[...] = jnp.zeros_like(cc_f)
        if bidirectional:
            st_b[...] = jnp.zeros_like(st_b)
            cc_b[...] = jnp.zeros_like(cc_b)

    # (Q, Q) index grids, shared by both directions and all batch elements in the tile
    ii = lax.broadcasted_iota(jnp.int32, (Q, Q), 0)      # row  t (output position)
    jj = lax.broadcasted_iota(jnp.int32, (Q, Q), 1)      # col  s (source position)
    NEG = jnp.float32(-1e30)

    def expand_heads(v):
        # (R, NHEADS) -> (R, D_INNER); channels of a head are contiguous
        rows = v.shape[0]
        return jnp.concatenate(
            [jnp.broadcast_to(v[:, h:h + 1], (rows, HEADDIM)) for h in range(NHEADS)],
            axis=1)

    def run_direction(u_ref, out_ref, state_ref, carry_ref, d, is_bwd):
        if is_bwd:
            Tm = (ii > jj).astype(f32)       # strict lower  -> exclusive cumsum
            Um = (jj > ii).astype(f32)       # strict upper  -> exclusive cumsum, transposed
            mask = jj >= ii                  # anti-causal: sources s >= t
        else:
            Tm = (jj <= ii).astype(f32)      # inclusive lower -> inclusive cumsum
            Um = (ii <= jj).astype(f32)      # inclusive upper -> inclusive cumsum, transposed
            mask = ii >= jj                  # causal: sources s <= t

        W_in = Win[d].astype(mm_dtype)                   # (D, IN_WIDTH)
        W_out = Wout[d].astype(mm_dtype)                 # (D_INNER, D)
        cw = convw[d].astype(f32)                        # (D_CONV, CONV_DIM)
        cb = convb[d].astype(f32)                        # (1, CONV_DIM)
        A = -jnp.exp(Alog[d].astype(f32))                # (1, NHEADS), A < 0
        dt_b = dtb[d].astype(f32)                        # (1, NHEADS)
        D_c = Dch[d].astype(f32)                         # (1, D_INNER)
        n_w = nw[d].astype(f32)                          # (1, D_INNER)

        # fused in_proj across the batch tile: (bt*Q, D) @ (D, 162)
        u2d = jnp.concatenate([u_ref[b].astype(mm_dtype) for b in range(bt)], axis=0)
        proj = jnp.dot(u2d, W_in, preferred_element_type=f32)

        yn_all = []
        for b in range(bt):
            p = proj[b * Q:(b + 1) * Q, :]
            z = p[:, :D_INNER]
            xBC_raw = p[:, D_INNER:D_INNER + CONV_DIM]
            dt = _softplus(p[:, D_INNER + CONV_DIM:IN_WIDTH] + dt_b)     # (Q, NHEADS)

            # causal (fwd) / anti-causal (bwd) depthwise conv with boundary-row carry
            carry = carry_ref[b]                                         # (D_CONV-1, CONV_DIM)
            conv = jnp.broadcast_to(cb, (Q, CONV_DIM))
            if is_bwd:
                padded = jnp.concatenate([xBC_raw, carry], axis=0)
                for k in range(D_CONV):                                  # reversed taps
                    conv = conv + cw[D_CONV - 1 - k:D_CONV - k, :] * padded[k:k + Q, :]
                carry_ref[b] = xBC_raw[:D_CONV - 1, :]                   # feeds the earlier chunk
            else:
                padded = jnp.concatenate([carry, xBC_raw], axis=0)
                for k in range(D_CONV):
                    conv = conv + cw[k:k + 1, :] * padded[k:k + Q, :]
                carry_ref[b] = xBC_raw[Q - (D_CONV - 1):, :]             # feeds the next chunk
            xBC = _silu(conv)
            x = xBC[:, :D_INNER]
            Bm = xBC[:, D_INNER:D_INNER + D_STATE]
            Cm = xBC[:, D_INNER + D_STATE:CONV_DIM]

            # per-chunk decay cumsums (kept in f32; tiny O(Q^2 * NHEADS) matmuls)
            dtA = dt * A                                                 # (Q, NHEADS), <= 0
            total = jnp.sum(dtA, axis=0, keepdims=True)                  # (1, NHEADS)
            cs = jnp.dot(Tm, dtA, preferred_element_type=f32)            # (Q, NHEADS)
            csT = lax.dot_general(dtA, Um, (((0,), (0,)), ((), ())),
                                  preferred_element_type=f32)            # (NHEADS, Q) = cs^T

            CB = lax.dot_general(Cm.astype(mm_dtype), Bm.astype(mm_dtype),
                                 (((1,), (1,)), ((), ())),
                                 preferred_element_type=f32)             # (Q, Q) = C_t . B_s
            h_prev = state_ref[b].astype(f32)                            # (D_STATE, D_INNER)
            CHp = jnp.dot(Cm.astype(mm_dtype), h_prev.astype(mm_dtype),
                          preferred_element_type=f32)                    # (Q, D_INNER)

            dt_ch = expand_heads(dt)
            dtx = dt_ch * x                                              # (Q, D_INNER)
            if is_bwd:
                w_inter = total - cs      # decay from t to the chunk boundary
                w_state = cs              # decay from the chunk boundary to source s
            else:
                w_inter = cs
                w_state = total - cs
            w_inter_ch = expand_heads(jnp.exp(w_inter))
            w_state_ch = expand_heads(jnp.exp(w_state))
            g_ch = expand_heads(jnp.exp(total))                          # (1, D_INNER)

            # intra-chunk SSD: masked decayed scores, per-head contiguous column slices
            y_parts = []
            for h in range(NHEADS):
                ld = cs[:, h:h + 1] - csT[h:h + 1, :]                    # (Q, Q) VPU broadcast
                if is_bwd:
                    ld = -ld
                S = (CB * jnp.exp(jnp.where(mask, ld, NEG))).astype(mm_dtype)
                dtx_h = dtx[:, h * HEADDIM:(h + 1) * HEADDIM].astype(mm_dtype)
                y_parts.append(jnp.dot(S, dtx_h, preferred_element_type=f32))
            y = jnp.concatenate(y_parts, axis=1) + w_inter_ch * CHp      # + inter-chunk term

            # inter-chunk state update: h_new = exp(total)*h_prev + B^T @ (w * dtx)
            state_ref[b] = g_ch * h_prev + lax.dot_general(
                Bm.astype(mm_dtype), (w_state_ch * dtx).astype(mm_dtype),
                (((0,), (0,)), ((), ())), preferred_element_type=f32)

            # skip connection, gated RMSNorm (norm(y * silu(z)))
            y = y + D_c * x
            yg = y * _silu(z)
            var = jnp.mean(yg * yg, axis=-1, keepdims=True)
            yn_all.append(yg * lax.rsqrt(var + EPS) * n_w)

        # fused out_proj across the batch tile: (bt*Q, 64) @ (64, D)
        yn = jnp.concatenate(yn_all, axis=0).astype(mm_dtype)
        out = jnp.dot(yn, W_out, preferred_element_type=f32)
        for b in range(bt):
            out_ref[b] = out[b * Q:(b + 1) * Q, :].astype(out_ref.dtype)

    run_direction(u_f_ref, out_f_ref, st_f, cc_f, 0, False)
    if bidirectional:
        run_direction(u_b_ref, out_b_ref, st_b, cc_b, 1, True)


def _cost_estimate(batch, L, n_dirs, Q, itemsize):
    n_chunks = L // Q
    per_chunk = (2 * Q * D_MODEL * IN_WIDTH            # in_proj
                 + 2 * Q * CONV_DIM * D_CONV           # depthwise conv
                 + 2 * 2 * Q * Q * NHEADS              # cumsum matmuls (cs + cs^T)
                 + 2 * Q * Q * D_STATE                 # CB = C . B^T
                 + 2 * Q * Q * D_INNER                 # intra S @ dtx (all heads)
                 + 2 * 2 * Q * D_STATE * D_INNER       # inter C @ h_prev and state update
                 + 2 * Q * D_INNER * D_MODEL)          # out_proj
    flops = batch * n_dirs * n_chunks * per_chunk
    transc = batch * n_dirs * n_chunks * (Q * Q * NHEADS
                                          + Q * (CONV_DIM + D_INNER + 6 * NHEADS))
    param_bytes = 4 * n_dirs * (D_MODEL * IN_WIDTH + D_CONV * CONV_DIM + CONV_DIM
                                + 4 * NHEADS + 2 * D_INNER + D_INNER * D_MODEL)
    bytes_accessed = itemsize * batch * L * D_MODEL * 2 * n_dirs + param_bytes
    return pl.CostEstimate(flops=int(flops), transcendentals=int(transc),
                           bytes_accessed=int(bytes_accessed))


def _const_map(nd):
    return lambda b, c: (0,) * nd


# ---------- GenoMixMamba2Extension forward (single fused pallas_call) ----------
def genomix_mamba2_extension(u, params_fwd, params_bwd=None, bidirectional=True,
                             strategy='add', chunk=128, batch_tile=8,
                             mxu_dtype=jnp.bfloat16):
    B, L, D = u.shape
    assert D == D_MODEL
    if bidirectional and strategy == 'concat':
        # TODO(synk): 'concat' strategy (concat_proj linear) not implemented in-kernel.
        raise NotImplementedError("bidirectional_strategy='concat' not implemented")

    Q = min(chunk, L)
    assert L % Q == 0, "sequence length must be divisible by the chunk size"
    assert Q % 8 == 0 or Q == L, "chunk must be a multiple of 8 (sublane alignment)"
    n_chunks = L // Q
    Bt = max(dv for dv in range(1, min(batch_tile, B) + 1) if B % dv == 0)

    if bidirectional:
        assert params_bwd is not None
        stacked = [jnp.stack([params_fwd[k], params_bwd[k]]) for k in PARAM_ORDER]
        n_dirs = 2
    else:
        stacked = [params_fwd[k][None] for k in PARAM_ORDER]   # single copy, no duplication
        n_dirs = 1

    kernel = functools.partial(_genomix_kernel, bidirectional=bidirectional,
                               bt=Bt, q=Q, mm_dtype=mxu_dtype)

    in_specs = [pl.BlockSpec((Bt, Q, D), lambda b, c: (b, c, 0))]
    if bidirectional:
        # backward direction walks the chunks in reverse so its state carry flows
        # from the end of the sequence toward the beginning.
        in_specs.append(pl.BlockSpec((Bt, Q, D), lambda b, c: (b, n_chunks - 1 - c, 0)))
    for arr in stacked:
        in_specs.append(pl.BlockSpec(arr.shape, _const_map(arr.ndim)))

    out_spec_f = pl.BlockSpec((Bt, Q, D), lambda b, c: (b, c, 0))
    if bidirectional:
        out_specs = [out_spec_f,
                     pl.BlockSpec((Bt, Q, D), lambda b, c: (b, n_chunks - 1 - c, 0))]
        out_shape = (jax.ShapeDtypeStruct((B, L, D), u.dtype),
                     jax.ShapeDtypeStruct((B, L, D), u.dtype))
    else:
        out_specs = out_spec_f
        out_shape = jax.ShapeDtypeStruct((B, L, D), u.dtype)

    scratch = [pltpu.VMEM((Bt, D_STATE, D_INNER), jnp.float32),      # fwd SSM state
               pltpu.VMEM((Bt, D_CONV - 1, CONV_DIM), jnp.float32)]  # fwd conv carry
    if bidirectional:
        scratch += [pltpu.VMEM((Bt, D_STATE, D_INNER), jnp.float32),
                    pltpu.VMEM((Bt, D_CONV - 1, CONV_DIM), jnp.float32)]

    grid_spec = pltpu.PrefetchScalarGridSpec(
        num_scalar_prefetch=0,
        grid=(B // Bt, n_chunks),
        in_specs=in_specs,
        out_specs=out_specs,
        scratch_shapes=scratch,
    )
    call = pl.pallas_call(
        kernel,
        out_shape=out_shape,
        grid_spec=grid_spec,
        compiler_params=pltpu.CompilerParams(
            dimension_semantics=("parallel", "arbitrary"),
            # size Q so the per-step working set stays well under this on v7x (64 MiB VMEM)
            vmem_limit_bytes=48 * 1024 * 1024),
        cost_estimate=_cost_estimate(B, L, n_dirs, Q, u.dtype.itemsize),
    )
    if bidirectional:
        out_f, out_b = call(u, u, *stacked)
        if strategy == 'add':
            return out_f + out_b
        elif strategy == 'ewmul':
            return out_f * out_b
        else:
            raise ValueError(f"unknown strategy {strategy}")
    return call(u, *stacked)


# ---------- plain-JAX reference (serial recurrence; module semantics) ----------
def mamba2_ref_single(u, p):
    proj = u @ p['Win']
    z = proj[:, :D_INNER]
    xBC = proj[:, D_INNER:D_INNER + CONV_DIM]
    dt = _softplus(proj[:, D_INNER + CONV_DIM:] + p['dt_bias'])
    xBC = _silu(_causal_conv(xBC, p['conv_w'], p['conv_b']))
    x = xBC[:, :D_INNER]
    Bm = xBC[:, D_INNER:D_INNER + D_STATE]
    Cm = xBC[:, D_INNER + D_STATE:]
    A = -jnp.exp(p['A_log'])
    dA = jnp.exp(dt * A)
    dA_ch = jnp.repeat(dA, HEADDIM, axis=-1)
    dt_ch = jnp.repeat(dt, HEADDIM, axis=-1)
    dtx = dt_ch * x

    def step(h, inp):
        dAt, dtxt, Bt, Ct = inp
        h = dAt[None, :] * h + Bt[:, None] * dtxt[None, :]
        return h, (Ct[:, None] * h).sum(0)

    h0 = jnp.zeros((D_STATE, D_INNER), jnp.float32)
    _, ys = lax.scan(step, h0, (dA_ch, dtx, Bm, Cm))
    y = ys + p['D_ch'] * x
    yg = y * _silu(z)
    var = jnp.mean(yg * yg, axis=-1, keepdims=True)
    yn = yg * lax.rsqrt(var + EPS) * p['norm_w']
    return yn @ p['Wout']


# ---------- deterministic parameter init (synthetic, fused layout) ----------
def init_mamba2_params(key):
    ks = jax.random.split(key, 6)
    s = 0.05
    n = lambda k, shape, scale=s: jax.random.normal(k, shape, jnp.float32) * scale
    return {
        'Win':     n(ks[0], (D_MODEL, IN_WIDTH)),          # [Wz | Wx | Wb | Wc | Wdt]
        'conv_w':  n(ks[1], (D_CONV, CONV_DIM), 0.2),      # [cwx | cwb | cwc]
        'conv_b':  n(ks[2], (1, CONV_DIM), 0.1),
        'dt_bias': n(ks[3], (1, NHEADS), 0.5),
        'A_log':   jnp.log(jnp.arange(1, NHEADS + 1, dtype=jnp.float32))[None, :],
        'D_ch':    jnp.ones((1, D_INNER), jnp.float32),
        'norm_w':  jnp.ones((1, D_INNER), jnp.float32),
        'Wout':    n(ks[4], (D_INNER, D_MODEL)),
    }
    # TODO(synk): inference_params / allocate_inference_cache (stateful decode cache)
    # is not exercised; only the training/prefill forward path is implemented.


if __name__ == "__main__":
    key = jax.random.PRNGKey(0)
    kx, kf, kb = jax.random.split(key, 3)
    B, L = 2, 16
    u = jax.random.normal(kx, (B, L, D_MODEL), jnp.float32)
    params_fwd = init_mamba2_params(kf)
    params_bwd = init_mamba2_params(kb)

    # exact module semantics: fwd + flip(bwd(flip(u)))
    ref_f = jax.vmap(lambda uu: mamba2_ref_single(uu, params_fwd))(u)
    ref_b = jnp.flip(jax.vmap(lambda uu: mamba2_ref_single(uu, params_bwd))(
        jnp.flip(u, axis=1)), axis=1)
    ref = ref_f + ref_b

    # 1) algorithm check: f32 MXU path, single chunk
    out32 = genomix_mamba2_extension(u, params_fwd, params_bwd, bidirectional=True,
                                     strategy='add', chunk=16, mxu_dtype=jnp.float32)
    out32 = jax.block_until_ready(out32)
    assert out32.shape == (B, L, D_MODEL)
    err = float(jnp.max(jnp.abs(out32 - ref)))
    assert jnp.allclose(out32, ref, atol=1e-3, rtol=1e-3), f"f32/1-chunk max_err={err}"

    # 2) chunked path (exercises inter-chunk state + conv boundary carries), f32 MXU
    out_ck = genomix_mamba2_extension(u, params_fwd, params_bwd, bidirectional=True,
                                      strategy='add', chunk=8, mxu_dtype=jnp.float32)
    out_ck = jax.block_until_ready(out_ck)
    err = float(jnp.max(jnp.abs(out_ck - ref)))
    assert jnp.allclose(out_ck, ref, atol=1e-3, rtol=1e-3), f"f32/chunked max_err={err}"

    # 3) performance configuration: bf16 MXU operands (default), looser tolerance
    out_bf = genomix_mamba2_extension(u, params_fwd, params_bwd, bidirectional=True,
                                      strategy='add', chunk=16)
    out_bf = jax.block_until_ready(out_bf)
    err = float(jnp.max(jnp.abs(out_bf - ref)))
    assert jnp.allclose(out_bf, ref, atol=4e-2, rtol=2e-2), f"bf16 max_err={err}"

    # 4) unidirectional path
    out_uni = genomix_mamba2_extension(u, params_fwd, None, bidirectional=False,
                                       chunk=16, mxu_dtype=jnp.float32)
    out_uni = jax.block_until_ready(out_uni)
    err = float(jnp.max(jnp.abs(out_uni - ref_f)))
    assert jnp.allclose(out_uni, ref_f, atol=1e-3, rtol=1e-3), f"uni max_err={err}"

    print("KERNEL_OK")
</pallas_src>

<mosaic_0001>
module attributes {stable_mosaic.version = 11 : i64} {
  func.func @_genomix_kernel(%arg0: i32, %arg1: i32, %arg2: memref<2x16x32xf32, #tpu.memory_space<vmem>>, %arg3: memref<2x16x32xf32, #tpu.memory_space<vmem>>, %arg4: memref<2x32x162xf32, #tpu.memory_space<vmem>>, %arg5: memref<2x4x96xf32, #tpu.memory_space<vmem>>, %arg6: memref<2x1x96xf32, #tpu.memory_space<vmem>>, %arg7: memref<2x1x2xf32, #tpu.memory_space<vmem>>, %arg8: memref<2x1x2xf32, #tpu.memory_space<vmem>>, %arg9: memref<2x1x64xf32, #tpu.memory_space<vmem>>, %arg10: memref<2x1x64xf32, #tpu.memory_space<vmem>>, %arg11: memref<2x64x32xf32, #tpu.memory_space<vmem>>, %arg12: memref<2x16x32xf32, #tpu.memory_space<vmem>>, %arg13: memref<2x16x32xf32, #tpu.memory_space<vmem>>, %arg14: memref<2x16x64xf32, #tpu.memory_space<vmem>>, %arg15: memref<2x3x96xf32, #tpu.memory_space<vmem>>, %arg16: memref<2x16x64xf32, #tpu.memory_space<vmem>>, %arg17: memref<2x3x96xf32, #tpu.memory_space<vmem>>) attributes {dimension_semantics = [#tpu.dimension_semantics<parallel>, #tpu.dimension_semantics<arbitrary>], iteration_bounds = array<i64: 1, 1>, scalar_prefetch = 0 : i64, scratch_operands = 4 : i64, tpu.core_type = #tpu.core_type<tc>, window_params = [{transform_indices = @transform_0, window_bounds = array<i64: 2, 16, 32>}, {transform_indices = @transform_1, window_bounds = array<i64: 2, 16, 32>}, {pipeline_mode = #tpu.pipeline_mode<synchronous>, transform_indices = @transform_2, window_bounds = array<i64: 2, 32, 162>}, {pipeline_mode = #tpu.pipeline_mode<synchronous>, transform_indices = @transform_3, window_bounds = array<i64: 2, 4, 96>}, {pipeline_mode = #tpu.pipeline_mode<synchronous>, transform_indices = @transform_4, window_bounds = array<i64: 2, 1, 96>}, {pipeline_mode = #tpu.pipeline_mode<synchronous>, transform_indices = @transform_5, window_bounds = array<i64: 2, 1, 2>}, {pipeline_mode = #tpu.pipeline_mode<synchronous>, transform_indices = @transform_6, window_bounds = array<i64: 2, 1, 2>}, {pipeline_mode = #tpu.pipeline_mode<synchronous>, transform_indices = @transform_7, window_bounds = array<i64: 2, 1, 64>}, {pipeline_mode = #tpu.pipeline_mode<synchronous>, transform_indices = @transform_8, window_bounds = array<i64: 2, 1, 64>}, {pipeline_mode = #tpu.pipeline_mode<synchronous>, transform_indices = @transform_9, window_bounds = array<i64: 2, 64, 32>}, {transform_indices = @transform_10, window_bounds = array<i64: 2, 16, 32>}, {transform_indices = @transform_11, window_bounds = array<i64: 2, 16, 32>}]} {
    %c0_i32 = arith.constant 0 : i32
    %0 = arith.cmpi eq, %arg1, %c0_i32 : i32
    %1 = arith.extui %0 : i1 to i32
    %c0_i32_0 = arith.constant 0 : i32
    %2 = arith.cmpi ne, %1, %c0_i32_0 : i32
    scf.if %2 {
      %cst_216 = arith.constant 0.000000e+00 : f32
      %721 = vector.broadcast %cst_216 : f32 to vector<2x16x64xf32>
      %c0_217 = arith.constant 0 : index
      %c0_218 = arith.constant 0 : index
      %c0_219 = arith.constant 0 : index
      %722 = vector.load %arg14[%c0_217, %c0_218, %c0_219] : memref<2x16x64xf32, #tpu.memory_space<vmem>>, vector<2x16x64xf32>
      tpu.vector_store %arg14[%c0_217, %c0_218, %c0_219], %721 {strides = array<i32>} : memref<2x16x64xf32, #tpu.memory_space<vmem>>, vector<2x16x64xf32>,
      %cst_220 = arith.constant 0.000000e+00 : f32
      %723 = vector.broadcast %cst_220 : f32 to vector<2x3x96xf32>
      %c0_221 = arith.constant 0 : index
      %c0_222 = arith.constant 0 : index
      %c0_223 = arith.constant 0 : index
      %724 = vector.load %arg15[%c0_221, %c0_222, %c0_223] : memref<2x3x96xf32, #tpu.memory_space<vmem>>, vector<2x3x96xf32>
      tpu.vector_store %arg15[%c0_221, %c0_222, %c0_223], %723 {strides = array<i32>} : memref<2x3x96xf32, #tpu.memory_space<vmem>>, vector<2x3x96xf32>,
      %cst_224 = arith.constant 0.000000e+00 : f32
      %725 = vector.broadcast %cst_224 : f32 to vector<2x16x64xf32>
      %c0_225 = arith.constant 0 : index
      %c0_226 = arith.constant 0 : index
      %c0_227 = arith.constant 0 : index
      %726 = vector.load %arg16[%c0_225, %c0_226, %c0_227] : memref<2x16x64xf32, #tpu.memory_space<vmem>>, vector<2x16x64xf32>
      tpu.vector_store %arg16[%c0_225, %c0_226, %c0_227], %725 {strides = array<i32>} : memref<2x16x64xf32, #tpu.memory_space<vmem>>, vector<2x16x64xf32>,
      %cst_228 = arith.constant 0.000000e+00 : f32
      %727 = vector.broadcast %cst_228 : f32 to vector<2x3x96xf32>
      %c0_229 = arith.constant 0 : index
      %c0_230 = arith.constant 0 : index
      %c0_231 = arith.constant 0 : index
      %728 = vector.load %arg17[%c0_229, %c0_230, %c0_231] : memref<2x3x96xf32, #tpu.memory_space<vmem>>, vector<2x3x96xf32>
      tpu.vector_store %arg17[%c0_229, %c0_230, %c0_231], %727 {strides = array<i32>} : memref<2x3x96xf32, #tpu.memory_space<vmem>>, vector<2x3x96xf32>,
    } else {
    }
    %3 = tpu.iota {dimensions = array<i32: 0>} : vector<16x16xi32>
    %4 = tpu.iota {dimensions = array<i32: 1>} : vector<16x16xi32>
    %5 = arith.cmpi sle, %4, %3 : vector<16x16xi32>
    %6 = arith.extui %5 : vector<16x16xi1> to vector<16x16xi32>
    %7 = arith.sitofp %6 : vector<16x16xi32> to vector<16x16xf32>
    %8 = arith.cmpi sle, %3, %4 : vector<16x16xi32>
    %9 = arith.extui %8 : vector<16x16xi1> to vector<16x16xi32>
    %10 = arith.sitofp %9 : vector<16x16xi32> to vector<16x16xf32>
    %11 = arith.cmpi sge, %3, %4 : vector<16x16xi32>
    %c0 = arith.constant 0 : index
    %c0_1 = arith.constant 0 : index
    %c0_2 = arith.constant 0 : index
    %12 = vector.load %arg4[%c0, %c0_1, %c0_2] : memref<2x32x162xf32, #tpu.memory_space<vmem>>, vector<1x32x162xf32>
    %13 = vector.shape_cast %12 : vector<1x32x162xf32> to vector<32x162xf32>
    %c0_3 = arith.constant 0 : index
    %c0_4 = arith.constant 0 : index
    %c0_5 = arith.constant 0 : index
    %14 = vector.load %arg11[%c0_3, %c0_4, %c0_5] : memref<2x64x32xf32, #tpu.memory_space<vmem>>, vector<1x64x32xf32>
    %15 = vector.shape_cast %14 : vector<1x64x32xf32> to vector<64x32xf32>
    %c0_6 = arith.constant 0 : index
    %c0_7 = arith.constant 0 : index
    %c0_8 = arith.constant 0 : index
    %16 = vector.load %arg5[%c0_6, %c0_7, %c0_8] : memref<2x4x96xf32, #tpu.memory_space<vmem>>, vector<1x4x96xf32>
    %17 = vector.shape_cast %16 : vector<1x4x96xf32> to vector<4x96xf32>
    %c0_9 = arith.constant 0 : index
    %c0_10 = arith.constant 0 : index
    %c0_11 = arith.constant 0 : index
    %18 = vector.load %arg6[%c0_9, %c0_10, %c0_11] : memref<2x1x96xf32, #tpu.memory_space<vmem>>, vector<1x1x96xf32>
    %19 = vector.shape_cast %18 : vector<1x1x96xf32> to vector<1x96xf32>
    %c0_12 = arith.constant 0 : index
    %c0_13 = arith.constant 0 : index
    %c0_14 = arith.constant 0 : index
    %20 = vector.load %arg8[%c0_12, %c0_13, %c0_14] : memref<2x1x2xf32, #tpu.memory_space<vmem>>, vector<1x1x2xf32>
    %21 = vector.shape_cast %20 : vector<1x1x2xf32> to vector<1x2xf32>
    %22 = math.exp %21 : vector<1x2xf32>
    %cst = arith.constant 0.000000e+00 : f32
    %23 = vector.broadcast %cst : f32 to vector<1x2xf32>
    %24 = arith.subf %23, %22 : vector<1x2xf32>
    %c0_15 = arith.constant 0 : index
    %c0_16 = arith.constant 0 : index
    %c0_17 = arith.constant 0 : index
    %25 = vector.load %arg7[%c0_15, %c0_16, %c0_17] : memref<2x1x2xf32, #tpu.memory_space<vmem>>, vector<1x1x2xf32>
    %26 = vector.shape_cast %25 : vector<1x1x2xf32> to vector<1x2xf32>
    %c0_18 = arith.constant 0 : index
    %c0_19 = arith.constant 0 : index
    %c0_20 = arith.constant 0 : index
    %27 = vector.load %arg9[%c0_18, %c0_19, %c0_20] : memref<2x1x64xf32, #tpu.memory_space<vmem>>, vector<1x1x64xf32>
    %28 = vector.shape_cast %27 : vector<1x1x64xf32> to vector<1x64xf32>
    %c0_21 = arith.constant 0 : index
    %c0_22 = arith.constant 0 : index
    %c0_23 = arith.constant 0 : index
    %29 = vector.load %arg10[%c0_21, %c0_22, %c0_23] : memref<2x1x64xf32, #tpu.memory_space<vmem>>, vector<1x1x64xf32>
    %30 = vector.shape_cast %29 : vector<1x1x64xf32> to vector<1x64xf32>
    %c0_24 = arith.constant 0 : index
    %c0_25 = arith.constant 0 : index
    %c0_26 = arith.constant 0 : index
    %31 = vector.load %arg2[%c0_24, %c0_25, %c0_26] : memref<2x16x32xf32, #tpu.memory_space<vmem>>, vector<1x16x32xf32>
    %32 = vector.shape_cast %31 : vector<1x16x32xf32> to vector<16x32xf32>
    %c1 = arith.constant 1 : index
    %c0_27 = arith.constant 0 : index
    %c0_28 = arith.constant 0 : index
    %33 = vector.load %arg2[%c1, %c0_27, %c0_28] : memref<2x16x32xf32, #tpu.memory_space<vmem>>, vector<1x16x32xf32>
    %34 = vector.shape_cast %33 : vector<1x16x32xf32> to vector<16x32xf32>
    %35 = tpu.concatenate %32, %34 in 0 : vector<16x32xf32>, vector<16x32xf32> -> vector<32x32xf32>
    %cst_29 = arith.constant dense<0.000000e+00> : vector<32x162xf32>
    %36 = tpu.matmul %35, %13, %cst_29 {dimension_numbers = #tpu.dot_dimension_numbers<[1], [0], [0], [1], [0, 0, 1, 1], [], []>} : vector<32x32xf32>, vector<32x162xf32>, vector<32x162xf32> -> vector<32x162xf32>
    %37 = vector.extract_strided_slice %36 {offsets = [0, 0], sizes = [16, 162], strides = [1, 1]} : vector<32x162xf32> to vector<16x162xf32>
    %38 = vector.extract_strided_slice %37 {offsets = [0, 0], sizes = [16, 64], strides = [1, 1]} : vector<16x162xf32> to vector<16x64xf32>
    %39 = vector.extract_strided_slice %37 {offsets = [0, 64], sizes = [16, 96], strides = [1, 1]} : vector<16x162xf32> to vector<16x96xf32>
    %40 = vector.extract_strided_slice %37 {offsets = [0, 160], sizes = [16, 2], strides = [1, 1]} : vector<16x162xf32> to vector<16x2xf32>
    %41 = vector.broadcast %26 : vector<1x2xf32> to vector<16x2xf32>
    %42 = arith.addf %40, %41 : vector<16x2xf32>
    %cst_30 = arith.constant 2.000000e+01 : f32
    %43 = vector.broadcast %cst_30 : f32 to vector<16x2xf32>
    %44 = arith.cmpf ogt, %42, %43 : vector<16x2xf32>
    %cst_31 = arith.constant 2.000000e+01 : f32
    %45 = vector.broadcast %cst_31 : f32 to vector<16x2xf32>
    %46 = arith.minimumf %42, %45 : vector<16x2xf32>
    %47 = math.exp %46 : vector<16x2xf32>
    %cst_32 = arith.constant 1.000000e+00 : f32
    %48 = vector.broadcast %cst_32 : f32 to vector<16x2xf32>
    %49 = arith.addf %48, %47 : vector<16x2xf32>
    %50 = math.log %49 : vector<16x2xf32>
    %51 = arith.select %44, %42, %50 : vector<16x2xi1>, vector<16x2xf32>
    %c0_33 = arith.constant 0 : index
    %c0_34 = arith.constant 0 : index
    %c0_35 = arith.constant 0 : index
    %52 = vector.load %arg15[%c0_33, %c0_34, %c0_35] : memref<2x3x96xf32, #tpu.memory_space<vmem>>, vector<1x3x96xf32>
    %53 = vector.shape_cast %52 : vector<1x3x96xf32> to vector<3x96xf32>
    %54 = vector.shape_cast %19 : vector<1x96xf32> to vector<1x96xf32>
    %55 = vector.broadcast %54 : vector<1x96xf32> to vector<16x96xf32>
    %56 = tpu.concatenate %53, %39 in 0 : vector<3x96xf32>, vector<16x96xf32> -> vector<19x96xf32>
    %57 = vector.extract_strided_slice %17 {offsets = [0, 0], sizes = [1, 96], strides = [1, 1]} : vector<4x96xf32> to vector<1x96xf32>
    %58 = vector.extract_strided_slice %56 {offsets = [0, 0], sizes = [16, 96], strides = [1, 1]} : vector<19x96xf32> to vector<16x96xf32>
    %59 = vector.broadcast %57 : vector<1x96xf32> to vector<16x96xf32>
    %60 = arith.mulf %59, %58 : vector<16x96xf32>
    %61 = arith.addf %55, %60 : vector<16x96xf32>
    %62 = vector.extract_strided_slice %17 {offsets = [1, 0], sizes = [1, 96], strides = [1, 1]} : vector<4x96xf32> to vector<1x96xf32>
    %63 = vector.extract_strided_slice %56 {offsets = [1, 0], sizes = [16, 96], strides = [1, 1]} : vector<19x96xf32> to vector<16x96xf32>
    %64 = vector.broadcast %62 : vector<1x96xf32> to vector<16x96xf32>
    %65 = arith.mulf %64, %63 : vector<16x96xf32>
    %66 = arith.addf %61, %65 : vector<16x96xf32>
    %67 = vector.extract_strided_slice %17 {offsets = [2, 0], sizes = [1, 96], strides = [1, 1]} : vector<4x96xf32> to vector<1x96xf32>
    %68 = vector.extract_strided_slice %56 {offsets = [2, 0], sizes = [16, 96], strides = [1, 1]} : vector<19x96xf32> to vector<16x96xf32>
    %69 = vector.broadcast %67 : vector<1x96xf32> to vector<16x96xf32>
    %70 = arith.mulf %69, %68 : vector<16x96xf32>
    %71 = arith.addf %66, %70 : vector<16x96xf32>
    %72 = vector.extract_strided_slice %17 {offsets = [3, 0], sizes = [1, 96], strides = [1, 1]} : vector<4x96xf32> to vector<1x96xf32>
    %73 = vector.extract_strided_slice %56 {offsets = [3, 0], sizes = [16, 96], strides = [1, 1]} : vector<19x96xf32> to vector<16x96xf32>
    %74 = vector.broadcast %72 : vector<1x96xf32> to vector<16x96xf32>
    %75 = arith.mulf %74, %73 : vector<16x96xf32>
    %76 = arith.addf %71, %75 : vector<16x96xf32>
    %77 = vector.extract_strided_slice %39 {offsets = [13, 0], sizes = [3, 96], strides = [1, 1]} : vector<16x96xf32> to vector<3x96xf32>
    %c0_36 = arith.constant 0 : index
    %c0_37 = arith.constant 0 : index
    %c0_38 = arith.constant 0 : index
    %78 = vector.load %arg15[%c0_36, %c0_37, %c0_38] : memref<2x3x96xf32, #tpu.memory_space<vmem>>, vector<1x3x96xf32>
    %79 = vector.shape_cast %78 : vector<1x3x96xf32> to vector<3x96xf32>
    %80 = vector.shape_cast %77 : vector<3x96xf32> to vector<1x3x96xf32>
    tpu.vector_store %arg15[%c0_36, %c0_37, %c0_38], %80 {strides = array<i32>} : memref<2x3x96xf32, #tpu.memory_space<vmem>>, vector<1x3x96xf32>,
    %cst_39 = arith.constant 0.000000e+00 : f32
    %81 = vector.broadcast %cst_39 : f32 to vector<16x96xf32>
    %82 = arith.subf %81, %76 : vector<16x96xf32>
    %83 = math.exp %82 : vector<16x96xf32>
    %cst_40 = arith.constant 1.000000e+00 : f32
    %84 = vector.broadcast %cst_40 : f32 to vector<16x96xf32>
    %85 = arith.addf %84, %83 : vector<16x96xf32>
    %cst_41 = arith.constant 1.000000e+00 : f32
    %86 = vector.broadcast %cst_41 : f32 to vector<16x96xf32>
    %87 = arith.divf %86, %85 : vector<16x96xf32>
    %88 = arith.mulf %76, %87 : vector<16x96xf32>
    %89 = vector.extract_strided_slice %88 {offsets = [0, 0], sizes = [16, 64], strides = [1, 1]} : vector<16x96xf32> to vector<16x64xf32>
    %90 = vector.extract_strided_slice %88 {offsets = [0, 64], sizes = [16, 16], strides = [1, 1]} : vector<16x96xf32> to vector<16x16xf32>
    %91 = vector.extract_strided_slice %88 {offsets = [0, 80], sizes = [16, 16], strides = [1, 1]} : vector<16x96xf32> to vector<16x16xf32>
    %92 = vector.broadcast %24 : vector<1x2xf32> to vector<16x2xf32>
    %93 = arith.mulf %51, %92 : vector<16x2xf32>
    %cst_42 = arith.constant dense<0.000000e+00> : vector<2xf32>
    %94 = vector.multi_reduction <add>, %93, %cst_42 [0] : vector<16x2xf32> to vector<2xf32>
    %95 = vector.shape_cast %94 : vector<2xf32> to vector<1x2xf32>
    %cst_43 = arith.constant dense<0.000000e+00> : vector<16x2xf32>
    %96 = tpu.matmul %7, %93, %cst_43 {dimension_numbers = #tpu.dot_dimension_numbers<[1], [0], [0], [1], [0, 0, 1, 1], [], []>} : vector<16x16xf32>, vector<16x2xf32>, vector<16x2xf32> -> vector<16x2xf32>
    %cst_44 = arith.constant dense<0.000000e+00> : vector<2x16xf32>
    %97 = tpu.matmul %93, %10, %cst_44 {dimension_numbers = #tpu.dot_dimension_numbers<[0], [0], [1], [1], [0, 1, 1, 1], [], []>} : vector<16x2xf32>, vector<16x16xf32>, vector<2x16xf32> -> vector<2x16xf32>
    %cst_45 = arith.constant dense<0.000000e+00> : vector<16x16xf32>
    %98 = tpu.matmul %91, %90, %cst_45 {dimension_numbers = #tpu.dot_dimension_numbers<[1], [1], [0], [0], [0, 0, 1, 0], [], []>} : vector<16x16xf32>, vector<16x16xf32>, vector<16x16xf32> -> vector<16x16xf32>
    %c0_46 = arith.constant 0 : index
    %c0_47 = arith.constant 0 : index
    %c0_48 = arith.constant 0 : index
    %99 = vector.load %arg14[%c0_46, %c0_47, %c0_48] : memref<2x16x64xf32, #tpu.memory_space<vmem>>, vector<1x16x64xf32>
    %100 = vector.shape_cast %99 : vector<1x16x64xf32> to vector<16x64xf32>
    %cst_49 = arith.constant dense<0.000000e+00> : vector<16x64xf32>
    %101 = tpu.matmul %91, %100, %cst_49 {dimension_numbers = #tpu.dot_dimension_numbers<[1], [0], [0], [1], [0, 0, 1, 1], [], []>} : vector<16x16xf32>, vector<16x64xf32>, vector<16x64xf32> -> vector<16x64xf32>
    %102 = vector.extract_strided_slice %51 {offsets = [0, 0], sizes = [16, 1], strides = [1, 1]} : vector<16x2xf32> to vector<16x1xf32>
    %103 = vector.shape_cast %102 : vector<16x1xf32> to vector<16x1xf32>
    %104 = vector.broadcast %103 : vector<16x1xf32> to vector<16x32xf32>
    %105 = vector.extract_strided_slice %51 {offsets = [0, 1], sizes = [16, 1], strides = [1, 1]} : vector<16x2xf32> to vector<16x1xf32>
    %106 = vector.shape_cast %105 : vector<16x1xf32> to vector<16x1xf32>
    %107 = vector.broadcast %106 : vector<16x1xf32> to vector<16x32xf32>
    %108 = tpu.concatenate %104, %107 in 1 : vector<16x32xf32>, vector<16x32xf32> -> vector<16x64xf32>
    %109 = arith.mulf %108, %89 : vector<16x64xf32>
    %110 = vector.broadcast %95 : vector<1x2xf32> to vector<16x2xf32>
    %111 = arith.subf %110, %96 : vector<16x2xf32>
    %112 = math.exp %96 : vector<16x2xf32>
    %113 = vector.extract_strided_slice %112 {offsets = [0, 0], sizes = [16, 1], strides = [1, 1]} : vector<16x2xf32> to vector<16x1xf32>
    %114 = vector.shape_cast %113 : vector<16x1xf32> to vector<16x1xf32>
    %115 = vector.broadcast %114 : vector<16x1xf32> to vector<16x32xf32>
    %116 = vector.extract_strided_slice %112 {offsets = [0, 1], sizes = [16, 1], strides = [1, 1]} : vector<16x2xf32> to vector<16x1xf32>
    %117 = vector.shape_cast %116 : vector<16x1xf32> to vector<16x1xf32>
    %118 = vector.broadcast %117 : vector<16x1xf32> to vector<16x32xf32>
    %119 = tpu.concatenate %115, %118 in 1 : vector<16x32xf32>, vector<16x32xf32> -> vector<16x64xf32>
    %120 = math.exp %111 : vector<16x2xf32>
    %121 = vector.extract_strided_slice %120 {offsets = [0, 0], sizes = [16, 1], strides = [1, 1]} : vector<16x2xf32> to vector<16x1xf32>
    %122 = vector.shape_cast %121 : vector<16x1xf32> to vector<16x1xf32>
    %123 = vector.broadcast %122 : vector<16x1xf32> to vector<16x32xf32>
    %124 = vector.extract_strided_slice %120 {offsets = [0, 1], sizes = [16, 1], strides = [1, 1]} : vector<16x2xf32> to vector<16x1xf32>
    %125 = vector.shape_cast %124 : vector<16x1xf32> to vector<16x1xf32>
    %126 = vector.broadcast %125 : vector<16x1xf32> to vector<16x32xf32>
    %127 = tpu.concatenate %123, %126 in 1 : vector<16x32xf32>, vector<16x32xf32> -> vector<16x64xf32>
    %128 = math.exp %95 : vector<1x2xf32>
    %129 = vector.extract_strided_slice %128 {offsets = [0, 0], sizes = [1, 1], strides = [1, 1]} : vector<1x2xf32> to vector<1x1xf32>
    %130 = vector.shape_cast %129 : vector<1x1xf32> to vector<1x1xf32>
    %131 = vector.broadcast %130 : vector<1x1xf32> to vector<1x32xf32>
    %132 = vector.extract_strided_slice %128 {offsets = [0, 1], sizes = [1, 1], strides = [1, 1]} : vector<1x2xf32> to vector<1x1xf32>
    %133 = vector.shape_cast %132 : vector<1x1xf32> to vector<1x1xf32>
    %134 = vector.broadcast %133 : vector<1x1xf32> to vector<1x32xf32>
    %135 = tpu.concatenate %131, %134 in 1 : vector<1x32xf32>, vector<1x32xf32> -> vector<1x64xf32>
    %136 = vector.extract_strided_slice %96 {offsets = [0, 0], sizes = [16, 1], strides = [1, 1]} : vector<16x2xf32> to vector<16x1xf32>
    %137 = vector.extract_strided_slice %97 {offsets = [0, 0], sizes = [1, 16], strides = [1, 1]} : vector<2x16xf32> to vector<1x16xf32>
    %138 = vector.broadcast %136 : vector<16x1xf32> to vector<16x16xf32>
    %139 = vector.broadcast %137 : vector<1x16xf32> to vector<16x16xf32>
    %140 = arith.subf %138, %139 : vector<16x16xf32>
    %cst_50 = arith.constant -1.000000e+30 : f32
    %141 = vector.broadcast %cst_50 : f32 to vector<16x16xf32>
    %142 = arith.select %11, %140, %141 : vector<16x16xi1>, vector<16x16xf32>
    %143 = math.exp %142 : vector<16x16xf32>
    %144 = arith.mulf %98, %143 : vector<16x16xf32>
    %145 = vector.extract_strided_slice %109 {offsets = [0, 0], sizes = [16, 32], strides = [1, 1]} : vector<16x64xf32> to vector<16x32xf32>
    %cst_51 = arith.constant dense<0.000000e+00> : vector<16x32xf32>
    %146 = tpu.matmul %144, %145, %cst_51 {dimension_numbers = #tpu.dot_dimension_numbers<[1], [0], [0], [1], [0, 0, 1, 1], [], []>} : vector<16x16xf32>, vector<16x32xf32>, vector<16x32xf32> -> vector<16x32xf32>
    %147 = vector.extract_strided_slice %96 {offsets = [0, 1], sizes = [16, 1], strides = [1, 1]} : vector<16x2xf32> to vector<16x1xf32>
    %148 = vector.extract_strided_slice %97 {offsets = [1, 0], sizes = [1, 16], strides = [1, 1]} : vector<2x16xf32> to vector<1x16xf32>
    %149 = vector.broadcast %147 : vector<16x1xf32> to vector<16x16xf32>
    %150 = vector.broadcast %148 : vector<1x16xf32> to vector<16x16xf32>
    %151 = arith.subf %149, %150 : vector<16x16xf32>
    %cst_52 = arith.constant -1.000000e+30 : f32
    %152 = vector.broadcast %cst_52 : f32 to vector<16x16xf32>
    %153 = arith.select %11, %151, %152 : vector<16x16xi1>, vector<16x16xf32>
    %154 = math.exp %153 : vector<16x16xf32>
    %155 = arith.mulf %98, %154 : vector<16x16xf32>
    %156 = vector.extract_strided_slice %109 {offsets = [0, 32], sizes = [16, 32], strides = [1, 1]} : vector<16x64xf32> to vector<16x32xf32>
    %cst_53 = arith.constant dense<0.000000e+00> : vector<16x32xf32>
    %157 = tpu.matmul %155, %156, %cst_53 {dimension_numbers = #tpu.dot_dimension_numbers<[1], [0], [0], [1], [0, 0, 1, 1], [], []>} : vector<16x16xf32>, vector<16x32xf32>, vector<16x32xf32> -> vector<16x32xf32>
    %158 = tpu.concatenate %146, %157 in 1 : vector<16x32xf32>, vector<16x32xf32> -> vector<16x64xf32>
    %159 = arith.mulf %119, %101 : vector<16x64xf32>
    %160 = arith.addf %158, %159 : vector<16x64xf32>
    %161 = vector.broadcast %135 : vector<1x64xf32> to vector<16x64xf32>
    %162 = arith.mulf %161, %100 : vector<16x64xf32>
    %163 = arith.mulf %127, %109 : vector<16x64xf32>
    %cst_54 = arith.constant dense<0.000000e+00> : vector<16x64xf32>
    %164 = tpu.matmul %90, %163, %cst_54 {dimension_numbers = #tpu.dot_dimension_numbers<[0], [0], [1], [1], [0, 1, 1, 1], [], []>} : vector<16x16xf32>, vector<16x64xf32>, vector<16x64xf32> -> vector<16x64xf32>
    %165 = arith.addf %162, %164 : vector<16x64xf32>
    %c0_55 = arith.constant 0 : index
    %c0_56 = arith.constant 0 : index
    %c0_57 = arith.constant 0 : index
    %166 = vector.load %arg14[%c0_55, %c0_56, %c0_57] : memref<2x16x64xf32, #tpu.memory_space<vmem>>, vector<1x16x64xf32>
    %167 = vector.shape_cast %166 : vector<1x16x64xf32> to vector<16x64xf32>
    %168 = vector.shape_cast %165 : vector<16x64xf32> to vector<1x16x64xf32>
    tpu.vector_store %arg14[%c0_55, %c0_56, %c0_57], %168 {strides = array<i32>} : memref<2x16x64xf32, #tpu.memory_space<vmem>>, vector<1x16x64xf32>,
    %169 = vector.broadcast %28 : vector<1x64xf32> to vector<16x64xf32>
    %170 = arith.mulf %169, %89 : vector<16x64xf32>
    %171 = arith.addf %160, %170 : vector<16x64xf32>
    %cst_58 = arith.constant 0.000000e+00 : f32
    %172 = vector.broadcast %cst_58 : f32 to vector<16x64xf32>
    %173 = arith.subf %172, %38 : vector<16x64xf32>
    %174 = math.exp %173 : vector<16x64xf32>
    %cst_59 = arith.constant 1.000000e+00 : f32
    %175 = vector.broadcast %cst_59 : f32 to vector<16x64xf32>
    %176 = arith.addf %175, %174 : vector<16x64xf32>
    %cst_60 = arith.constant 1.000000e+00 : f32
    %177 = vector.broadcast %cst_60 : f32 to vector<16x64xf32>
    %178 = arith.divf %177, %176 : vector<16x64xf32>
    %179 = arith.mulf %38, %178 : vector<16x64xf32>
    %180 = arith.mulf %171, %179 : vector<16x64xf32>
    %181 = arith.mulf %180, %180 : vector<16x64xf32>
    %cst_61 = arith.constant dense<0.000000e+00> : vector<16xf32>
    %182 = vector.multi_reduction <add>, %181, %cst_61 [1] : vector<16x64xf32> to vector<16xf32>
    %183 = vector.shape_cast %182 : vector<16xf32> to vector<16x1xf32>
    %cst_62 = arith.constant 6.400000e+01 : f32
    %184 = vector.broadcast %cst_62 : f32 to vector<16x1xf32>
    %185 = arith.divf %183, %184 : vector<16x1xf32>
    %cst_63 = arith.constant 9.99999974E-6 : f32
    %186 = vector.broadcast %cst_63 : f32 to vector<16x1xf32>
    %187 = arith.addf %185, %186 : vector<16x1xf32>
    %188 = math.rsqrt %187 : vector<16x1xf32>
    %189 = vector.broadcast %188 : vector<16x1xf32> to vector<16x64xf32>
    %190 = arith.mulf %180, %189 : vector<16x64xf32>
    %191 = vector.broadcast %30 : vector<1x64xf32> to vector<16x64xf32>
    %192 = arith.mulf %190, %191 : vector<16x64xf32>
    %193 = vector.extract_strided_slice %36 {offsets = [16, 0], sizes = [16, 162], strides = [1, 1]} : vector<32x162xf32> to vector<16x162xf32>
    %194 = vector.extract_strided_slice %193 {offsets = [0, 0], sizes = [16, 64], strides = [1, 1]} : vector<16x162xf32> to vector<16x64xf32>
    %195 = vector.extract_strided_slice %193 {offsets = [0, 64], sizes = [16, 96], strides = [1, 1]} : vector<16x162xf32> to vector<16x96xf32>
    %196 = vector.extract_strided_slice %193 {offsets = [0, 160], sizes = [16, 2], strides = [1, 1]} : vector<16x162xf32> to vector<16x2xf32>
    %197 = vector.broadcast %26 : vector<1x2xf32> to vector<16x2xf32>
    %198 = arith.addf %196, %197 : vector<16x2xf32>
    %cst_64 = arith.constant 2.000000e+01 : f32
    %199 = vector.broadcast %cst_64 : f32 to vector<16x2xf32>
    %200 = arith.cmpf ogt, %198, %199 : vector<16x2xf32>
    %cst_65 = arith.constant 2.000000e+01 : f32
    %201 = vector.broadcast %cst_65 : f32 to vector<16x2xf32>
    %202 = arith.minimumf %198, %201 : vector<16x2xf32>
    %203 = math.exp %202 : vector<16x2xf32>
    %cst_66 = arith.constant 1.000000e+00 : f32
    %204 = vector.broadcast %cst_66 : f32 to vector<16x2xf32>
    %205 = arith.addf %204, %203 : vector<16x2xf32>
    %206 = math.log %205 : vector<16x2xf32>
    %207 = arith.select %200, %198, %206 : vector<16x2xi1>, vector<16x2xf32>
    %c1_67 = arith.constant 1 : index
    %c0_68 = arith.constant 0 : index
    %c0_69 = arith.constant 0 : index
    %208 = vector.load %arg15[%c1_67, %c0_68, %c0_69] : memref<2x3x96xf32, #tpu.memory_space<vmem>>, vector<1x3x96xf32>
    %209 = vector.shape_cast %208 : vector<1x3x96xf32> to vector<3x96xf32>
    %210 = vector.shape_cast %19 : vector<1x96xf32> to vector<1x96xf32>
    %211 = vector.broadcast %210 : vector<1x96xf32> to vector<16x96xf32>
    %212 = tpu.concatenate %209, %195 in 0 : vector<3x96xf32>, vector<16x96xf32> -> vector<19x96xf32>
    %213 = vector.extract_strided_slice %17 {offsets = [0, 0], sizes = [1, 96], strides = [1, 1]} : vector<4x96xf32> to vector<1x96xf32>
    %214 = vector.extract_strided_slice %212 {offsets = [0, 0], sizes = [16, 96], strides = [1, 1]} : vector<19x96xf32> to vector<16x96xf32>
    %215 = vector.broadcast %213 : vector<1x96xf32> to vector<16x96xf32>
    %216 = arith.mulf %215, %214 : vector<16x96xf32>
    %217 = arith.addf %211, %216 : vector<16x96xf32>
    %218 = vector.extract_strided_slice %17 {offsets = [1, 0], sizes = [1, 96], strides = [1, 1]} : vector<4x96xf32> to vector<1x96xf32>
    %219 = vector.extract_strided_slice %212 {offsets = [1, 0], sizes = [16, 96], strides = [1, 1]} : vector<19x96xf32> to vector<16x96xf32>
    %220 = vector.broadcast %218 : vector<1x96xf32> to vector<16x96xf32>
    %221 = arith.mulf %220, %219 : vector<16x96xf32>
    %222 = arith.addf %217, %221 : vector<16x96xf32>
    %223 = vector.extract_strided_slice %17 {offsets = [2, 0], sizes = [1, 96], strides = [1, 1]} : vector<4x96xf32> to vector<1x96xf32>
    %224 = vector.extract_strided_slice %212 {offsets = [2, 0], sizes = [16, 96], strides = [1, 1]} : vector<19x96xf32> to vector<16x96xf32>
    %225 = vector.broadcast %223 : vector<1x96xf32> to vector<16x96xf32>
    %226 = arith.mulf %225, %224 : vector<16x96xf32>
    %227 = arith.addf %222, %226 : vector<16x96xf32>
    %228 = vector.extract_strided_slice %17 {offsets = [3, 0], sizes = [1, 96], strides = [1, 1]} : vector<4x96xf32> to vector<1x96xf32>
    %229 = vector.extract_strided_slice %212 {offsets = [3, 0], sizes = [16, 96], strides = [1, 1]} : vector<19x96xf32> to vector<16x96xf32>
    %230 = vector.broadcast %228 : vector<1x96xf32> to vector<16x96xf32>
    %231 = arith.mulf %230, %229 : vector<16x96xf32>
    %232 = arith.addf %227, %231 : vector<16x96xf32>
    %233 = vector.extract_strided_slice %195 {offsets = [13, 0], sizes = [3, 96], strides = [1, 1]} : vector<16x96xf32> to vector<3x96xf32>
    %c1_70 = arith.constant 1 : index
    %c0_71 = arith.constant 0 : index
    %c0_72 = arith.constant 0 : index
    %234 = vector.load %arg15[%c1_70, %c0_71, %c0_72] : memref<2x3x96xf32, #tpu.memory_space<vmem>>, vector<1x3x96xf32>
    %235 = vector.shape_cast %234 : vector<1x3x96xf32> to vector<3x96xf32>
    %236 = vector.shape_cast %233 : vector<3x96xf32> to vector<1x3x96xf32>
    tpu.vector_store %arg15[%c1_70, %c0_71, %c0_72], %236 {strides = array<i32>} : memref<2x3x96xf32, #tpu.memory_space<vmem>>, vector<1x3x96xf32>,
    %cst_73 = arith.constant 0.000000e+00 : f32
    %237 = vector.broadcast %cst_73 : f32 to vector<16x96xf32>
    %238 = arith.subf %237, %232 : vector<16x96xf32>
    %239 = math.exp %238 : vector<16x96xf32>
    %cst_74 = arith.constant 1.000000e+00 : f32
    %240 = vector.broadcast %cst_74 : f32 to vector<16x96xf32>
    %241 = arith.addf %240, %239 : vector<16x96xf32>
    %cst_75 = arith.constant 1.000000e+00 : f32
    %242 = vector.broadcast %cst_75 : f32 to vector<16x96xf32>
    %243 = arith.divf %242, %241 : vector<16x96xf32>
    %244 = arith.mulf %232, %243 : vector<16x96xf32>
    %245 = vector.extract_strided_slice %244 {offsets = [0, 0], sizes = [16, 64], strides = [1, 1]} : vector<16x96xf32> to vector<16x64xf32>
    %246 = vector.extract_strided_slice %244 {offsets = [0, 64], sizes = [16, 16], strides = [1, 1]} : vector<16x96xf32> to vector<16x16xf32>
    %247 = vector.extract_strided_slice %244 {offsets = [0, 80], sizes = [16, 16], strides = [1, 1]} : vector<16x96xf32> to vector<16x16xf32>
    %248 = vector.broadcast %24 : vector<1x2xf32> to vector<16x2xf32>
    %249 = arith.mulf %207, %248 : vector<16x2xf32>
    %cst_76 = arith.constant dense<0.000000e+00> : vector<2xf32>
    %250 = vector.multi_reduction <add>, %249, %cst_76 [0] : vector<16x2xf32> to vector<2xf32>
    %251 = vector.shape_cast %250 : vector<2xf32> to vector<1x2xf32>
    %cst_77 = arith.constant dense<0.000000e+00> : vector<16x2xf32>
    %252 = tpu.matmul %7, %249, %cst_77 {dimension_numbers = #tpu.dot_dimension_numbers<[1], [0], [0], [1], [0, 0, 1, 1], [], []>} : vector<16x16xf32>, vector<16x2xf32>, vector<16x2xf32> -> vector<16x2xf32>
    %cst_78 = arith.constant dense<0.000000e+00> : vector<2x16xf32>
    %253 = tpu.matmul %249, %10, %cst_78 {dimension_numbers = #tpu.dot_dimension_numbers<[0], [0], [1], [1], [0, 1, 1, 1], [], []>} : vector<16x2xf32>, vector<16x16xf32>, vector<2x16xf32> -> vector<2x16xf32>
    %cst_79 = arith.constant dense<0.000000e+00> : vector<16x16xf32>
    %254 = tpu.matmul %247, %246, %cst_79 {dimension_numbers = #tpu.dot_dimension_numbers<[1], [1], [0], [0], [0, 0, 1, 0], [], []>} : vector<16x16xf32>, vector<16x16xf32>, vector<16x16xf32> -> vector<16x16xf32>
    %c1_80 = arith.constant 1 : index
    %c0_81 = arith.constant 0 : index
    %c0_82 = arith.constant 0 : index
    %255 = vector.load %arg14[%c1_80, %c0_81, %c0_82] : memref<2x16x64xf32, #tpu.memory_space<vmem>>, vector<1x16x64xf32>
    %256 = vector.shape_cast %255 : vector<1x16x64xf32> to vector<16x64xf32>
    %cst_83 = arith.constant dense<0.000000e+00> : vector<16x64xf32>
    %257 = tpu.matmul %247, %256, %cst_83 {dimension_numbers = #tpu.dot_dimension_numbers<[1], [0], [0], [1], [0, 0, 1, 1], [], []>} : vector<16x16xf32>, vector<16x64xf32>, vector<16x64xf32> -> vector<16x64xf32>
    %258 = vector.extract_strided_slice %207 {offsets = [0, 0], sizes = [16, 1], strides = [1, 1]} : vector<16x2xf32> to vector<16x1xf32>
    %259 = vector.shape_cast %258 : vector<16x1xf32> to vector<16x1xf32>
    %260 = vector.broadcast %259 : vector<16x1xf32> to vector<16x32xf32>
    %261 = vector.extract_strided_slice %207 {offsets = [0, 1], sizes = [16, 1], strides = [1, 1]} : vector<16x2xf32> to vector<16x1xf32>
    %262 = vector.shape_cast %261 : vector<16x1xf32> to vector<16x1xf32>
    %263 = vector.broadcast %262 : vector<16x1xf32> to vector<16x32xf32>
    %264 = tpu.concatenate %260, %263 in 1 : vector<16x32xf32>, vector<16x32xf32> -> vector<16x64xf32>
    %265 = arith.mulf %264, %245 : vector<16x64xf32>
    %266 = vector.broadcast %251 : vector<1x2xf32> to vector<16x2xf32>
    %267 = arith.subf %266, %252 : vector<16x2xf32>
    %268 = math.exp %252 : vector<16x2xf32>
    %269 = vector.extract_strided_slice %268 {offsets = [0, 0], sizes = [16, 1], strides = [1, 1]} : vector<16x2xf32> to vector<16x1xf32>
    %270 = vector.shape_cast %269 : vector<16x1xf32> to vector<16x1xf32>
    %271 = vector.broadcast %270 : vector<16x1xf32> to vector<16x32xf32>
    %272 = vector.extract_strided_slice %268 {offsets = [0, 1], sizes = [16, 1], strides = [1, 1]} : vector<16x2xf32> to vector<16x1xf32>
    %273 = vector.shape_cast %272 : vector<16x1xf32> to vector<16x1xf32>
    %274 = vector.broadcast %273 : vector<16x1xf32> to vector<16x32xf32>
    %275 = tpu.concatenate %271, %274 in 1 : vector<16x32xf32>, vector<16x32xf32> -> vector<16x64xf32>
    %276 = math.exp %267 : vector<16x2xf32>
    %277 = vector.extract_strided_slice %276 {offsets = [0, 0], sizes = [16, 1], strides = [1, 1]} : vector<16x2xf32> to vector<16x1xf32>
    %278 = vector.shape_cast %277 : vector<16x1xf32> to vector<16x1xf32>
    %279 = vector.broadcast %278 : vector<16x1xf32> to vector<16x32xf32>
    %280 = vector.extract_strided_slice %276 {offsets = [0, 1], sizes = [16, 1], strides = [1, 1]} : vector<16x2xf32> to vector<16x1xf32>
    %281 = vector.shape_cast %280 : vector<16x1xf32> to vector<16x1xf32>
    %282 = vector.broadcast %281 : vector<16x1xf32> to vector<16x32xf32>
    %283 = tpu.concatenate %279, %282 in 1 : vector<16x32xf32>, vector<16x32xf32> -> vector<16x64xf32>
    %284 = math.exp %251 : vector<1x2xf32>
    %285 = vector.extract_strided_slice %284 {offsets = [0, 0], sizes = [1, 1], strides = [1, 1]} : vector<1x2xf32> to vector<1x1xf32>
    %286 = vector.shape_cast %285 : vector<1x1xf32> to vector<1x1xf32>
    %287 = vector.broadcast %286 : vector<1x1xf32> to vector<1x32xf32>
    %288 = vector.extract_strided_slice %284 {offsets = [0, 1], sizes = [1, 1], strides = [1, 1]} : vector<1x2xf32> to vector<1x1xf32>
    %289 = vector.shape_cast %288 : vector<1x1xf32> to vector<1x1xf32>
    %290 = vector.broadcast %289 : vector<1x1xf32> to vector<1x32xf32>
    %291 = tpu.concatenate %287, %290 in 1 : vector<1x32xf32>, vector<1x32xf32> -> vector<1x64xf32>
    %292 = vector.extract_strided_slice %252 {offsets = [0, 0], sizes = [16, 1], strides = [1, 1]} : vector<16x2xf32> to vector<16x1xf32>
    %293 = vector.extract_strided_slice %253 {offsets = [0, 0], sizes = [1, 16], strides = [1, 1]} : vector<2x16xf32> to vector<1x16xf32>
    %294 = vector.broadcast %292 : vector<16x1xf32> to vector<16x16xf32>
    %295 = vector.broadcast %293 : vector<1x16xf32> to vector<16x16xf32>
    %296 = arith.subf %294, %295 : vector<16x16xf32>
    %cst_84 = arith.constant -1.000000e+30 : f32
    %297 = vector.broadcast %cst_84 : f32 to vector<16x16xf32>
    %298 = arith.select %11, %296, %297 : vector<16x16xi1>, vector<16x16xf32>
    %299 = math.exp %298 : vector<16x16xf32>
    %300 = arith.mulf %254, %299 : vector<16x16xf32>
    %301 = vector.extract_strided_slice %265 {offsets = [0, 0], sizes = [16, 32], strides = [1, 1]} : vector<16x64xf32> to vector<16x32xf32>
    %cst_85 = arith.constant dense<0.000000e+00> : vector<16x32xf32>
    %302 = tpu.matmul %300, %301, %cst_85 {dimension_numbers = #tpu.dot_dimension_numbers<[1], [0], [0], [1], [0, 0, 1, 1], [], []>} : vector<16x16xf32>, vector<16x32xf32>, vector<16x32xf32> -> vector<16x32xf32>
    %303 = vector.extract_strided_slice %252 {offsets = [0, 1], sizes = [16, 1], strides = [1, 1]} : vector<16x2xf32> to vector<16x1xf32>
    %304 = vector.extract_strided_slice %253 {offsets = [1, 0], sizes = [1, 16], strides = [1, 1]} : vector<2x16xf32> to vector<1x16xf32>
    %305 = vector.broadcast %303 : vector<16x1xf32> to vector<16x16xf32>
    %306 = vector.broadcast %304 : vector<1x16xf32> to vector<16x16xf32>
    %307 = arith.subf %305, %306 : vector<16x16xf32>
    %cst_86 = arith.constant -1.000000e+30 : f32
    %308 = vector.broadcast %cst_86 : f32 to vector<16x16xf32>
    %309 = arith.select %11, %307, %308 : vector<16x16xi1>, vector<16x16xf32>
    %310 = math.exp %309 : vector<16x16xf32>
    %311 = arith.mulf %254, %310 : vector<16x16xf32>
    %312 = vector.extract_strided_slice %265 {offsets = [0, 32], sizes = [16, 32], strides = [1, 1]} : vector<16x64xf32> to vector<16x32xf32>
    %cst_87 = arith.constant dense<0.000000e+00> : vector<16x32xf32>
    %313 = tpu.matmul %311, %312, %cst_87 {dimension_numbers = #tpu.dot_dimension_numbers<[1], [0], [0], [1], [0, 0, 1, 1], [], []>} : vector<16x16xf32>, vector<16x32xf32>, vector<16x32xf32> -> vector<16x32xf32>
    %314 = tpu.concatenate %302, %313 in 1 : vector<16x32xf32>, vector<16x32xf32> -> vector<16x64xf32>
    %315 = arith.mulf %275, %257 : vector<16x64xf32>
    %316 = arith.addf %314, %315 : vector<16x64xf32>
    %317 = vector.broadcast %291 : vector<1x64xf32> to vector<16x64xf32>
    %318 = arith.mulf %317, %256 : vector<16x64xf32>
    %319 = arith.mulf %283, %265 : vector<16x64xf32>
    %cst_88 = arith.constant dense<0.000000e+00> : vector<16x64xf32>
    %320 = tpu.matmul %246, %319, %cst_88 {dimension_numbers = #tpu.dot_dimension_numbers<[0], [0], [1], [1], [0, 1, 1, 1], [], []>} : vector<16x16xf32>, vector<16x64xf32>, vector<16x64xf32> -> vector<16x64xf32>
    %321 = arith.addf %318, %320 : vector<16x64xf32>
    %c1_89 = arith.constant 1 : index
    %c0_90 = arith.constant 0 : index
    %c0_91 = arith.constant 0 : index
    %322 = vector.load %arg14[%c1_89, %c0_90, %c0_91] : memref<2x16x64xf32, #tpu.memory_space<vmem>>, vector<1x16x64xf32>
    %323 = vector.shape_cast %322 : vector<1x16x64xf32> to vector<16x64xf32>
    %324 = vector.shape_cast %321 : vector<16x64xf32> to vector<1x16x64xf32>
    tpu.vector_store %arg14[%c1_89, %c0_90, %c0_91], %324 {strides = array<i32>} : memref<2x16x64xf32, #tpu.memory_space<vmem>>, vector<1x16x64xf32>,
    %325 = vector.broadcast %28 : vector<1x64xf32> to vector<16x64xf32>
    %326 = arith.mulf %325, %245 : vector<16x64xf32>
    %327 = arith.addf %316, %326 : vector<16x64xf32>
    %cst_92 = arith.constant 0.000000e+00 : f32
    %328 = vector.broadcast %cst_92 : f32 to vector<16x64xf32>
    %329 = arith.subf %328, %194 : vector<16x64xf32>
    %330 = math.exp %329 : vector<16x64xf32>
    %cst_93 = arith.constant 1.000000e+00 : f32
    %331 = vector.broadcast %cst_93 : f32 to vector<16x64xf32>
    %332 = arith.addf %331, %330 : vector<16x64xf32>
    %cst_94 = arith.constant 1.000000e+00 : f32
    %333 = vector.broadcast %cst_94 : f32 to vector<16x64xf32>
    %334 = arith.divf %333, %332 : vector<16x64xf32>
    %335 = arith.mulf %194, %334 : vector<16x64xf32>
    %336 = arith.mulf %327, %335 : vector<16x64xf32>
    %337 = arith.mulf %336, %336 : vector<16x64xf32>
    %cst_95 = arith.constant dense<0.000000e+00> : vector<16xf32>
    %338 = vector.multi_reduction <add>, %337, %cst_95 [1] : vector<16x64xf32> to vector<16xf32>
    %339 = vector.shape_cast %338 : vector<16xf32> to vector<16x1xf32>
    %cst_96 = arith.constant 6.400000e+01 : f32
    %340 = vector.broadcast %cst_96 : f32 to vector<16x1xf32>
    %341 = arith.divf %339, %340 : vector<16x1xf32>
    %cst_97 = arith.constant 9.99999974E-6 : f32
    %342 = vector.broadcast %cst_97 : f32 to vector<16x1xf32>
    %343 = arith.addf %341, %342 : vector<16x1xf32>
    %344 = math.rsqrt %343 : vector<16x1xf32>
    %345 = vector.broadcast %344 : vector<16x1xf32> to vector<16x64xf32>
    %346 = arith.mulf %336, %345 : vector<16x64xf32>
    %347 = vector.broadcast %30 : vector<1x64xf32> to vector<16x64xf32>
    %348 = arith.mulf %346, %347 : vector<16x64xf32>
    %349 = tpu.concatenate %192, %348 in 0 : vector<16x64xf32>, vector<16x64xf32> -> vector<32x64xf32>
    %cst_98 = arith.constant dense<0.000000e+00> : vector<32x32xf32>
    %350 = tpu.matmul %349, %15, %cst_98 {dimension_numbers = #tpu.dot_dimension_numbers<[1], [0], [0], [1], [0, 0, 1, 1], [], []>} : vector<32x64xf32>, vector<64x32xf32>, vector<32x32xf32> -> vector<32x32xf32>
    %351 = vector.extract_strided_slice %350 {offsets = [0, 0], sizes = [16, 32], strides = [1, 1]} : vector<32x32xf32> to vector<16x32xf32>
    %c0_99 = arith.constant 0 : index
    %c0_100 = arith.constant 0 : index
    %c0_101 = arith.constant 0 : index
    %352 = vector.load %arg12[%c0_99, %c0_100, %c0_101] : memref<2x16x32xf32, #tpu.memory_space<vmem>>, vector<1x16x32xf32>
    %353 = vector.shape_cast %352 : vector<1x16x32xf32> to vector<16x32xf32>
    %354 = vector.shape_cast %351 : vector<16x32xf32> to vector<1x16x32xf32>
    tpu.vector_store %arg12[%c0_99, %c0_100, %c0_101], %354 {strides = array<i32>} : memref<2x16x32xf32, #tpu.memory_space<vmem>>, vector<1x16x32xf32>,
    %355 = vector.extract_strided_slice %350 {offsets = [16, 0], sizes = [16, 32], strides = [1, 1]} : vector<32x32xf32> to vector<16x32xf32>
    %c1_102 = arith.constant 1 : index
    %c0_103 = arith.constant 0 : index
    %c0_104 = arith.constant 0 : index
    %356 = vector.load %arg12[%c1_102, %c0_103, %c0_104] : memref<2x16x32xf32, #tpu.memory_space<vmem>>, vector<1x16x32xf32>
    %357 = vector.shape_cast %356 : vector<1x16x32xf32> to vector<16x32xf32>
    %358 = vector.shape_cast %355 : vector<16x32xf32> to vector<1x16x32xf32>
    tpu.vector_store %arg12[%c1_102, %c0_103, %c0_104], %358 {strides = array<i32>} : memref<2x16x32xf32, #tpu.memory_space<vmem>>, vector<1x16x32xf32>,
    %359 = arith.cmpi sgt, %3, %4 : vector<16x16xi32>
    %360 = arith.extui %359 : vector<16x16xi1> to vector<16x16xi32>
    %361 = arith.sitofp %360 : vector<16x16xi32> to vector<16x16xf32>
    %362 = arith.cmpi sgt, %4, %3 : vector<16x16xi32>
    %363 = arith.extui %362 : vector<16x16xi1> to vector<16x16xi32>
    %364 = arith.sitofp %363 : vector<16x16xi32> to vector<16x16xf32>
    %365 = arith.cmpi sge, %4, %3 : vector<16x16xi32>
    %c1_105 = arith.constant 1 : index
    %c0_106 = arith.constant 0 : index
    %c0_107 = arith.constant 0 : index
    %366 = vector.load %arg4[%c1_105, %c0_106, %c0_107] : memref<2x32x162xf32, #tpu.memory_space<vmem>>, vector<1x32x162xf32>
    %367 = vector.shape_cast %366 : vector<1x32x162xf32> to vector<32x162xf32>
    %c1_108 = arith.constant 1 : index
    %c0_109 = arith.constant 0 : index
    %c0_110 = arith.constant 0 : index
    %368 = vector.load %arg11[%c1_108, %c0_109, %c0_110] : memref<2x64x32xf32, #tpu.memory_space<vmem>>, vector<1x64x32xf32>
    %369 = vector.shape_cast %368 : vector<1x64x32xf32> to vector<64x32xf32>
    %c1_111 = arith.constant 1 : index
    %c0_112 = arith.constant 0 : index
    %c0_113 = arith.constant 0 : index
    %370 = vector.load %arg5[%c1_111, %c0_112, %c0_113] : memref<2x4x96xf32, #tpu.memory_space<vmem>>, vector<1x4x96xf32>
    %371 = vector.shape_cast %370 : vector<1x4x96xf32> to vector<4x96xf32>
    %c1_114 = arith.constant 1 : index
    %c0_115 = arith.constant 0 : index
    %c0_116 = arith.constant 0 : index
    %372 = vector.load %arg6[%c1_114, %c0_115, %c0_116] : memref<2x1x96xf32, #tpu.memory_space<vmem>>, vector<1x1x96xf32>
    %373 = vector.shape_cast %372 : vector<1x1x96xf32> to vector<1x96xf32>
    %c1_117 = arith.constant 1 : index
    %c0_118 = arith.constant 0 : index
    %c0_119 = arith.constant 0 : index
    %374 = vector.load %arg8[%c1_117, %c0_118, %c0_119] : memref<2x1x2xf32, #tpu.memory_space<vmem>>, vector<1x1x2xf32>
    %375 = vector.shape_cast %374 : vector<1x1x2xf32> to vector<1x2xf32>
    %376 = math.exp %375 : vector<1x2xf32>
    %cst_120 = arith.constant 0.000000e+00 : f32
    %377 = vector.broadcast %cst_120 : f32 to vector<1x2xf32>
    %378 = arith.subf %377, %376 : vector<1x2xf32>
    %c1_121 = arith.constant 1 : index
    %c0_122 = arith.constant 0 : index
    %c0_123 = arith.constant 0 : index
    %379 = vector.load %arg7[%c1_121, %c0_122, %c0_123] : memref<2x1x2xf32, #tpu.memory_space<vmem>>, vector<1x1x2xf32>
    %380 = vector.shape_cast %379 : vector<1x1x2xf32> to vector<1x2xf32>
    %c1_124 = arith.constant 1 : index
    %c0_125 = arith.constant 0 : index
    %c0_126 = arith.constant 0 : index
    %381 = vector.load %arg9[%c1_124, %c0_125, %c0_126] : memref<2x1x64xf32, #tpu.memory_space<vmem>>, vector<1x1x64xf32>
    %382 = vector.shape_cast %381 : vector<1x1x64xf32> to vector<1x64xf32>
    %c1_127 = arith.constant 1 : index
    %c0_128 = arith.constant 0 : index
    %c0_129 = arith.constant 0 : index
    %383 = vector.load %arg10[%c1_127, %c0_128, %c0_129] : memref<2x1x64xf32, #tpu.memory_space<vmem>>, vector<1x1x64xf32>
    %384 = vector.shape_cast %383 : vector<1x1x64xf32> to vector<1x64xf32>
    %c0_130 = arith.constant 0 : index
    %c0_131 = arith.constant 0 : index
    %c0_132 = arith.constant 0 : index
    %385 = vector.load %arg3[%c0_130, %c0_131, %c0_132] : memref<2x16x32xf32, #tpu.memory_space<vmem>>, vector<1x16x32xf32>
    %386 = vector.shape_cast %385 : vector<1x16x32xf32> to vector<16x32xf32>
    %c1_133 = arith.constant 1 : index
    %c0_134 = arith.constant 0 : index
    %c0_135 = arith.constant 0 : index
    %387 = vector.load %arg3[%c1_133, %c0_134, %c0_135] : memref<2x16x32xf32, #tpu.memory_space<vmem>>, vector<1x16x32xf32>
    %388 = vector.shape_cast %387 : vector<1x16x32xf32> to vector<16x32xf32>
    %389 = tpu.concatenate %386, %388 in 0 : vector<16x32xf32>, vector<16x32xf32> -> vector<32x32xf32>
    %cst_136 = arith.constant dense<0.000000e+00> : vector<32x162xf32>
    %390 = tpu.matmul %389, %367, %cst_136 {dimension_numbers = #tpu.dot_dimension_numbers<[1], [0], [0], [1], [0, 0, 1, 1], [], []>} : vector<32x32xf32>, vector<32x162xf32>, vector<32x162xf32> -> vector<32x162xf32>
    %391 = vector.extract_strided_slice %390 {offsets = [0, 0], sizes = [16, 162], strides = [1, 1]} : vector<32x162xf32> to vector<16x162xf32>
    %392 = vector.extract_strided_slice %391 {offsets = [0, 0], sizes = [16, 64], strides = [1, 1]} : vector<16x162xf32> to vector<16x64xf32>
    %393 = vector.extract_strided_slice %391 {offsets = [0, 64], sizes = [16, 96], strides = [1, 1]} : vector<16x162xf32> to vector<16x96xf32>
    %394 = vector.extract_strided_slice %391 {offsets = [0, 160], sizes = [16, 2], strides = [1, 1]} : vector<16x162xf32> to vector<16x2xf32>
    %395 = vector.broadcast %380 : vector<1x2xf32> to vector<16x2xf32>
    %396 = arith.addf %394, %395 : vector<16x2xf32>
    %cst_137 = arith.constant 2.000000e+01 : f32
    %397 = vector.broadcast %cst_137 : f32 to vector<16x2xf32>
    %398 = arith.cmpf ogt, %396, %397 : vector<16x2xf32>
    %cst_138 = arith.constant 2.000000e+01 : f32
    %399 = vector.broadcast %cst_138 : f32 to vector<16x2xf32>
    %400 = arith.minimumf %396, %399 : vector<16x2xf32>
    %401 = math.exp %400 : vector<16x2xf32>
    %cst_139 = arith.constant 1.000000e+00 : f32
    %402 = vector.broadcast %cst_139 : f32 to vector<16x2xf32>
    %403 = arith.addf %402, %401 : vector<16x2xf32>
    %404 = math.log %403 : vector<16x2xf32>
    %405 = arith.select %398, %396, %404 : vector<16x2xi1>, vector<16x2xf32>
    %c0_140 = arith.constant 0 : index
    %c0_141 = arith.constant 0 : index
    %c0_142 = arith.constant 0 : index
    %406 = vector.load %arg17[%c0_140, %c0_141, %c0_142] : memref<2x3x96xf32, #tpu.memory_space<vmem>>, vector<1x3x96xf32>
    %407 = vector.shape_cast %406 : vector<1x3x96xf32> to vector<3x96xf32>
    %408 = vector.shape_cast %373 : vector<1x96xf32> to vector<1x96xf32>
    %409 = vector.broadcast %408 : vector<1x96xf32> to vector<16x96xf32>
    %410 = tpu.concatenate %393, %407 in 0 : vector<16x96xf32>, vector<3x96xf32> -> vector<19x96xf32>
    %411 = vector.extract_strided_slice %371 {offsets = [3, 0], sizes = [1, 96], strides = [1, 1]} : vector<4x96xf32> to vector<1x96xf32>
    %412 = vector.extract_strided_slice %410 {offsets = [0, 0], sizes = [16, 96], strides = [1, 1]} : vector<19x96xf32> to vector<16x96xf32>
    %413 = vector.broadcast %411 : vector<1x96xf32> to vector<16x96xf32>
    %414 = arith.mulf %413, %412 : vector<16x96xf32>
    %415 = arith.addf %409, %414 : vector<16x96xf32>
    %416 = vector.extract_strided_slice %371 {offsets = [2, 0], sizes = [1, 96], strides = [1, 1]} : vector<4x96xf32> to vector<1x96xf32>
    %417 = vector.extract_strided_slice %410 {offsets = [1, 0], sizes = [16, 96], strides = [1, 1]} : vector<19x96xf32> to vector<16x96xf32>
    %418 = vector.broadcast %416 : vector<1x96xf32> to vector<16x96xf32>
    %419 = arith.mulf %418, %417 : vector<16x96xf32>
    %420 = arith.addf %415, %419 : vector<16x96xf32>
    %421 = vector.extract_strided_slice %371 {offsets = [1, 0], sizes = [1, 96], strides = [1, 1]} : vector<4x96xf32> to vector<1x96xf32>
    %422 = vector.extract_strided_slice %410 {offsets = [2, 0], sizes = [16, 96], strides = [1, 1]} : vector<19x96xf32> to vector<16x96xf32>
    %423 = vector.broadcast %421 : vector<1x96xf32> to vector<16x96xf32>
    %424 = arith.mulf %423, %422 : vector<16x96xf32>
    %425 = arith.addf %420, %424 : vector<16x96xf32>
    %426 = vector.extract_strided_slice %371 {offsets = [0, 0], sizes = [1, 96], strides = [1, 1]} : vector<4x96xf32> to vector<1x96xf32>
    %427 = vector.extract_strided_slice %410 {offsets = [3, 0], sizes = [16, 96], strides = [1, 1]} : vector<19x96xf32> to vector<16x96xf32>
    %428 = vector.broadcast %426 : vector<1x96xf32> to vector<16x96xf32>
    %429 = arith.mulf %428, %427 : vector<16x96xf32>
    %430 = arith.addf %425, %429 : vector<16x96xf32>
    %431 = vector.extract_strided_slice %393 {offsets = [0, 0], sizes = [3, 96], strides = [1, 1]} : vector<16x96xf32> to vector<3x96xf32>
    %c0_143 = arith.constant 0 : index
    %c0_144 = arith.constant 0 : index
    %c0_145 = arith.constant 0 : index
    %432 = vector.load %arg17[%c0_143, %c0_144, %c0_145] : memref<2x3x96xf32, #tpu.memory_space<vmem>>, vector<1x3x96xf32>
    %433 = vector.shape_cast %432 : vector<1x3x96xf32> to vector<3x96xf32>
    %434 = vector.shape_cast %431 : vector<3x96xf32> to vector<1x3x96xf32>
    tpu.vector_store %arg17[%c0_143, %c0_144, %c0_145], %434 {strides = array<i32>} : memref<2x3x96xf32, #tpu.memory_space<vmem>>, vector<1x3x96xf32>,
    %cst_146 = arith.constant 0.000000e+00 : f32
    %435 = vector.broadcast %cst_146 : f32 to vector<16x96xf32>
    %436 = arith.subf %435, %430 : vector<16x96xf32>
    %437 = math.exp %436 : vector<16x96xf32>
    %cst_147 = arith.constant 1.000000e+00 : f32
    %438 = vector.broadcast %cst_147 : f32 to vector<16x96xf32>
    %439 = arith.addf %438, %437 : vector<16x96xf32>
    %cst_148 = arith.constant 1.000000e+00 : f32
    %440 = vector.broadcast %cst_148 : f32 to vector<16x96xf32>
    %441 = arith.divf %440, %439 : vector<16x96xf32>
    %442 = arith.mulf %430, %441 : vector<16x96xf32>
    %443 = vector.extract_strided_slice %442 {offsets = [0, 0], sizes = [16, 64], strides = [1, 1]} : vector<16x96xf32> to vector<16x64xf32>
    %444 = vector.extract_strided_slice %442 {offsets = [0, 64], sizes = [16, 16], strides = [1, 1]} : vector<16x96xf32> to vector<16x16xf32>
    %445 = vector.extract_strided_slice %442 {offsets = [0, 80], sizes = [16, 16], strides = [1, 1]} : vector<16x96xf32> to vector<16x16xf32>
    %446 = vector.broadcast %378 : vector<1x2xf32> to vector<16x2xf32>
    %447 = arith.mulf %405, %446 : vector<16x2xf32>
    %cst_149 = arith.constant dense<0.000000e+00> : vector<2xf32>
    %448 = vector.multi_reduction <add>, %447, %cst_149 [0] : vector<16x2xf32> to vector<2xf32>
    %449 = vector.shape_cast %448 : vector<2xf32> to vector<1x2xf32>
    %cst_150 = arith.constant dense<0.000000e+00> : vector<16x2xf32>
    %450 = tpu.matmul %361, %447, %cst_150 {dimension_numbers = #tpu.dot_dimension_numbers<[1], [0], [0], [1], [0, 0, 1, 1], [], []>} : vector<16x16xf32>, vector<16x2xf32>, vector<16x2xf32> -> vector<16x2xf32>
    %cst_151 = arith.constant dense<0.000000e+00> : vector<2x16xf32>
    %451 = tpu.matmul %447, %364, %cst_151 {dimension_numbers = #tpu.dot_dimension_numbers<[0], [0], [1], [1], [0, 1, 1, 1], [], []>} : vector<16x2xf32>, vector<16x16xf32>, vector<2x16xf32> -> vector<2x16xf32>
    %cst_152 = arith.constant dense<0.000000e+00> : vector<16x16xf32>
    %452 = tpu.matmul %445, %444, %cst_152 {dimension_numbers = #tpu.dot_dimension_numbers<[1], [1], [0], [0], [0, 0, 1, 0], [], []>} : vector<16x16xf32>, vector<16x16xf32>, vector<16x16xf32> -> vector<16x16xf32>
    %c0_153 = arith.constant 0 : index
    %c0_154 = arith.constant 0 : index
    %c0_155 = arith.constant 0 : index
    %453 = vector.load %arg16[%c0_153, %c0_154, %c0_155] : memref<2x16x64xf32, #tpu.memory_space<vmem>>, vector<1x16x64xf32>
    %454 = vector.shape_cast %453 : vector<1x16x64xf32> to vector<16x64xf32>
    %cst_156 = arith.constant dense<0.000000e+00> : vector<16x64xf32>
    %455 = tpu.matmul %445, %454, %cst_156 {dimension_numbers = #tpu.dot_dimension_numbers<[1], [0], [0], [1], [0, 0, 1, 1], [], []>} : vector<16x16xf32>, vector<16x64xf32>, vector<16x64xf32> -> vector<16x64xf32>
    %456 = vector.extract_strided_slice %405 {offsets = [0, 0], sizes = [16, 1], strides = [1, 1]} : vector<16x2xf32> to vector<16x1xf32>
    %457 = vector.shape_cast %456 : vector<16x1xf32> to vector<16x1xf32>
    %458 = vector.broadcast %457 : vector<16x1xf32> to vector<16x32xf32>
    %459 = vector.extract_strided_slice %405 {offsets = [0, 1], sizes = [16, 1], strides = [1, 1]} : vector<16x2xf32> to vector<16x1xf32>
    %460 = vector.shape_cast %459 : vector<16x1xf32> to vector<16x1xf32>
    %461 = vector.broadcast %460 : vector<16x1xf32> to vector<16x32xf32>
    %462 = tpu.concatenate %458, %461 in 1 : vector<16x32xf32>, vector<16x32xf32> -> vector<16x64xf32>
    %463 = arith.mulf %462, %443 : vector<16x64xf32>
    %464 = vector.broadcast %449 : vector<1x2xf32> to vector<16x2xf32>
    %465 = arith.subf %464, %450 : vector<16x2xf32>
    %466 = math.exp %465 : vector<16x2xf32>
    %467 = vector.extract_strided_slice %466 {offsets = [0, 0], sizes = [16, 1], strides = [1, 1]} : vector<16x2xf32> to vector<16x1xf32>
    %468 = vector.shape_cast %467 : vector<16x1xf32> to vector<16x1xf32>
    %469 = vector.broadcast %468 : vector<16x1xf32> to vector<16x32xf32>
    %470 = vector.extract_strided_slice %466 {offsets = [0, 1], sizes = [16, 1], strides = [1, 1]} : vector<16x2xf32> to vector<16x1xf32>
    %471 = vector.shape_cast %470 : vector<16x1xf32> to vector<16x1xf32>
    %472 = vector.broadcast %471 : vector<16x1xf32> to vector<16x32xf32>
    %473 = tpu.concatenate %469, %472 in 1 : vector<16x32xf32>, vector<16x32xf32> -> vector<16x64xf32>
    %474 = math.exp %450 : vector<16x2xf32>
    %475 = vector.extract_strided_slice %474 {offsets = [0, 0], sizes = [16, 1], strides = [1, 1]} : vector<16x2xf32> to vector<16x1xf32>
    %476 = vector.shape_cast %475 : vector<16x1xf32> to vector<16x1xf32>
    %477 = vector.broadcast %476 : vector<16x1xf32> to vector<16x32xf32>
    %478 = vector.extract_strided_slice %474 {offsets = [0, 1], sizes = [16, 1], strides = [1, 1]} : vector<16x2xf32> to vector<16x1xf32>
    %479 = vector.shape_cast %478 : vector<16x1xf32> to vector<16x1xf32>
    %480 = vector.broadcast %479 : vector<16x1xf32> to vector<16x32xf32>
    %481 = tpu.concatenate %477, %480 in 1 : vector<16x32xf32>, vector<16x32xf32> -> vector<16x64xf32>
    %482 = math.exp %449 : vector<1x2xf32>
    %483 = vector.extract_strided_slice %482 {offsets = [0, 0], sizes = [1, 1], strides = [1, 1]} : vector<1x2xf32> to vector<1x1xf32>
    %484 = vector.shape_cast %483 : vector<1x1xf32> to vector<1x1xf32>
    %485 = vector.broadcast %484 : vector<1x1xf32> to vector<1x32xf32>
    %486 = vector.extract_strided_slice %482 {offsets = [0, 1], sizes = [1, 1], strides = [1, 1]} : vector<1x2xf32> to vector<1x1xf32>
    %487 = vector.shape_cast %486 : vector<1x1xf32> to vector<1x1xf32>
    %488 = vector.broadcast %487 : vector<1x1xf32> to vector<1x32xf32>
    %489 = tpu.concatenate %485, %488 in 1 : vector<1x32xf32>, vector<1x32xf32> -> vector<1x64xf32>
    %490 = vector.extract_strided_slice %450 {offsets = [0, 0], sizes = [16, 1], strides = [1, 1]} : vector<16x2xf32> to vector<16x1xf32>
    %491 = vector.extract_strided_slice %451 {offsets = [0, 0], sizes = [1, 16], strides = [1, 1]} : vector<2x16xf32> to vector<1x16xf32>
    %492 = vector.broadcast %490 : vector<16x1xf32> to vector<16x16xf32>
    %493 = vector.broadcast %491 : vector<1x16xf32> to vector<16x16xf32>
    %494 = arith.subf %492, %493 : vector<16x16xf32>
    %cst_157 = arith.constant 0.000000e+00 : f32
    %495 = vector.broadcast %cst_157 : f32 to vector<16x16xf32>
    %496 = arith.subf %495, %494 : vector<16x16xf32>
    %cst_158 = arith.constant -1.000000e+30 : f32
    %497 = vector.broadcast %cst_158 : f32 to vector<16x16xf32>
    %498 = arith.select %365, %496, %497 : vector<16x16xi1>, vector<16x16xf32>
    %499 = math.exp %498 : vector<16x16xf32>
    %500 = arith.mulf %452, %499 : vector<16x16xf32>
    %501 = vector.extract_strided_slice %463 {offsets = [0, 0], sizes = [16, 32], strides = [1, 1]} : vector<16x64xf32> to vector<16x32xf32>
    %cst_159 = arith.constant dense<0.000000e+00> : vector<16x32xf32>
    %502 = tpu.matmul %500, %501, %cst_159 {dimension_numbers = #tpu.dot_dimension_numbers<[1], [0], [0], [1], [0, 0, 1, 1], [], []>} : vector<16x16xf32>, vector<16x32xf32>, vector<16x32xf32> -> vector<16x32xf32>
    %503 = vector.extract_strided_slice %450 {offsets = [0, 1], sizes = [16, 1], strides = [1, 1]} : vector<16x2xf32> to vector<16x1xf32>
    %504 = vector.extract_strided_slice %451 {offsets = [1, 0], sizes = [1, 16], strides = [1, 1]} : vector<2x16xf32> to vector<1x16xf32>
    %505 = vector.broadcast %503 : vector<16x1xf32> to vector<16x16xf32>
    %506 = vector.broadcast %504 : vector<1x16xf32> to vector<16x16xf32>
    %507 = arith.subf %505, %506 : vector<16x16xf32>
    %cst_160 = arith.constant 0.000000e+00 : f32
    %508 = vector.broadcast %cst_160 : f32 to vector<16x16xf32>
    %509 = arith.subf %508, %507 : vector<16x16xf32>
    %cst_161 = arith.constant -1.000000e+30 : f32
    %510 = vector.broadcast %cst_161 : f32 to vector<16x16xf32>
    %511 = arith.select %365, %509, %510 : vector<16x16xi1>, vector<16x16xf32>
    %512 = math.exp %511 : vector<16x16xf32>
    %513 = arith.mulf %452, %512 : vector<16x16xf32>
    %514 = vector.extract_strided_slice %463 {offsets = [0, 32], sizes = [16, 32], strides = [1, 1]} : vector<16x64xf32> to vector<16x32xf32>
    %cst_162 = arith.constant dense<0.000000e+00> : vector<16x32xf32>
    %515 = tpu.matmul %513, %514, %cst_162 {dimension_numbers = #tpu.dot_dimension_numbers<[1], [0], [0], [1], [0, 0, 1, 1], [], []>} : vector<16x16xf32>, vector<16x32xf32>, vector<16x32xf32> -> vector<16x32xf32>
    %516 = tpu.concatenate %502, %515 in 1 : vector<16x32xf32>, vector<16x32xf32> -> vector<16x64xf32>
    %517 = arith.mulf %473, %455 : vector<16x64xf32>
    %518 = arith.addf %516, %517 : vector<16x64xf32>
    %519 = vector.broadcast %489 : vector<1x64xf32> to vector<16x64xf32>
    %520 = arith.mulf %519, %454 : vector<16x64xf32>
    %521 = arith.mulf %481, %463 : vector<16x64xf32>
    %cst_163 = arith.constant dense<0.000000e+00> : vector<16x64xf32>
    %522 = tpu.matmul %444, %521, %cst_163 {dimension_numbers = #tpu.dot_dimension_numbers<[0], [0], [1], [1], [0, 1, 1, 1], [], []>} : vector<16x16xf32>, vector<16x64xf32>, vector<16x64xf32> -> vector<16x64xf32>
    %523 = arith.addf %520, %522 : vector<16x64xf32>
    %c0_164 = arith.constant 0 : index
    %c0_165 = arith.constant 0 : index
    %c0_166 = arith.constant 0 : index
    %524 = vector.load %arg16[%c0_164, %c0_165, %c0_166] : memref<2x16x64xf32, #tpu.memory_space<vmem>>, vector<1x16x64xf32>
    %525 = vector.shape_cast %524 : vector<1x16x64xf32> to vector<16x64xf32>
    %526 = vector.shape_cast %523 : vector<16x64xf32> to vector<1x16x64xf32>
    tpu.vector_store %arg16[%c0_164, %c0_165, %c0_166], %526 {strides = array<i32>} : memref<2x16x64xf32, #tpu.memory_space<vmem>>, vector<1x16x64xf32>,
    %527 = vector.broadcast %382 : vector<1x64xf32> to vector<16x64xf32>
    %528 = arith.mulf %527, %443 : vector<16x64xf32>
    %529 = arith.addf %518, %528 : vector<16x64xf32>
    %cst_167 = arith.constant 0.000000e+00 : f32
    %530 = vector.broadcast %cst_167 : f32 to vector<16x64xf32>
    %531 = arith.subf %530, %392 : vector<16x64xf32>
    %532 = math.exp %531 : vector<16x64xf32>
    %cst_168 = arith.constant 1.000000e+00 : f32
    %533 = vector.broadcast %cst_168 : f32 to vector<16x64xf32>
    %534 = arith.addf %533, %532 : vector<16x64xf32>
    %cst_169 = arith.constant 1.000000e+00 : f32
    %535 = vector.broadcast %cst_169 : f32 to vector<16x64xf32>
    %536 = arith.divf %535, %534 : vector<16x64xf32>
    %537 = arith.mulf %392, %536 : vector<16x64xf32>
    %538 = arith.mulf %529, %537 : vector<16x64xf32>
    %539 = arith.mulf %538, %538 : vector<16x64xf32>
    %cst_170 = arith.constant dense<0.000000e+00> : vector<16xf32>
    %540 = vector.multi_reduction <add>, %539, %cst_170 [1] : vector<16x64xf32> to vector<16xf32>
    %541 = vector.shape_cast %540 : vector<16xf32> to vector<16x1xf32>
    %cst_171 = arith.constant 6.400000e+01 : f32
    %542 = vector.broadcast %cst_171 : f32 to vector<16x1xf32>
    %543 = arith.divf %541, %542 : vector<16x1xf32>
    %cst_172 = arith.constant 9.99999974E-6 : f32
    %544 = vector.broadcast %cst_172 : f32 to vector<16x1xf32>
    %545 = arith.addf %543, %544 : vector<16x1xf32>
    %546 = math.rsqrt %545 : vector<16x1xf32>
    %547 = vector.broadcast %546 : vector<16x1xf32> to vector<16x64xf32>
    %548 = arith.mulf %538, %547 : vector<16x64xf32>
    %549 = vector.broadcast %384 : vector<1x64xf32> to vector<16x64xf32>
    %550 = arith.mulf %548, %549 : vector<16x64xf32>
    %551 = vector.extract_strided_slice %390 {offsets = [16, 0], sizes = [16, 162], strides = [1, 1]} : vector<32x162xf32> to vector<16x162xf32>
    %552 = vector.extract_strided_slice %551 {offsets = [0, 0], sizes = [16, 64], strides = [1, 1]} : vector<16x162xf32> to vector<16x64xf32>
    %553 = vector.extract_strided_slice %551 {offsets = [0, 64], sizes = [16, 96], strides = [1, 1]} : vector<16x162xf32> to vector<16x96xf32>
    %554 = vector.extract_strided_slice %551 {offsets = [0, 160], sizes = [16, 2], strides = [1, 1]} : vector<16x162xf32> to vector<16x2xf32>
    %555 = vector.broadcast %380 : vector<1x2xf32> to vector<16x2xf32>
    %556 = arith.addf %554, %555 : vector<16x2xf32>
    %cst_173 = arith.constant 2.000000e+01 : f32
    %557 = vector.broadcast %cst_173 : f32 to vector<16x2xf32>
    %558 = arith.cmpf ogt, %556, %557 : vector<16x2xf32>
    %cst_174 = arith.constant 2.000000e+01 : f32
    %559 = vector.broadcast %cst_174 : f32 to vector<16x2xf32>
    %560 = arith.minimumf %556, %559 : vector<16x2xf32>
    %561 = math.exp %560 : vector<16x2xf32>
    %cst_175 = arith.constant 1.000000e+00 : f32
    %562 = vector.broadcast %cst_175 : f32 to vector<16x2xf32>
    %563 = arith.addf %562, %561 : vector<16x2xf32>
    %564 = math.log %563 : vector<16x2xf32>
    %565 = arith.select %558, %556, %564 : vector<16x2xi1>, vector<16x2xf32>
    %c1_176 = arith.constant 1 : index
    %c0_177 = arith.constant 0 : index
    %c0_178 = arith.constant 0 : index
    %566 = vector.load %arg17[%c1_176, %c0_177, %c0_178] : memref<2x3x96xf32, #tpu.memory_space<vmem>>, vector<1x3x96xf32>
    %567 = vector.shape_cast %566 : vector<1x3x96xf32> to vector<3x96xf32>
    %568 = vector.shape_cast %373 : vector<1x96xf32> to vector<1x96xf32>
    %569 = vector.broadcast %568 : vector<1x96xf32> to vector<16x96xf32>
    %570 = tpu.concatenate %553, %567 in 0 : vector<16x96xf32>, vector<3x96xf32> -> vector<19x96xf32>
    %571 = vector.extract_strided_slice %371 {offsets = [3, 0], sizes = [1, 96], strides = [1, 1]} : vector<4x96xf32> to vector<1x96xf32>
    %572 = vector.extract_strided_slice %570 {offsets = [0, 0], sizes = [16, 96], strides = [1, 1]} : vector<19x96xf32> to vector<16x96xf32>
    %573 = vector.broadcast %571 : vector<1x96xf32> to vector<16x96xf32>
    %574 = arith.mulf %573, %572 : vector<16x96xf32>
    %575 = arith.addf %569, %574 : vector<16x96xf32>
    %576 = vector.extract_strided_slice %371 {offsets = [2, 0], sizes = [1, 96], strides = [1, 1]} : vector<4x96xf32> to vector<1x96xf32>
    %577 = vector.extract_strided_slice %570 {offsets = [1, 0], sizes = [16, 96], strides = [1, 1]} : vector<19x96xf32> to vector<16x96xf32>
    %578 = vector.broadcast %576 : vector<1x96xf32> to vector<16x96xf32>
    %579 = arith.mulf %578, %577 : vector<16x96xf32>
    %580 = arith.addf %575, %579 : vector<16x96xf32>
    %581 = vector.extract_strided_slice %371 {offsets = [1, 0], sizes = [1, 96], strides = [1, 1]} : vector<4x96xf32> to vector<1x96xf32>
    %582 = vector.extract_strided_slice %570 {offsets = [2, 0], sizes = [16, 96], strides = [1, 1]} : vector<19x96xf32> to vector<16x96xf32>
    %583 = vector.broadcast %581 : vector<1x96xf32> to vector<16x96xf32>
    %584 = arith.mulf %583, %582 : vector<16x96xf32>
    %585 = arith.addf %580, %584 : vector<16x96xf32>
    %586 = vector.extract_strided_slice %371 {offsets = [0, 0], sizes = [1, 96], strides = [1, 1]} : vector<4x96xf32> to vector<1x96xf32>
    %587 = vector.extract_strided_slice %570 {offsets = [3, 0], sizes = [16, 96], strides = [1, 1]} : vector<19x96xf32> to vector<16x96xf32>
    %588 = vector.broadcast %586 : vector<1x96xf32> to vector<16x96xf32>
    %589 = arith.mulf %588, %587 : vector<16x96xf32>
    %590 = arith.addf %585, %589 : vector<16x96xf32>
    %591 = vector.extract_strided_slice %553 {offsets = [0, 0], sizes = [3, 96], strides = [1, 1]} : vector<16x96xf32> to vector<3x96xf32>
    %c1_179 = arith.constant 1 : index
    %c0_180 = arith.constant 0 : index
    %c0_181 = arith.constant 0 : index
    %592 = vector.load %arg17[%c1_179, %c0_180, %c0_181] : memref<2x3x96xf32, #tpu.memory_space<vmem>>, vector<1x3x96xf32>
    %593 = vector.shape_cast %592 : vector<1x3x96xf32> to vector<3x96xf32>
    %594 = vector.shape_cast %591 : vector<3x96xf32> to vector<1x3x96xf32>
    tpu.vector_store %arg17[%c1_179, %c0_180, %c0_181], %594 {strides = array<i32>} : memref<2x3x96xf32, #tpu.memory_space<vmem>>, vector<1x3x96xf32>,
    %cst_182 = arith.constant 0.000000e+00 : f32
    %595 = vector.broadcast %cst_182 : f32 to vector<16x96xf32>
    %596 = arith.subf %595, %590 : vector<16x96xf32>
    %597 = math.exp %596 : vector<16x96xf32>
    %cst_183 = arith.constant 1.000000e+00 : f32
    %598 = vector.broadcast %cst_183 : f32 to vector<16x96xf32>
    %599 = arith.addf %598, %597 : vector<16x96xf32>
    %cst_184 = arith.constant 1.000000e+00 : f32
    %600 = vector.broadcast %cst_184 : f32 to vector<16x96xf32>
    %601 = arith.divf %600, %599 : vector<16x96xf32>
    %602 = arith.mulf %590, %601 : vector<16x96xf32>
    %603 = vector.extract_strided_slice %602 {offsets = [0, 0], sizes = [16, 64], strides = [1, 1]} : vector<16x96xf32> to vector<16x64xf32>
    %604 = vector.extract_strided_slice %602 {offsets = [0, 64], sizes = [16, 16], strides = [1, 1]} : vector<16x96xf32> to vector<16x16xf32>
    %605 = vector.extract_strided_slice %602 {offsets = [0, 80], sizes = [16, 16], strides = [1, 1]} : vector<16x96xf32> to vector<16x16xf32>
    %606 = vector.broadcast %378 : vector<1x2xf32> to vector<16x2xf32>
    %607 = arith.mulf %565, %606 : vector<16x2xf32>
    %cst_185 = arith.constant dense<0.000000e+00> : vector<2xf32>
    %608 = vector.multi_reduction <add>, %607, %cst_185 [0] : vector<16x2xf32> to vector<2xf32>
    %609 = vector.shape_cast %608 : vector<2xf32> to vector<1x2xf32>
    %cst_186 = arith.constant dense<0.000000e+00> : vector<16x2xf32>
    %610 = tpu.matmul %361, %607, %cst_186 {dimension_numbers = #tpu.dot_dimension_numbers<[1], [0], [0], [1], [0, 0, 1, 1], [], []>} : vector<16x16xf32>, vector<16x2xf32>, vector<16x2xf32> -> vector<16x2xf32>
    %cst_187 = arith.constant dense<0.000000e+00> : vector<2x16xf32>
    %611 = tpu.matmul %607, %364, %cst_187 {dimension_numbers = #tpu.dot_dimension_numbers<[0], [0], [1], [1], [0, 1, 1, 1], [], []>} : vector<16x2xf32>, vector<16x16xf32>, vector<2x16xf32> -> vector<2x16xf32>
    %cst_188 = arith.constant dense<0.000000e+00> : vector<16x16xf32>
    %612 = tpu.matmul %605, %604, %cst_188 {dimension_numbers = #tpu.dot_dimension_numbers<[1], [1], [0], [0], [0, 0, 1, 0], [], []>} : vector<16x16xf32>, vector<16x16xf32>, vector<16x16xf32> -> vector<16x16xf32>
    %c1_189 = arith.constant 1 : index
    %c0_190 = arith.constant 0 : index
    %c0_191 = arith.constant 0 : index
    %613 = vector.load %arg16[%c1_189, %c0_190, %c0_191] : memref<2x16x64xf32, #tpu.memory_space<vmem>>, vector<1x16x64xf32>
    %614 = vector.shape_cast %613 : vector<1x16x64xf32> to vector<16x64xf32>
    %cst_192 = arith.constant dense<0.000000e+00> : vector<16x64xf32>
    %615 = tpu.matmul %605, %614, %cst_192 {dimension_numbers = #tpu.dot_dimension_numbers<[1], [0], [0], [1], [0, 0, 1, 1], [], []>} : vector<16x16xf32>, vector<16x64xf32>, vector<16x64xf32> -> vector<16x64xf32>
    %616 = vector.extract_strided_slice %565 {offsets = [0, 0], sizes = [16, 1], strides = [1, 1]} : vector<16x2xf32> to vector<16x1xf32>
    %617 = vector.shape_cast %616 : vector<16x1xf32> to vector<16x1xf32>
    %618 = vector.broadcast %617 : vector<16x1xf32> to vector<16x32xf32>
    %619 = vector.extract_strided_slice %565 {offsets = [0, 1], sizes = [16, 1], strides = [1, 1]} : vector<16x2xf32> to vector<16x1xf32>
    %620 = vector.shape_cast %619 : vector<16x1xf32> to vector<16x1xf32>
    %621 = vector.broadcast %620 : vector<16x1xf32> to vector<16x32xf32>
    %622 = tpu.concatenate %618, %621 in 1 : vector<16x32xf32>, vector<16x32xf32> -> vector<16x64xf32>
    %623 = arith.mulf %622, %603 : vector<16x64xf32>
    %624 = vector.broadcast %609 : vector<1x2xf32> to vector<16x2xf32>
    %625 = arith.subf %624, %610 : vector<16x2xf32>
    %626 = math.exp %625 : vector<16x2xf32>
    %627 = vector.extract_strided_slice %626 {offsets = [0, 0], sizes = [16, 1], strides = [1, 1]} : vector<16x2xf32> to vector<16x1xf32>
    %628 = vector.shape_cast %627 : vector<16x1xf32> to vector<16x1xf32>
    %629 = vector.broadcast %628 : vector<16x1xf32> to vector<16x32xf32>
    %630 = vector.extract_strided_slice %626 {offsets = [0, 1], sizes = [16, 1], strides = [1, 1]} : vector<16x2xf32> to vector<16x1xf32>
    %631 = vector.shape_cast %630 : vector<16x1xf32> to vector<16x1xf32>
    %632 = vector.broadcast %631 : vector<16x1xf32> to vector<16x32xf32>
    %633 = tpu.concatenate %629, %632 in 1 : vector<16x32xf32>, vector<16x32xf32> -> vector<16x64xf32>
    %634 = math.exp %610 : vector<16x2xf32>
    %635 = vector.extract_strided_slice %634 {offsets = [0, 0], sizes = [16, 1], strides = [1, 1]} : vector<16x2xf32> to vector<16x1xf32>
    %636 = vector.shape_cast %635 : vector<16x1xf32> to vector<16x1xf32>
    %637 = vector.broadcast %636 : vector<16x1xf32> to vector<16x32xf32>
    %638 = vector.extract_strided_slice %634 {offsets = [0, 1], sizes = [16, 1], strides = [1, 1]} : vector<16x2xf32> to vector<16x1xf32>
    %639 = vector.shape_cast %638 : vector<16x1xf32> to vector<16x1xf32>
    %640 = vector.broadcast %639 : vector<16x1xf32> to vector<16x32xf32>
    %641 = tpu.concatenate %637, %640 in 1 : vector<16x32xf32>, vector<16x32xf32> -> vector<16x64xf32>
    %642 = math.exp %609 : vector<1x2xf32>
    %643 = vector.extract_strided_slice %642 {offsets = [0, 0], sizes = [1, 1], strides = [1, 1]} : vector<1x2xf32> to vector<1x1xf32>
    %644 = vector.shape_cast %643 : vector<1x1xf32> to vector<1x1xf32>
    %645 = vector.broadcast %644 : vector<1x1xf32> to vector<1x32xf32>
    %646 = vector.extract_strided_slice %642 {offsets = [0, 1], sizes = [1, 1], strides = [1, 1]} : vector<1x2xf32> to vector<1x1xf32>
    %647 = vector.shape_cast %646 : vector<1x1xf32> to vector<1x1xf32>
    %648 = vector.broadcast %647 : vector<1x1xf32> to vector<1x32xf32>
    %649 = tpu.concatenate %645, %648 in 1 : vector<1x32xf32>, vector<1x32xf32> -> vector<1x64xf32>
    %650 = vector.extract_strided_slice %610 {offsets = [0, 0], sizes = [16, 1], strides = [1, 1]} : vector<16x2xf32> to vector<16x1xf32>
    %651 = vector.extract_strided_slice %611 {offsets = [0, 0], sizes = [1, 16], strides = [1, 1]} : vector<2x16xf32> to vector<1x16xf32>
    %652 = vector.broadcast %650 : vector<16x1xf32> to vector<16x16xf32>
    %653 = vector.broadcast %651 : vector<1x16xf32> to vector<16x16xf32>
    %654 = arith.subf %652, %653 : vector<16x16xf32>
    %cst_193 = arith.constant 0.000000e+00 : f32
    %655 = vector.broadcast %cst_193 : f32 to vector<16x16xf32>
    %656 = arith.subf %655, %654 : vector<16x16xf32>
    %cst_194 = arith.constant -1.000000e+30 : f32
    %657 = vector.broadcast %cst_194 : f32 to vector<16x16xf32>
    %658 = arith.select %365, %656, %657 : vector<16x16xi1>, vector<16x16xf32>
    %659 = math.exp %658 : vector<16x16xf32>
    %660 = arith.mulf %612, %659 : vector<16x16xf32>
    %661 = vector.extract_strided_slice %623 {offsets = [0, 0], sizes = [16, 32], strides = [1, 1]} : vector<16x64xf32> to vector<16x32xf32>
    %cst_195 = arith.constant dense<0.000000e+00> : vector<16x32xf32>
    %662 = tpu.matmul %660, %661, %cst_195 {dimension_numbers = #tpu.dot_dimension_numbers<[1], [0], [0], [1], [0, 0, 1, 1], [], []>} : vector<16x16xf32>, vector<16x32xf32>, vector<16x32xf32> -> vector<16x32xf32>
    %663 = vector.extract_strided_slice %610 {offsets = [0, 1], sizes = [16, 1], strides = [1, 1]} : vector<16x2xf32> to vector<16x1xf32>
    %664 = vector.extract_strided_slice %611 {offsets = [1, 0], sizes = [1, 16], strides = [1, 1]} : vector<2x16xf32> to vector<1x16xf32>
    %665 = vector.broadcast %663 : vector<16x1xf32> to vector<16x16xf32>
    %666 = vector.broadcast %664 : vector<1x16xf32> to vector<16x16xf32>
    %667 = arith.subf %665, %666 : vector<16x16xf32>
    %cst_196 = arith.constant 0.000000e+00 : f32
    %668 = vector.broadcast %cst_196 : f32 to vector<16x16xf32>
    %669 = arith.subf %668, %667 : vector<16x16xf32>
    %cst_197 = arith.constant -1.000000e+30 : f32
    %670 = vector.broadcast %cst_197 : f32 to vector<16x16xf32>
    %671 = arith.select %365, %669, %670 : vector<16x16xi1>, vector<16x16xf32>
    %672 = math.exp %671 : vector<16x16xf32>
    %673 = arith.mulf %612, %672 : vector<16x16xf32>
    %674 = vector.extract_strided_slice %623 {offsets = [0, 32], sizes = [16, 32], strides = [1, 1]} : vector<16x64xf32> to vector<16x32xf32>
    %cst_198 = arith.constant dense<0.000000e+00> : vector<16x32xf32>
    %675 = tpu.matmul %673, %674, %cst_198 {dimension_numbers = #tpu.dot_dimension_numbers<[1], [0], [0], [1], [0, 0, 1, 1], [], []>} : vector<16x16xf32>, vector<16x32xf32>, vector<16x32xf32> -> vector<16x32xf32>
    %676 = tpu.concatenate %662, %675 in 1 : vector<16x32xf32>, vector<16x32xf32> -> vector<16x64xf32>
    %677 = arith.mulf %633, %615 : vector<16x64xf32>
    %678 = arith.addf %676, %677 : vector<16x64xf32>
    %679 = vector.broadcast %649 : vector<1x64xf32> to vector<16x64xf32>
    %680 = arith.mulf %679, %614 : vector<16x64xf32>
    %681 = arith.mulf %641, %623 : vector<16x64xf32>
    %cst_199 = arith.constant dense<0.000000e+00> : vector<16x64xf32>
    %682 = tpu.matmul %604, %681, %cst_199 {dimension_numbers = #tpu.dot_dimension_numbers<[0], [0], [1], [1], [0, 1, 1, 1], [], []>} : vector<16x16xf32>, vector<16x64xf32>, vector<16x64xf32> -> vector<16x64xf32>
    %683 = arith.addf %680, %682 : vector<16x64xf32>
    %c1_200 = arith.constant 1 : index
    %c0_201 = arith.constant 0 : index
    %c0_202 = arith.constant 0 : index
    %684 = vector.load %arg16[%c1_200, %c0_201, %c0_202] : memref<2x16x64xf32, #tpu.memory_space<vmem>>, vector<1x16x64xf32>
    %685 = vector.shape_cast %684 : vector<1x16x64xf32> to vector<16x64xf32>
    %686 = vector.shape_cast %683 : vector<16x64xf32> to vector<1x16x64xf32>
    tpu.vector_store %arg16[%c1_200, %c0_201, %c0_202], %686 {strides = array<i32>} : memref<2x16x64xf32, #tpu.memory_space<vmem>>, vector<1x16x64xf32>,
    %687 = vector.broadcast %382 : vector<1x64xf32> to vector<16x64xf32>
    %688 = arith.mulf %687, %603 : vector<16x64xf32>
    %689 = arith.addf %678, %688 : vector<16x64xf32>
    %cst_203 = arith.constant 0.000000e+00 : f32
    %690 = vector.broadcast %cst_203 : f32 to vector<16x64xf32>
    %691 = arith.subf %690, %552 : vector<16x64xf32>
    %692 = math.exp %691 : vector<16x64xf32>
    %cst_204 = arith.constant 1.000000e+00 : f32
    %693 = vector.broadcast %cst_204 : f32 to vector<16x64xf32>
    %694 = arith.addf %693, %692 : vector<16x64xf32>
    %cst_205 = arith.constant 1.000000e+00 : f32
    %695 = vector.broadcast %cst_205 : f32 to vector<16x64xf32>
    %696 = arith.divf %695, %694 : vector<16x64xf32>
    %697 = arith.mulf %552, %696 : vector<16x64xf32>
    %698 = arith.mulf %689, %697 : vector<16x64xf32>
    %699 = arith.mulf %698, %698 : vector<16x64xf32>
    %cst_206 = arith.constant dense<0.000000e+00> : vector<16xf32>
    %700 = vector.multi_reduction <add>, %699, %cst_206 [1] : vector<16x64xf32> to vector<16xf32>
    %701 = vector.shape_cast %700 : vector<16xf32> to vector<16x1xf32>
    %cst_207 = arith.constant 6.400000e+01 : f32
    %702 = vector.broadcast %cst_207 : f32 to vector<16x1xf32>
    %703 = arith.divf %701, %702 : vector<16x1xf32>
    %cst_208 = arith.constant 9.99999974E-6 : f32
    %704 = vector.broadcast %cst_208 : f32 to vector<16x1xf32>
    %705 = arith.addf %703, %704 : vector<16x1xf32>
    %706 = math.rsqrt %705 : vector<16x1xf32>
    %707 = vector.broadcast %706 : vector<16x1xf32> to vector<16x64xf32>
    %708 = arith.mulf %698, %707 : vector<16x64xf32>
    %709 = vector.broadcast %384 : vector<1x64xf32> to vector<16x64xf32>
    %710 = arith.mulf %708, %709 : vector<16x64xf32>
    %711 = tpu.concatenate %550, %710 in 0 : vector<16x64xf32>, vector<16x64xf32> -> vector<32x64xf32>
    %cst_209 = arith.constant dense<0.000000e+00> : vector<32x32xf32>
    %712 = tpu.matmul %711, %369, %cst_209 {dimension_numbers = #tpu.dot_dimension_numbers<[1], [0], [0], [1], [0, 0, 1, 1], [], []>} : vector<32x64xf32>, vector<64x32xf32>, vector<32x32xf32> -> vector<32x32xf32>
    %713 = vector.extract_strided_slice %712 {offsets = [0, 0], sizes = [16, 32], strides = [1, 1]} : vector<32x32xf32> to vector<16x32xf32>
    %c0_210 = arith.constant 0 : index
    %c0_211 = arith.constant 0 : index
    %c0_212 = arith.constant 0 : index
    %714 = vector.load %arg13[%c0_210, %c0_211, %c0_212] : memref<2x16x32xf32, #tpu.memory_space<vmem>>, vector<1x16x32xf32>
    %715 = vector.shape_cast %714 : vector<1x16x32xf32> to vector<16x32xf32>
    %716 = vector.shape_cast %713 : vector<16x32xf32> to vector<1x16x32xf32>
    tpu.vector_store %arg13[%c0_210, %c0_211, %c0_212], %716 {strides = array<i32>} : memref<2x16x32xf32, #tpu.memory_space<vmem>>, vector<1x16x32xf32>,
    %717 = vector.extract_strided_slice %712 {offsets = [16, 0], sizes = [16, 32], strides = [1, 1]} : vector<32x32xf32> to vector<16x32xf32>
    %c1_213 = arith.constant 1 : index
    %c0_214 = arith.constant 0 : index
    %c0_215 = arith.constant 0 : index
    %718 = vector.load %arg13[%c1_213, %c0_214, %c0_215] : memref<2x16x32xf32, #tpu.memory_space<vmem>>, vector<1x16x32xf32>
    %719 = vector.shape_cast %718 : vector<1x16x32xf32> to vector<16x32xf32>
    %720 = vector.shape_cast %717 : vector<16x32xf32> to vector<1x16x32xf32>
    tpu.vector_store %arg13[%c1_213, %c0_214, %c0_215], %720 {strides = array<i32>} : memref<2x16x32xf32, #tpu.memory_space<vmem>>, vector<1x16x32xf32>,
    return
  }
  func.func @transform_0(%arg0: i32, %arg1: i32) -> (i32, i32, i32) {
    %c0_i32 = arith.constant 0 : i32
    %c0_i32_0 = arith.constant 0 : i32
    return %arg0, %arg1, %c0_i32 : i32, i32, i32
  }
  func.func @transform_1(%arg0: i32, %arg1: i32) -> (i32, i32, i32) {
    %c0_i32 = arith.constant 0 : i32
    %0 = arith.subi %c0_i32, %arg1 : i32
    %c0_i32_0 = arith.constant 0 : i32
    %c0_i32_1 = arith.constant 0 : i32
    return %arg0, %0, %c0_i32_0 : i32, i32, i32
  }
  func.func @transform_2(%arg0: i32, %arg1: i32) -> (i32, i32, i32) {
    %c0_i32 = arith.constant 0 : i32
    %c0_i32_0 = arith.constant 0 : i32
    %c0_i32_1 = arith.constant 0 : i32
    %c0_i32_2 = arith.constant 0 : i32
    return %c0_i32, %c0_i32_0, %c0_i32_1 : i32, i32, i32
  }
  func.func @transform_3(%arg0: i32, %arg1: i32) -> (i32, i32, i32) {
    %c0_i32 = arith.constant 0 : i32
    %c0_i32_0 = arith.constant 0 : i32
    %c0_i32_1 = arith.constant 0 : i32
    %c0_i32_2 = arith.constant 0 : i32
    return %c0_i32, %c0_i32_0, %c0_i32_1 : i32, i32, i32
  }
  func.func @transform_4(%arg0: i32, %arg1: i32) -> (i32, i32, i32) {
    %c0_i32 = arith.constant 0 : i32
    %c0_i32_0 = arith.constant 0 : i32
    %c0_i32_1 = arith.constant 0 : i32
    %c0_i32_2 = arith.constant 0 : i32
    return %c0_i32, %c0_i32_0, %c0_i32_1 : i32, i32, i32
  }
  func.func @transform_5(%arg0: i32, %arg1: i32) -> (i32, i32, i32) {
    %c0_i32 = arith.constant 0 : i32
    %c0_i32_0 = arith.constant 0 : i32
    %c0_i32_1 = arith.constant 0 : i32
    %c0_i32_2 = arith.constant 0 : i32
    return %c0_i32, %c0_i32_0, %c0_i32_1 : i32, i32, i32
  }
  func.func @transform_6(%arg0: i32, %arg1: i32) -> (i32, i32, i32) {
    %c0_i32 = arith.constant 0 : i32
    %c0_i32_0 = arith.constant 0 : i32
    %c0_i32_1 = arith.constant 0 : i32
    %c0_i32_2 = arith.constant 0 : i32
    return %c0_i32, %c0_i32_0, %c0_i32_1 : i32, i32, i32
  }
  func.func @transform_7(%arg0: i32, %arg1: i32) -> (i32, i32, i32) {
    %c0_i32 = arith.constant 0 : i32
    %c0_i32_0 = arith.constant 0 : i32
    %c0_i32_1 = arith.constant 0 : i32
    %c0_i32_2 = arith.constant 0 : i32
    return %c0_i32, %c0_i32_0, %c0_i32_1 : i32, i32, i32
  }
  func.func @transform_8(%arg0: i32, %arg1: i32) -> (i32, i32, i32) {
    %c0_i32 = arith.constant 0 : i32
    %c0_i32_0 = arith.constant 0 : i32
    %c0_i32_1 = arith.constant 0 : i32
    %c0_i32_2 = arith.constant 0 : i32
    return %c0_i32, %c0_i32_0, %c0_i32_1 : i32, i32, i32
  }
  func.func @transform_9(%arg0: i32, %arg1: i32) -> (i32, i32, i32) {
    %c0_i32 = arith.constant 0 : i32
    %c0_i32_0 = arith.constant 0 : i32
    %c0_i32_1 = arith.constant 0 : i32
    %c0_i32_2 = arith.constant 0 : i32
    return %c0_i32, %c0_i32_0, %c0_i32_1 : i32, i32, i32
  }
  func.func @transform_10(%arg0: i32, %arg1: i32) -> (i32, i32, i32) {
    %c0_i32 = arith.constant 0 : i32
    %c0_i32_0 = arith.constant 0 : i32
    return %arg0, %arg1, %c0_i32 : i32, i32, i32
  }
  func.func @transform_11(%arg0: i32, %arg1: i32) -> (i32, i32, i32) {
    %c0_i32 = arith.constant 0 : i32
    %0 = arith.subi %c0_i32, %arg1 : i32
    %c0_i32_0 = arith.constant 0 : i32
    %c0_i32_1 = arith.constant 0 : i32
    return %arg0, %0, %c0_i32_0 : i32, i32, i32
  }
}

</mosaic_0001>

<llo_original>
// kernel: tpu_custom_call.1
$region0: #{tpu_custom_call.1}
  #allocation0 [shape = 'u32[]', space=smem, size = 0x4, offset = 0x4, fixed_abs, tag = 'smem constant byte address 0x4 - core index']
  #allocation1 [shape = 'u32[144,128]{1,0:T(1,128)}', space=vmem, size = 0x12000, scoped, tag = 'internal scratch']
  #allocation2 [shape = 'f32[2,16,64]{2,1,0:T(8,128)}', space=vmem, size = 0x4000, scoped, tag = 'scratch operand']
  #allocation3 [shape = 'f32[2,3,96]{2,1,0:T(4,128)}', space=vmem, size = 0x1000, scoped, tag = 'scratch operand']
  #allocation4 [shape = 'f32[2,16,64]{2,1,0:T(8,128)}', space=vmem, size = 0x4000, scoped, tag = 'scratch operand']
  #allocation5 [shape = 'f32[2,3,96]{2,1,0:T(4,128)}', space=vmem, size = 0x1000, scoped, tag = 'scratch operand']
  %s0 = inlined_call_operand.vmem [shape: f32[2,16,32], index: 0, kind: input, shape index: {}]
  %s1 = inlined_call_operand.vmem [shape: f32[2,16,32], index: 1, kind: input, shape index: {}]
  %s2 = inlined_call_operand.vmem [shape: f32[2,32,162], index: 2, kind: input, shape index: {}]
  %s3 = inlined_call_operand.hbm [shape: f32[2,4,96], index: 3, kind: input, shape index: {}]
  %s4 = inlined_call_operand.vmem [shape: f32[2,1,96], index: 4, kind: input, shape index: {}]
  %s5 = inlined_call_operand.vmem [shape: f32[2,1,2], index: 5, kind: input, shape index: {}]
  %s6 = inlined_call_operand.vmem [shape: f32[2,1,2], index: 6, kind: input, shape index: {}]
  %s7 = inlined_call_operand.vmem [shape: f32[2,1,64], index: 7, kind: input, shape index: {}]
  %s8 = inlined_call_operand.vmem [shape: f32[2,1,64], index: 8, kind: input, shape index: {}]
  %s9 = inlined_call_operand.vmem [shape: f32[2,64,32], index: 9, kind: input, shape index: {}]
  %s10 = inlined_call_operand.hbm [shape: f32[2,16,32], index: 10, kind: output, shape index: {0}]
  %s11 = inlined_call_operand.hbm [shape: f32[2,16,32], index: 11, kind: output, shape index: {1}]
  %12 = xla_tuple %s10, %s11
  %s13 = sld [smem:[#allocation0]]
  $region66: #{tpu_custom_call.1} parent=0
    _
  %s15 = ssub.s32 1, %s13
  %s16 = scalar_select 0, %s15, %s13
  $region1: #{tpu_custom_call.1} parent=0
    #allocation6 [shape = 'u8[4096]{0}', space=vmem, size = 0x1000, scoped, tag = 'input window, operand 3, single buffered']
    #allocation7 [shape = 's32[1]{0}', space=sflag, size = 0x4, scoped, tag = 'scoped memory for tpu_custom_call.1']
    #allocation8 [shape = 's32[1]{0}', space=sflag, size = 0x4, scoped, tag = 'scoped memory for tpu_custom_call.1']
    #allocation9 [shape = 'u8[16384]{0}', space=vmem, size = 0x4000, scoped, tag = 'output window, operand 0, single buffered']
    #allocation10 [shape = 'u8[16384]{0}', space=vmem, size = 0x4000, scoped, tag = 'output window, operand 1, single buffered']
    #allocation11 [shape = 's32[1]{0}', space=sflag, size = 0x4, scoped, tag = 'scoped memory for tpu_custom_call.1']
    %17 = vsyncpa [#allocation7], 0
    %18 = vsyncpa [#allocation8], 0
    %19 = vsyncpa [#allocation11], 0
    // Predicated region
    $region2: #{tpu_custom_call.1} parent=1 // pred_check
      _
    $region3: #{tpu_custom_call.1} parent=1 // pred_check_branch
      %21 = sbr.rel (0) target = $region5
    $region4: #{tpu_custom_call.1} parent=1 // pred_region
      _
    $region5: #{tpu_custom_call.1} parent=1 // pred_fallthru
      _
    // Predicated region
    $region6: #{tpu_custom_call.1} parent=1 // pred_check
      _
    $region7: #{tpu_custom_call.1} parent=1 // pred_check_branch
      %23 = sbr.rel (0) target = $region9
    $region8: #{tpu_custom_call.1} parent=1 // pred_region
      %s24 = ssub.s32 0, 0
      %s25 = smul.u32 2, %s24
      %p26 = scmp.lt.s32.totalorder %s25, 1
      %s27 = scalar_select %p26, %s25, 1
      %s28 = smul.addr %s27, 8
      %s29 = scalar_lea.vmem %s1, %s28
      %s30 = ssub.s32 0, 0
      %s31 = smul.u32 2, %s30
    $region9: #{tpu_custom_call.1} parent=1 // pred_fallthru
      _
    // Predicated region
    $region10: #{tpu_custom_call.1} parent=1 // pred_check
      _
    $region11: #{tpu_custom_call.1} parent=1 // pred_check_branch
      %33 = sbr.rel (0) target = $region13
    $region12: #{tpu_custom_call.1} parent=1 // pred_region
      _
    $region13: #{tpu_custom_call.1} parent=1 // pred_fallthru
      _
    // Predicated region
    $region14: #{tpu_custom_call.1} parent=1 // pred_check
      _
    $region15: #{tpu_custom_call.1} parent=1 // pred_check_branch
      %35 = sbr.rel (0) target = $region17
    $region16: #{tpu_custom_call.1} parent=1 // pred_region
      %s37 = ssub.s32 128, 128
      %38 = vsyncadd [#allocation7], %s37
      %s39 = sshll.u32 [#allocation6], 4
      %s40 = int_to_ptr.vmem [resolvable:$true] %s39
      %45 = dma.hbm_to_vmem [thread:$0]  %s3, 128, %s40, [#allocation7], 64, 64, 4
    $region17: #{tpu_custom_call.1} parent=1 // pred_fallthru
      _
    // Predicated region
    $region18: #{tpu_custom_call.1} parent=1 // pred_check
      _
    $region19: #{tpu_custom_call.1} parent=1 // pred_check_branch
      %47 = sbr.rel (0) target = $region21
    $region20: #{tpu_custom_call.1} parent=1 // pred_region
      _
    $region21: #{tpu_custom_call.1} parent=1 // pred_fallthru
      _
    // Predicated region
    $region22: #{tpu_custom_call.1} parent=1 // pred_check
      _
    $region23: #{tpu_custom_call.1} parent=1 // pred_check_branch
      %49 = sbr.rel (0) target = $region25
    $region24: #{tpu_custom_call.1} parent=1 // pred_region
      _
    $region25: #{tpu_custom_call.1} parent=1 // pred_fallthru
      _
    // Predicated region
    $region26: #{tpu_custom_call.1} parent=1 // pred_check
      _
    $region27: #{tpu_custom_call.1} parent=1 // pred_check_branch
      %51 = sbr.rel (0) target = $region29
    $region28: #{tpu_custom_call.1} parent=1 // pred_region
      _
    $region29: #{tpu_custom_call.1} parent=1 // pred_fallthru
      _
    // Predicated region
    $region30: #{tpu_custom_call.1} parent=1 // pred_check
      _
    $region31: #{tpu_custom_call.1} parent=1 // pred_check_branch
      %53 = sbr.rel (0) target = $region33
    $region32: #{tpu_custom_call.1} parent=1 // pred_region
      _
    $region33: #{tpu_custom_call.1} parent=1 // pred_fallthru
      _
    // Predicated region
    $region34: #{tpu_custom_call.1} parent=1 // pred_check
      _
    $region35: #{tpu_custom_call.1} parent=1 // pred_check_branch
      %55 = sbr.rel (0) target = $region37
    $region36: #{tpu_custom_call.1} parent=1 // pred_region
      _
    $region37: #{tpu_custom_call.1} parent=1 // pred_fallthru
      _
    // Predicated region
    $region38: #{tpu_custom_call.1} parent=1 // pred_check
      _
    $region39: #{tpu_custom_call.1} parent=1 // pred_check_branch
      %57 = sbr.rel (0) target = $region41
    $region40: #{tpu_custom_call.1} parent=1 // pred_region
      _
    $region41: #{tpu_custom_call.1} parent=1 // pred_fallthru
      _
    // Predicated region
    $region42: #{tpu_custom_call.1} parent=1 // pred_check
      _
    $region43: #{tpu_custom_call.1} parent=1 // pred_check_branch
      %59 = sbr.rel (0) target = $region45
    $region44: #{tpu_custom_call.1} parent=1 // pred_region
      %60 = dma.done [#allocation7], 128
    $region45: #{tpu_custom_call.1} parent=1 // pred_fallthru
      _
    %s61 = ssub.s32 0, 0
    %s62 = smul.u32 2, %s61
    %p63 = scmp.lt.s32.totalorder %s62, 1
    %s64 = scalar_select %p63, %s62, 1
    %s65 = smul.addr %s64, 8
    %s66 = scalar_lea.vmem %s1, %s65
    %s67 = ssub.s32 0, 0
    %s68 = smul.u32 2, %s67
    %p69 = scmp.lt.s32.totalorder %s68, 1
    %s70 = scalar_select %p69, %s68, 1
    %s71 = smul.addr %s70, 8
    %s72 = scalar_lea.vmem %s1, %s71
    %s73 = ssub.s32 0, 0
    %s74 = smul.u32 2, %s73
    %s75 = ssub.s32 0, 0
    %s76 = smul.u32 2, %s75
    %p77 = scmp.eq.s32.totalorder 0, 0
    // Predicated region
    $region46: #{tpu_custom_call.1} parent=1 // pred_check
      %p78 = pneg %p77
    $region47: #{tpu_custom_call.1} parent=1 // pred_check_branch
      %80 = sbr.rel (%p78) target = $region49
    $region48: #{tpu_custom_call.1} parent=1 // pred_region
      %vm81 = vcmask 523264
      %82 = vst.msk [vmem:[#allocation2] sm:$0xff] %vm81, 0.0
      %83 = vst.msk [vmem:[#allocation2 + $0x8] sm:$0xff] %vm81, 0.0
      %84 = vst.msk [vmem:[#allocation2 + $0x10] sm:$0xff] %vm81, 0.0
      %85 = vst.msk [vmem:[#allocation2 + $0x18] sm:$0xff] %vm81, 0.0
      %vm86 = vcmask 780288
      %87 = vst.msk [vmem:[#allocation3] sm:$0x7] %vm86, 0.0
      %88 = vst.msk [vmem:[#allocation3 + $0x4] sm:$0x7] %vm86, 0.0
      %89 = vst.msk [vmem:[#allocation4] sm:$0xff] %vm81, 0.0
      %90 = vst.msk [vmem:[#allocation4 + $0x8] sm:$0xff] %vm81, 0.0
      %91 = vst.msk [vmem:[#allocation4 + $0x10] sm:$0xff] %vm81, 0.0
      %92 = vst.msk [vmem:[#allocation4 + $0x18] sm:$0xff] %vm81, 0.0
      %93 = vst.msk [vmem:[#allocation5] sm:$0x7] %vm86, 0.0
      %94 = vst.msk [vmem:[#allocation5 + $0x4] sm:$0x7] %vm86, 0.0
    $region49: #{tpu_custom_call.1} parent=1 // pred_fallthru
      _
    %v95 = vlaneseq
    %v96 = vshrl.u32 %v95, 7
    %v97 = vadd.s32 %v96, 8
    %v98 = vlaneseq
    %v99 = vand.u32 %v98, 127
    %vm100 = vcmp.le.s32.totalorder %v99, %v96
    %vm101 = vcmp.le.s32.totalorder %v99, %v97
    %v102 = vsel %vm100, 1, 0
    %v103 = vsel %vm101, 1, 0
    %v104 = vcvt.s32.f32 %v102
    %v105 = vcvt.s32.f32 %v103
    %vm106 = vcmp.le.s32.totalorder %v96, %v99
    %vm107 = vcmp.le.s32.totalorder %v97, %v99
    %v108 = vsel %vm106, 1, 0
    %v109 = vsel %vm107, 1, 0
    %v110 = vcvt.s32.f32 %v108
    %v111 = vcvt.s32.f32 %v109
    %vm112 = vcmp.ge.s32.totalorder %v96, %v99
    %vm113 = vcmp.ge.s32.totalorder %v97, %v99
    %v114 = vld [vmem:[%s2] sm:$0xff]
    %v115 = vld [vmem:[%s2 + $0x8] sm:$0xff]
    %v116 = vld [vmem:[%s2 + $0x10] sm:$0xff]
    %v117 = vld [vmem:[%s2 + $0x18] sm:$0xff]
    %v118 = vld [vmem:[%s2 + $0x20] sm:$0xff]
    %v119 = vld [vmem:[%s2 + $0x28] sm:$0xff]
    %v120 = vld [vmem:[%s2 + $0x30] sm:$0xff]
    %v121 = vld [vmem:[%s2 + $0x38] sm:$0xff]
    %v122 = vld [vmem:[%s9] sm:$0xff]
    %v123 = vld [vmem:[%s9 + $0x8] sm:$0xff]
    %v124 = vld [vmem:[%s9 + $0x10] sm:$0xff]
    %v125 = vld [vmem:[%s9 + $0x18] sm:$0xff]
    %v126 = vld [vmem:[%s9 + $0x20] sm:$0xff]
    %v127 = vld [vmem:[%s9 + $0x28] sm:$0xff]
    %v128 = vld [vmem:[%s9 + $0x30] sm:$0xff]
    %v129 = vld [vmem:[%s9 + $0x38] sm:$0xff]
    %v130 = vld [vmem:[#allocation6] sm:$0xf]
    %v131 = vld [vmem:[%s4] sm:$0x1]
    %v132 = vld [vmem:[%s6] sm:$0x1]
    %v133 = vmul.f32 %v132, 1.442695
    %v134 = vpow.pop %v133
    %v135 = vsub.f32 0.0, %v134
    %v136 = vld [vmem:[%s5] sm:$0x1]
    %v137 = vld [vmem:[%s7] sm:$0x1]
    %v138 = vld [vmem:[%s8] sm:$0x1]
    %v139 = vld [vmem:[%s0] sm:$0xff]
    %v140 = vld [vmem:[%s0 + $0x8] sm:$0xff]
    %s141 = scalar_lea.vmem %s0, 16
    %v142 = vld [vmem:[%s141] sm:$0xff]
    %v143 = vld [vmem:[%s141 + $0x8] sm:$0xff]
    %vm144 = vcmask 261120
    %v146 = vsel %vm144, %v139, 0
    %v149 = vsel %vm144, %v140, 0
    %v152 = vsel %vm144, %v142, 0
    %v155 = vsel %vm144, %v143, 0
    %157 = vmatprep.subr.mxu0 0.0
    %158 = vmatpush1.msra.mxu0 0.0
    %159 = vmatprep.subr.mxu0 0.0
    %160 = vmatpush1.msra.mxu0 0.0
    %161 = vmatprep.subr.mxu0 0.0
    %162 = vmatpush1.msra.mxu0 0.0
    %163 = vmatprep.subr.mxu0 0.0
    %164 = vmatpush1.msra.mxu0 0.0
    %165 = vmatprep.subr.mxu0 0.0
    %166 = vmatpush1.msra.mxu0 0.0
    %167 = vmatprep.subr.mxu0 0.0
    %168 = vmatpush1.msra.mxu0 0.0
    %169 = vmatprep.subr.mxu0 0.0
    %170 = vmatpush1.msra.mxu0 0.0
    %171 = vmatprep.subr.mxu0 0.0
    %172 = vmatpush1.msra.mxu0 0.0
    %173 = vmatprep.subr.mxu0 0.0
    %174 = vmatpush1.msra.mxu0 0.0
    %175 = vmatprep.subr.mxu0 0.0
    %176 = vmatpush1.msra.mxu0 0.0
    %177 = vmatprep.subr.mxu0 0.0
    %178 = vmatpush1.msra.mxu0 0.0
    %179 = vmatprep.subr.mxu0 0.0
    %180 = vmatpush1.msra.mxu0 0.0
    %181 = vmatprep.subr.mxu0 %v121
    %182 = vmatpush1.msra.mxu0 %v120
    %183 = vmatprep.subr.mxu0 %v119
    %184 = vmatpush1.msra.mxu0 %v118
    %185 = vmatprep.subr.mxu0 %v117
    %186 = vmatpush1.msra.mxu0 %v116
    %187 = vmatprep.subr.mxu0 %v115
    %188 = vmatpush1.msra.mxu0 %v114
    %189 = vmatprep.subr.mxu0 0.0
    %190 = vmatpush2.msra.mxu0 0.0
    %191 = vmatprep.subr.mxu0 0.0
    %192 = vmatpush2.msra.mxu0 0.0
    %193 = vmatprep.subr.mxu0 0.0
    %194 = vmatpush2.msra.mxu0 0.0
    %195 = vmatprep.subr.mxu0 0.0
    %196 = vmatpush2.msra.mxu0 0.0
    %197 = vmatprep.subr.mxu0 0.0
    %198 = vmatpush2.msra.mxu0 0.0
    %199 = vmatprep.subr.mxu0 0.0
    %200 = vmatpush2.msra.mxu0 0.0
    %201 = vmatprep.subr.mxu0 0.0
    %202 = vmatpush2.msra.mxu0 0.0
    %203 = vmatprep.subr.mxu0 0.0
    %204 = vmatpush2.msra.mxu0 0.0
    %205 = vmatprep.subr.mxu0 0.0
    %206 = vmatpush2.msra.mxu0 0.0
    %207 = vmatprep.subr.mxu0 0.0
    %208 = vmatpush2.msra.mxu0 0.0
    %209 = vmatprep.subr.mxu0 0.0
    %210 = vmatpush2.msra.mxu0 0.0
    %211 = vmatprep.subr.mxu0 0.0
    %212 = vmatpush2.msra.mxu0 0.0
    %213 = vmatprep.subr.mxu0 0.0
    %214 = vmatpush2.msra.mxu0 0.0
    %215 = vmatprep.subr.mxu0 0.0
    %216 = vmatpush2.msra.mxu0 0.0
    %217 = vmatprep.subr.mxu0 0.0
    %218 = vmatpush2.msra.mxu0 0.0
    %219 = vmatprep.subr.mxu0 0.0
    %220 = vmatpush2.msra.mxu0 0.0
    %221 = vmatprep.mubr.f32.mxu0 0.0
    %222 = vmatmul.mubr.f32.gmra.mxu0 %v146
    %v223 = vpop.f32.mrf.mxu0
    %v224 = vadd.f32 0.0, %v223
    %v225 = vpop.f32.mrf.mxu0
    %v226 = vadd.f32 0.0, %v225
    %227 = vmatprep.mubr.f32.mxu0 0.0
    %228 = vmatmul.mubr.f32.gmra.mxu0 %v149
    %v229 = vpop.f32.mrf.mxu0
    %v230 = vadd.f32 0.0, %v229
    %v231 = vpop.f32.mrf.mxu0
    %v232 = vadd.f32 0.0, %v231
    %233 = vmatprep.mubr.f32.mxu0 0.0
    %234 = vmatmul.mubr.f32.gmra.mxu0 %v152
    %v235 = vpop.f32.mrf.mxu0
    %v236 = vadd.f32 0.0, %v235
    %v237 = vpop.f32.mrf.mxu0
    %v238 = vadd.f32 0.0, %v237
    %239 = vmatprep.mubr.f32.mxu0 0.0
    %240 = vmatmul.mubr.f32.gmra.mxu0 %v155
    %v241 = vpop.f32.mrf.mxu0
    %v242 = vadd.f32 0.0, %v241
    %v243 = vpop.f32.mrf.mxu0
    %v244 = vadd.f32 0.0, %v243
    %245 = vdwg.mxu0
    %v247 = vlaneseq
    %v248 = vshrl.u32 %v247, 7
    %v249 = vsub.s32 0, %v248
    %v250 = vrot.slane %v136, %v249
    %251 = vrot.lane.b32.xlu0 %v250, 32
    %v252 = vpop.permute.xlu0 %251
    %v254 = vadd.f32 %v226, %v252
    %v255 = vadd.f32 %v232, %v252
    %vm256 = vcmp.gt.f32.partialorder %v254, 20.0
    %vm257 = vcmp.gt.f32.partialorder %v255, 20.0
    %v258 = vmin.f32 %v254, 20.0
    %v259 = vmin.f32 %v255, 20.0
    %v260 = vmul.f32 %v258, 1.442695
    %v261 = vpow.pop %v260
    %v262 = vmul.f32 %v259, 1.442695
    %v263 = vpow.pop %v262
    %v264 = vadd.f32 %v261, 1.0
    %v265 = vadd.f32 %v263, 1.0
    %v266 = vlog2.pop %v264
    %v267 = vmul.f32 %v266, 0.6931472
    %v268 = vlog2.pop %v265
    %v269 = vmul.f32 %v268, 0.6931472
    %v270 = vsel %vm256, %v254, %v267
    %v271 = vsel %vm257, %v255, %v269
    %v272 = vld [vmem:[#allocation3] sm:$0x7]
    %v274 = vlaneseq
    %v275 = vshrl.u32 %v274, 7
    %v276 = vsub.s32 0, %v275
    %v277 = vrot.slane %v131, %v276
    %vm283 = vcmask 1042432
    %v284 = vrot.slane %v224, 5
    %v285 = vrot.slane %v226, 5
    %v286 = vrot.slane %v230, 5
    %v287 = vsel %vm283, %v284, %v286
    %v288 = vrot.slane %v232, 5
    %v289 = vsel %vm283, %v285, %v288
    %290 = vrot.lane.b32.xlu0 %v284, 64
    %v291 = vpop.permute.xlu0 %290
    %292 = vrot.lane.b32.xlu0 %v285, 64
    %v293 = vpop.permute.xlu0 %292
    %294 = vrot.lane.b32.xlu0 %v287, 64
    %v295 = vpop.permute.xlu0 %294
    %296 = vrot.lane.b32.xlu0 %v289, 64
    %v297 = vpop.permute.xlu0 %296
    %298 = vrot.lane.b32.xlu0 %v286, 64
    %v299 = vpop.permute.xlu0 %298
    %300 = vrot.lane.b32.xlu0 %v288, 64
    %v301 = vpop.permute.xlu0 %300
    %vm302 = vcmask 523264
    %v303 = vsel %vm302, %v291, %v293
    %v304 = vsel %vm302, %v295, %v297
    %v305 = vsel %vm302, %v299, %v301
    %v309 = vsel %vm283, %v272, %v303
    %v310 = vlaneseq
    %v311 = vshrl.u32 %v310, 7
    %v312 = vsub.s32 0, %v311
    %v313 = vrot.slane %v130, %v312
    %v314 = vmul.f32 %v313, %v309
    %v315 = vmul.f32 %v313, %v304
    %v316 = vadd.f32 %v277, %v314
    %v317 = vadd.f32 %v277, %v315
    %v318 = vlaneseq
    %v319 = vshrl.u32 %v318, 7
    %v320 = vsub.s32 1, %v319
    %v321 = vrot.slane %v130, %v320
    %v322 = vmul.f32 %v321, %v309
    %v323 = vmul.f32 %v321, %v304
    %v324 = vmul.f32 %v321, %v305
    %vm328 = vcmask 1046528
    %v329 = vrot.slane %v322, 1
    %v330 = vrot.slane %v323, 1
    %v331 = vsel %vm328, %v329, %v330
    %v332 = vrot.slane %v324, 1
    %v333 = vsel %vm328, %v330, %v332
    %v336 = vadd.f32 %v316, %v331
    %v337 = vadd.f32 %v317, %v333
    %v338 = vlaneseq
    %v339 = vshrl.u32 %v338, 7
    %v340 = vsub.s32 2, %v339
    %v341 = vrot.slane %v130, %v340
    %v342 = vmul.f32 %v341, %v309
    %v343 = vmul.f32 %v341, %v304
    %v344 = vmul.f32 %v341, %v305
    %vm348 = vcmask 1045504
    %v349 = vrot.slane %v342, 2
    %v350 = vrot.slane %v343, 2
    %v351 = vsel %vm348, %v349, %v350
    %v352 = vrot.slane %v344, 2
    %v353 = vsel %vm348, %v350, %v352
    %v356 = vadd.f32 %v336, %v351
    %v357 = vadd.f32 %v337, %v353
    %v358 = vlaneseq
    %v359 = vshrl.u32 %v358, 7
    %v360 = vsub.s32 3, %v359
    %v361 = vrot.slane %v130, %v360
    %v362 = vmul.f32 %v361, %v309
    %v363 = vmul.f32 %v361, %v304
    %v364 = vmul.f32 %v361, %v305
    %vm368 = vcmask 1044480
    %v369 = vrot.slane %v362, 3
    %v370 = vrot.slane %v363, 3
    %v371 = vsel %vm368, %v369, %v370
    %v372 = vrot.slane %v364, 3
    %v373 = vsel %vm368, %v370, %v372
    %v376 = vadd.f32 %v356, %v371
    %v377 = vadd.f32 %v357, %v373
    %378 = vrot.lane.b32.xlu0 %v230, 64
    %v379 = vpop.permute.xlu0 %378
    %380 = vrot.lane.b32.xlu0 %v232, 64
    %v381 = vpop.permute.xlu0 %380
    %v382 = vsel %vm302, %v379, %v381
    %vm384 = vcmask 785413
    %385 = vst.msk [vmem:[#allocation3 - $0x5] sm:$0xe0] %vm384, %v382
    %v386 = vsub.f32 0.0, %v376
    %v387 = vsub.f32 0.0, %v377
    %v388 = vmul.f32 %v386, 1.442695
    %v389 = vpow.pop %v388
    %v390 = vmul.f32 %v387, 1.442695
    %v391 = vpow.pop %v390
    %v392 = vadd.f32 %v389, 1.0
    %v393 = vadd.f32 %v391, 1.0
    %v394 = vrcp.pop %v392
    %v395 = vmul.f32 1.0, %v394
    %v396 = vrcp.pop %v393
    %v397 = vmul.f32 1.0, %v396
    %v398 = vmul.f32 %v376, %v395
    %v399 = vmul.f32 %v377, %v397
    %v401 = vlaneseq
    %v402 = vshrl.u32 %v401, 7
    %v403 = vsub.s32 0, %v402
    %v404 = vrot.slane %v135, %v403
    %405 = vrot.lane.b32.xlu0 %v404, 32
    %v406 = vpop.permute.xlu0 %405
    %v408 = vmul.f32 %v270, %v406
    %v409 = vmul.f32 %v271, %v406
    %vm410 = vcmask 277760
    %v411 = vsel %vm410, %v408, 0.0
    %v412 = vsel %vm410, %v409, 0.0
    %v413 = vadd.f32 %v411, %v412
    %v414 = vrot.slane %v413, 4
    %v415 = vadd.f32 %v413, %v414
    %v416 = vrot.slane %v415, 2
    %v417 = vadd.f32 %v415, %v416
    %v418 = vrot.slane %v417, 1
    %v419 = vadd.f32 %v417, %v418
    %422 = vrot.lane.b32.xlu0 %v408, 96
    %v423 = vpop.permute.xlu0 %422
    %424 = vrot.lane.b32.xlu0 %v409, 96
    %v425 = vpop.permute.xlu0 %424
    %vm428 = vcmask 130048
    %v430 = vsel %vm428, %v104, 0
    %v433 = vsel %vm428, %v105, 0
    %435 = vmatprep.subr.mxu0 0.0
    %436 = vmatpush1.msra.mxu0 0.0
    %437 = vmatprep.subr.mxu0 0.0
    %438 = vmatpush1.msra.mxu0 0.0
    %439 = vmatprep.subr.mxu0 0.0
    %440 = vmatpush1.msra.mxu0 0.0
    %441 = vmatprep.subr.mxu0 0.0
    %442 = vmatpush1.msra.mxu0 0.0
    %443 = vmatprep.subr.mxu0 0.0
    %444 = vmatpush1.msra.mxu0 0.0
    %445 = vmatprep.subr.mxu0 0.0
    %446 = vmatpush1.msra.mxu0 0.0
    %447 = vmatprep.subr.mxu0 0.0
    %448 = vmatpush1.msra.mxu0 0.0
    %449 = vmatprep.subr.mxu0 0.0
    %450 = vmatpush1.msra.mxu0 0.0
    %451 = vmatprep.subr.mxu0 0.0
    %452 = vmatpush1.msra.mxu0 0.0
    %453 = vmatprep.subr.mxu0 0.0
    %454 = vmatpush1.msra.mxu0 0.0
    %455 = vmatprep.subr.mxu0 0.0
    %456 = vmatpush1.msra.mxu0 0.0
    %457 = vmatprep.subr.mxu0 0.0
    %458 = vmatpush1.msra.mxu0 0.0
    %459 = vmatprep.subr.mxu0 0.0
    %460 = vmatpush1.msra.mxu0 0.0
    %461 = vmatprep.subr.mxu0 0.0
    %462 = vmatpush1.msra.mxu0 0.0
    %463 = vmatprep.subr.mxu0 0.0
    %464 = vmatpush1.msra.mxu0 %v425
    %465 = vmatprep.subr.mxu0 0.0
    %466 = vmatpush1.msra.mxu0 %v423
    %467 = vmatprep.subr.mxu0 0.0
    %468 = vmatpush2.msra.mxu0 0.0
    %469 = vmatprep.subr.mxu0 0.0
    %470 = vmatpush2.msra.mxu0 0.0
    %471 = vmatprep.subr.mxu0 0.0
    %472 = vmatpush2.msra.mxu0 0.0
    %473 = vmatprep.subr.mxu0 0.0
    %474 = vmatpush2.msra.mxu0 0.0
    %475 = vmatprep.subr.mxu0 0.0
    %476 = vmatpush2.msra.mxu0 0.0
    %477 = vmatprep.subr.mxu0 0.0
    %478 = vmatpush2.msra.mxu0 0.0
    %479 = vmatprep.subr.mxu0 0.0
    %480 = vmatpush2.msra.mxu0 0.0
    %481 = vmatprep.subr.mxu0 0.0
    %482 = vmatpush2.msra.mxu0 0.0
    %483 = vmatprep.subr.mxu0 0.0
    %484 = vmatpush2.msra.mxu0 0.0
    %485 = vmatprep.subr.mxu0 0.0
    %486 = vmatpush2.msra.mxu0 0.0
    %487 = vmatprep.subr.mxu0 0.0
    %488 = vmatpush2.msra.mxu0 0.0
    %489 = vmatprep.subr.mxu0 0.0
    %490 = vmatpush2.msra.mxu0 0.0
    %491 = vmatprep.subr.mxu0 0.0
    %492 = vmatpush2.msra.mxu0 0.0
    %493 = vmatprep.subr.mxu0 0.0
    %494 = vmatpush2.msra.mxu0 0.0
    %495 = vmatprep.subr.mxu0 0.0
    %496 = vmatpush2.msra.mxu0 0.0
    %497 = vmatprep.subr.mxu0 0.0
    %498 = vmatpush2.msra.mxu0 0.0
    %499 = vmatprep.mubr.f32.mxu0 0.0
    %500 = vmatmul.mubr.f32.gmra.mxu0 %v430
    %v501 = vpop.f32.mrf.mxu0
    %v502 = vadd.f32 0.0, %v501
    %v503 = vpop.f32.mrf.mxu0
    %504 = vmatprep.mubr.f32.mxu0 0.0
    %505 = vmatmul.mubr.f32.gmra.mxu0 %v433
    %v506 = vpop.f32.mrf.mxu0
    %v507 = vadd.f32 0.0, %v506
    %v508 = vpop.f32.mrf.mxu0
    %509 = vdwg.mxu0
    %510 = vxpose.xlu0.b32.start [1/16] %v423, 128
    %511 = vxpose.xlu0.b32.cont [2/16] %v425, 128
    %512 = vxpose.xlu0.b32.cont [3/16] 0.0, 128
    %513 = vxpose.xlu0.b32.cont [4/16] 0.0, 128
    %514 = vxpose.xlu0.b32.cont [5/16] 0.0, 128
    %515 = vxpose.xlu0.b32.cont [6/16] 0.0, 128
    %516 = vxpose.xlu0.b32.cont [7/16] 0.0, 128
    %517 = vxpose.xlu0.b32.cont [8/16] 0.0, 128
    %518 = vxpose.xlu0.b32.cont [9/16] 0.0, 128
    %519 = vxpose.xlu0.b32.cont [10/16] 0.0, 128
    %520 = vxpose.xlu0.b32.cont [11/16] 0.0, 128
    %521 = vxpose.xlu0.b32.cont [12/16] 0.0, 128
    %522 = vxpose.xlu0.b32.cont [13/16] 0.0, 128
    %523 = vxpose.xlu0.b32.cont [14/16] 0.0, 128
    %524 = vxpose.xlu0.b32.cont [15/16] 0.0, 128
    %525 = vxpose.xlu0.b32.end [16/16] 0.0, 128
    %v526 = vpop.trf.xlu0
    %v527 = vpop.trf.xlu0
    %v528 = vpop.trf.xlu0
    %v529 = vpop.trf.xlu0
    %v530 = vpop.trf.xlu0
    %v531 = vpop.trf.xlu0
    %v532 = vpop.trf.xlu0
    %v533 = vpop.trf.xlu0
    %v534 = vpop.trf.xlu0
    %v535 = vpop.trf.xlu0
    %v536 = vpop.trf.xlu0
    %v537 = vpop.trf.xlu0
    %v538 = vpop.trf.xlu0
    %v539 = vpop.trf.xlu0
    %v540 = vpop.trf.xlu0
    %v541 = vpop.trf.xlu0
    %v543 = vsel %vm428, %v526, 0
    %545 = vmatprep.subr.mxu0 0.0
    %546 = vmatpush1.msra.mxu0 0.0
    %547 = vmatprep.subr.mxu0 0.0
    %548 = vmatpush1.msra.mxu0 0.0
    %549 = vmatprep.subr.mxu0 0.0
    %550 = vmatpush1.msra.mxu0 0.0
    %551 = vmatprep.subr.mxu0 0.0
    %552 = vmatpush1.msra.mxu0 0.0
    %553 = vmatprep.subr.mxu0 0.0
    %554 = vmatpush1.msra.mxu0 0.0
    %555 = vmatprep.subr.mxu0 0.0
    %556 = vmatpush1.msra.mxu0 0.0
    %557 = vmatprep.subr.mxu0 0.0
    %558 = vmatpush1.msra.mxu0 0.0
    %559 = vmatprep.subr.mxu0 0.0
    %560 = vmatpush1.msra.mxu0 0.0
    %561 = vmatprep.subr.mxu0 0.0
    %562 = vmatpush1.msra.mxu0 0.0
    %563 = vmatprep.subr.mxu0 0.0
    %564 = vmatpush1.msra.mxu0 0.0
    %565 = vmatprep.subr.mxu0 0.0
    %566 = vmatpush1.msra.mxu0 0.0
    %567 = vmatprep.subr.mxu0 0.0
    %568 = vmatpush1.msra.mxu0 0.0
    %569 = vmatprep.subr.mxu0 0.0
    %570 = vmatpush1.msra.mxu0 0.0
    %571 = vmatprep.subr.mxu0 0.0
    %572 = vmatpush1.msra.mxu0 0.0
    %573 = vmatprep.subr.mxu0 0.0
    %574 = vmatpush1.msra.mxu0 %v111
    %575 = vmatprep.subr.mxu0 0.0
    %576 = vmatpush1.msra.mxu0 %v110
    %577 = vmatprep.subr.mxu0 0.0
    %578 = vmatpush2.msra.mxu0 0.0
    %579 = vmatprep.subr.mxu0 0.0
    %580 = vmatpush2.msra.mxu0 0.0
    %581 = vmatprep.subr.mxu0 0.0
    %582 = vmatpush2.msra.mxu0 0.0
    %583 = vmatprep.subr.mxu0 0.0
    %584 = vmatpush2.msra.mxu0 0.0
    %585 = vmatprep.subr.mxu0 0.0
    %586 = vmatpush2.msra.mxu0 0.0
    %587 = vmatprep.subr.mxu0 0.0
    %588 = vmatpush2.msra.mxu0 0.0
    %589 = vmatprep.subr.mxu0 0.0
    %590 = vmatpush2.msra.mxu0 0.0
    %591 = vmatprep.subr.mxu0 0.0
    %592 = vmatpush2.msra.mxu0 0.0
    %593 = vmatprep.subr.mxu0 0.0
    %594 = vmatpush2.msra.mxu0 0.0
    %595 = vmatprep.subr.mxu0 0.0
    %596 = vmatpush2.msra.mxu0 0.0
    %597 = vmatprep.subr.mxu0 0.0
    %598 = vmatpush2.msra.mxu0 0.0
    %599 = vmatprep.subr.mxu0 0.0
    %600 = vmatpush2.msra.mxu0 0.0
    %601 = vmatprep.subr.mxu0 0.0
    %602 = vmatpush2.msra.mxu0 0.0
    %603 = vmatprep.subr.mxu0 0.0
    %604 = vmatpush2.msra.mxu0 0.0
    %605 = vmatprep.subr.mxu0 0.0
    %606 = vmatpush2.msra.mxu0 0.0
    %607 = vmatprep.subr.mxu0 0.0
    %608 = vmatpush2.msra.mxu0 0.0
    %609 = vmatprep.mubr.f32.mxu0 0.0
    %610 = vmatmul.mubr.f32.gmra.mxu0 %v543
    %v611 = vpop.f32.mrf.mxu0
    %v612 = vadd.f32 0.0, %v611
    %v613 = vpop.f32.mrf.mxu0
    %614 = vdwg.mxu0
    %617 = vrot.lane.b32.xlu0 %v398, 48
    %v618 = vpop.permute.xlu0 %617
    %619 = vrot.lane.b32.xlu0 %v399, 48
    %v620 = vpop.permute.xlu0 %619
    %621 = vrot.lane.b32.xlu0 %v398, 64
    %v622 = vpop.permute.xlu0 %621
    %623 = vrot.lane.b32.xlu0 %v399, 64
    %v624 = vpop.permute.xlu0 %623
    %v625 = vsel %vm428, %v618, 0
    %v627 = vsel %vm428, %v620, 0
    %v629 = vsel %vm428, %v622, 0
    %v631 = vsel %vm428, %v624, 0
    %633 = vmatprep.subr.mxu0 0.0
    %634 = vmatpush1.xpose.msra.mxu0 0.0
    %635 = vmatprep.subr.mxu0 0.0
    %636 = vmatpush1.xpose.msra.mxu0 0.0
    %637 = vmatprep.subr.mxu0 0.0
    %638 = vmatpush1.xpose.msra.mxu0 0.0
    %639 = vmatprep.subr.mxu0 0.0
    %640 = vmatpush1.xpose.msra.mxu0 0.0
    %641 = vmatprep.subr.mxu0 0.0
    %642 = vmatpush1.xpose.msra.mxu0 0.0
    %643 = vmatprep.subr.mxu0 0.0
    %644 = vmatpush1.xpose.msra.mxu0 0.0
    %645 = vmatprep.subr.mxu0 0.0
    %646 = vmatpush1.xpose.msra.mxu0 0.0
    %647 = vmatprep.subr.mxu0 0.0
    %648 = vmatpush1.xpose.msra.mxu0 0.0
    %649 = vmatprep.subr.mxu0 0.0
    %650 = vmatpush1.xpose.msra.mxu0 0.0
    %651 = vmatprep.subr.mxu0 0.0
    %652 = vmatpush1.xpose.msra.mxu0 0.0
    %653 = vmatprep.subr.mxu0 0.0
    %654 = vmatpush1.xpose.msra.mxu0 0.0
    %655 = vmatprep.subr.mxu0 0.0
    %656 = vmatpush1.xpose.msra.mxu0 0.0
    %657 = vmatprep.subr.mxu0 0.0
    %658 = vmatpush1.xpose.msra.mxu0 0.0
    %659 = vmatprep.subr.mxu0 0.0
    %660 = vmatpush1.xpose.msra.mxu0 0.0
    %661 = vmatprep.subr.mxu0 0.0
    %662 = vmatpush1.xpose.msra.mxu0 %v631
    %663 = vmatprep.subr.mxu0 0.0
    %664 = vmatpush1.xpose.msra.mxu0 %v629
    %665 = vmatprep.subr.mxu0 0.0
    %666 = vmatpush2.xpose.msra.mxu0 0.0
    %667 = vmatprep.subr.mxu0 0.0
    %668 = vmatpush2.xpose.msra.mxu0 0.0
    %669 = vmatprep.subr.mxu0 0.0
    %670 = vmatpush2.xpose.msra.mxu0 0.0
    %671 = vmatprep.subr.mxu0 0.0
    %672 = vmatpush2.xpose.msra.mxu0 0.0
    %673 = vmatprep.subr.mxu0 0.0
    %674 = vmatpush2.xpose.msra.mxu0 0.0
    %675 = vmatprep.subr.mxu0 0.0
    %676 = vmatpush2.xpose.msra.mxu0 0.0
    %677 = vmatprep.subr.mxu0 0.0
    %678 = vmatpush2.xpose.msra.mxu0 0.0
    %679 = vmatprep.subr.mxu0 0.0
    %680 = vmatpush2.xpose.msra.mxu0 0.0
    %681 = vmatprep.subr.mxu0 0.0
    %682 = vmatpush2.xpose.msra.mxu0 0.0
    %683 = vmatprep.subr.mxu0 0.0
    %684 = vmatpush2.xpose.msra.mxu0 0.0
    %685 = vmatprep.subr.mxu0 0.0
    %686 = vmatpush2.xpose.msra.mxu0 0.0
    %687 = vmatprep.subr.mxu0 0.0
    %688 = vmatpush2.xpose.msra.mxu0 0.0
    %689 = vmatprep.subr.mxu0 0.0
    %690 = vmatpush2.xpose.msra.mxu0 0.0
    %691 = vmatprep.subr.mxu0 0.0
    %692 = vmatpush2.xpose.msra.mxu0 0.0
    %693 = vmatprep.subr.mxu0 0.0
    %694 = vmatpush2.xpose.msra.mxu0 0.0
    %695 = vmatprep.subr.mxu0 0.0
    %696 = vmatpush2.xpose.msra.mxu0 0.0
    %697 = vmatprep.mubr.f32.mxu0 0.0
    %698 = vmatmul.mubr.f32.gmra.mxu0 %v625
    %v699 = vpop.f32.mrf.mxu0
    %v700 = vadd.f32 0.0, %v699
    %v701 = vpop.f32.mrf.mxu0
    %702 = vmatprep.mubr.f32.mxu0 0.0
    %703 = vmatmul.mubr.f32.gmra.mxu0 %v627
    %v704 = vpop.f32.mrf.mxu0
    %v705 = vadd.f32 0.0, %v704
    %v706 = vpop.f32.mrf.mxu0
    %707 = vdwg.mxu0
    %v708 = vld [vmem:[#allocation2] sm:$0xff]
    %v709 = vld [vmem:[#allocation2 + $0x8] sm:$0xff]
    %710 = vmatprep.subr.mxu0 0.0
    %711 = vmatpush1.msra.mxu0 0.0
    %712 = vmatprep.subr.mxu0 0.0
    %713 = vmatpush1.msra.mxu0 0.0
    %714 = vmatprep.subr.mxu0 0.0
    %715 = vmatpush1.msra.mxu0 0.0
    %716 = vmatprep.subr.mxu0 0.0
    %717 = vmatpush1.msra.mxu0 0.0
    %718 = vmatprep.subr.mxu0 0.0
    %719 = vmatpush1.msra.mxu0 0.0
    %720 = vmatprep.subr.mxu0 0.0
    %721 = vmatpush1.msra.mxu0 0.0
    %722 = vmatprep.subr.mxu0 0.0
    %723 = vmatpush1.msra.mxu0 0.0
    %724 = vmatprep.subr.mxu0 0.0
    %725 = vmatpush1.msra.mxu0 0.0
    %726 = vmatprep.subr.mxu0 0.0
    %727 = vmatpush1.msra.mxu0 0.0
    %728 = vmatprep.subr.mxu0 0.0
    %729 = vmatpush1.msra.mxu0 0.0
    %730 = vmatprep.subr.mxu0 0.0
    %731 = vmatpush1.msra.mxu0 0.0
    %732 = vmatprep.subr.mxu0 0.0
    %733 = vmatpush1.msra.mxu0 0.0
    %734 = vmatprep.subr.mxu0 0.0
    %735 = vmatpush1.msra.mxu0 0.0
    %736 = vmatprep.subr.mxu0 0.0
    %737 = vmatpush1.msra.mxu0 0.0
    %738 = vmatprep.subr.mxu0 0.0
    %739 = vmatpush1.msra.mxu0 %v709
    %740 = vmatprep.subr.mxu0 0.0
    %741 = vmatpush1.msra.mxu0 %v708
    %742 = vmatprep.subr.mxu0 0.0
    %743 = vmatpush2.msra.mxu0 0.0
    %744 = vmatprep.subr.mxu0 0.0
    %745 = vmatpush2.msra.mxu0 0.0
    %746 = vmatprep.subr.mxu0 0.0
    %747 = vmatpush2.msra.mxu0 0.0
    %748 = vmatprep.subr.mxu0 0.0
    %749 = vmatpush2.msra.mxu0 0.0
    %750 = vmatprep.subr.mxu0 0.0
    %751 = vmatpush2.msra.mxu0 0.0
    %752 = vmatprep.subr.mxu0 0.0
    %753 = vmatpush2.msra.mxu0 0.0
    %754 = vmatprep.subr.mxu0 0.0
    %755 = vmatpush2.msra.mxu0 0.0
    %756 = vmatprep.subr.mxu0 0.0
    %757 = vmatpush2.msra.mxu0 0.0
    %758 = vmatprep.subr.mxu0 0.0
    %759 = vmatpush2.msra.mxu0 0.0
    %760 = vmatprep.subr.mxu0 0.0
    %761 = vmatpush2.msra.mxu0 0.0
    %762 = vmatprep.subr.mxu0 0.0
    %763 = vmatpush2.msra.mxu0 0.0
    %764 = vmatprep.subr.mxu0 0.0
    %765 = vmatpush2.msra.mxu0 0.0
    %766 = vmatprep.subr.mxu0 0.0
    %767 = vmatpush2.msra.mxu0 0.0
    %768 = vmatprep.subr.mxu0 0.0
    %769 = vmatpush2.msra.mxu0 0.0
    %770 = vmatprep.subr.mxu0 0.0
    %771 = vmatpush2.msra.mxu0 0.0
    %772 = vmatprep.subr.mxu0 0.0
    %773 = vmatpush2.msra.mxu0 0.0
    %774 = vmatprep.mubr.f32.mxu0 0.0
    %775 = vmatmul.mubr.f32.gmra.mxu0 %v625
    %v776 = vpop.f32.mrf.mxu0
    %v777 = vadd.f32 0.0, %v776
    %v778 = vpop.f32.mrf.mxu0
    %779 = vmatprep.mubr.f32.mxu0 0.0
    %780 = vmatmul.mubr.f32.gmra.mxu0 %v627
    %v781 = vpop.f32.mrf.mxu0
    %v782 = vadd.f32 0.0, %v781
    %v783 = vpop.f32.mrf.mxu0
    %784 = vdwg.mxu0
    %786 = vset.pattern.permute.xlu0 32
    %787 = vperm.xlu0 %786, %v270
    %v788 = vpop.permute.xlu0 %787
    %791 = vset.pattern.permute.xlu0 32
    %792 = vperm.xlu0 %791, %v271
    %v793 = vpop.permute.xlu0 %792
    %795 = vset.pattern.permute.xlu0 33
    %796 = vperm.xlu0 %795, %v270
    %v797 = vpop.permute.xlu0 %796
    %799 = vset.pattern.permute.xlu0 33
    %800 = vperm.xlu0 %799, %v271
    %v801 = vpop.permute.xlu0 %800
    %v803 = vsel %vm144, %v788, %v797
    %v804 = vsel %vm144, %v793, %v801
    %v805 = vmul.f32 %v803, %v398
    %v806 = vmul.f32 %v804, %v399
    %809 = vrot.lane.b32.xlu0 %v502, 32
    %v810 = vpop.permute.xlu0 %809
    %811 = vrot.lane.b32.xlu0 %v507, 32
    %v812 = vpop.permute.xlu0 %811
    %v815 = vsub.f32 %v419, %v810
    %v816 = vsub.f32 %v419, %v812
    %v817 = vmul.f32 %v502, 1.442695
    %v818 = vpow.pop %v817
    %v819 = vmul.f32 %v507, 1.442695
    %v820 = vpow.pop %v819
    %822 = vset.pattern.permute.xlu0 0
    %823 = vperm.xlu0 %822, %v818
    %v824 = vpop.permute.xlu0 %823
    %827 = vset.pattern.permute.xlu0 0
    %828 = vperm.xlu0 %827, %v820
    %v829 = vpop.permute.xlu0 %828
    %831 = vset.pattern.permute.xlu0 1
    %832 = vperm.xlu0 %831, %v818
    %v833 = vpop.permute.xlu0 %832
    %835 = vset.pattern.permute.xlu0 1
    %836 = vperm.xlu0 %835, %v820
    %v837 = vpop.permute.xlu0 %836
    %v839 = vsel %vm144, %v824, %v833
    %v840 = vsel %vm144, %v829, %v837
    %v841 = vmul.f32 %v815, 1.442695
    %v842 = vpow.pop %v841
    %v843 = vmul.f32 %v816, 1.442695
    %v844 = vpow.pop %v843
    %846 = vset.pattern.permute.xlu0 32
    %847 = vperm.xlu0 %846, %v842
    %v848 = vpop.permute.xlu0 %847
    %851 = vset.pattern.permute.xlu0 32
    %852 = vperm.xlu0 %851, %v844
    %v853 = vpop.permute.xlu0 %852
    %855 = vset.pattern.permute.xlu0 33
    %856 = vperm.xlu0 %855, %v842
    %v857 = vpop.permute.xlu0 %856
    %859 = vset.pattern.permute.xlu0 33
    %860 = vperm.xlu0 %859, %v844
    %v861 = vpop.permute.xlu0 %860
    %v863 = vsel %vm144, %v848, %v857
    %v864 = vsel %vm144, %v853, %v861
    %v865 = vmul.f32 %v419, 1.442695
    %v866 = vpow.pop %v865
    %868 = vset.pattern.permute.xlu0 32
    %869 = vperm.xlu0 %868, %v866
    %v870 = vpop.permute.xlu0 %869
    %872 = vset.pattern.permute.xlu0 33
    %873 = vperm.xlu0 %872, %v866
    %v874 = vpop.permute.xlu0 %873
    %v876 = vsel %vm144, %v870, %v874
    %877 = vset.pattern.permute.xlu0 0
    %878 = vperm.xlu0 %877, %v502
    %v879 = vpop.permute.xlu0 %878
    %881 = vset.pattern.permute.xlu0 0
    %882 = vperm.xlu0 %881, %v507
    %v883 = vpop.permute.xlu0 %882
    %v885 = vlaneseq
    %v886 = vshrl.u32 %v885, 7
    %v887 = vsub.s32 0, %v886
    %v888 = vrot.slane %v612, %v887
    %v889 = vsub.f32 %v879, %v888
    %v890 = vsub.f32 %v883, %v888
    %v891 = vsel %vm112, %v889, -1e+30
    %v892 = vsel %vm113, %v890, -1e+30
    %v893 = vmul.f32 %v891, 1.442695
    %v894 = vpow.pop %v893
    %v895 = vmul.f32 %v892, 1.442695
    %v896 = vpow.pop %v895
    %v897 = vmul.f32 %v700, %v894
    %v898 = vmul.f32 %v705, %v896
    %v900 = vsel %vm428, %v897, 0
    %v903 = vsel %vm428, %v898, 0
    %905 = vmatprep.subr.mxu0 0.0
    %906 = vmatpush1.msra.mxu0 0.0
    %907 = vmatprep.subr.mxu0 0.0
    %908 = vmatpush1.msra.mxu0 0.0
    %909 = vmatprep.subr.mxu0 0.0
    %910 = vmatpush1.msra.mxu0 0.0
    %911 = vmatprep.subr.mxu0 0.0
    %912 = vmatpush1.msra.mxu0 0.0
    %913 = vmatprep.subr.mxu0 0.0
    %914 = vmatpush1.msra.mxu0 0.0
    %915 = vmatprep.subr.mxu0 0.0
    %916 = vmatpush1.msra.mxu0 0.0
    %917 = vmatprep.subr.mxu0 0.0
    %918 = vmatpush1.msra.mxu0 0.0
    %919 = vmatprep.subr.mxu0 0.0
    %920 = vmatpush1.msra.mxu0 0.0
    %921 = vmatprep.subr.mxu0 0.0
    %922 = vmatpush1.msra.mxu0 0.0
    %923 = vmatprep.subr.mxu0 0.0
    %924 = vmatpush1.msra.mxu0 0.0
    %925 = vmatprep.subr.mxu0 0.0
    %926 = vmatpush1.msra.mxu0 0.0
    %927 = vmatprep.subr.mxu0 0.0
    %928 = vmatpush1.msra.mxu0 0.0
    %929 = vmatprep.subr.mxu0 0.0
    %930 = vmatpush1.msra.mxu0 0.0
    %931 = vmatprep.subr.mxu0 0.0
    %932 = vmatpush1.msra.mxu0 0.0
    %933 = vmatprep.subr.mxu0 0.0
    %934 = vmatpush1.msra.mxu0 %v806
    %935 = vmatprep.subr.mxu0 0.0
    %936 = vmatpush1.msra.mxu0 %v805
    %937 = vmatprep.subr.mxu0 0.0
    %938 = vmatpush2.msra.mxu0 0.0
    %939 = vmatprep.subr.mxu0 0.0
    %940 = vmatpush2.msra.mxu0 0.0
    %941 = vmatprep.subr.mxu0 0.0
    %942 = vmatpush2.msra.mxu0 0.0
    %943 = vmatprep.subr.mxu0 0.0
    %944 = vmatpush2.msra.mxu0 0.0
    %945 = vmatprep.subr.mxu0 0.0
    %946 = vmatpush2.msra.mxu0 0.0
    %947 = vmatprep.subr.mxu0 0.0
    %948 = vmatpush2.msra.mxu0 0.0
    %949 = vmatprep.subr.mxu0 0.0
    %950 = vmatpush2.msra.mxu0 0.0
    %951 = vmatprep.subr.mxu0 0.0
    %952 = vmatpush2.msra.mxu0 0.0
    %953 = vmatprep.subr.mxu0 0.0
    %954 = vmatpush2.msra.mxu0 0.0
    %955 = vmatprep.subr.mxu0 0.0
    %956 = vmatpush2.msra.mxu0 0.0
    %957 = vmatprep.subr.mxu0 0.0
    %958 = vmatpush2.msra.mxu0 0.0
    %959 = vmatprep.subr.mxu0 0.0
    %960 = vmatpush2.msra.mxu0 0.0
    %961 = vmatprep.subr.mxu0 0.0
    %962 = vmatpush2.msra.mxu0 0.0
    %963 = vmatprep.subr.mxu0 0.0
    %964 = vmatpush2.msra.mxu0 0.0
    %965 = vmatprep.subr.mxu0 0.0
    %966 = vmatpush2.msra.mxu0 0.0
    %967 = vmatprep.subr.mxu0 0.0
    %968 = vmatpush2.msra.mxu0 0.0
    %969 = vmatprep.mubr.f32.mxu0 0.0
    %970 = vmatmul.mubr.f32.gmra.mxu0 %v900
    %v971 = vpop.f32.mrf.mxu0
    %v972 = vadd.f32 0.0, %v971
    %v973 = vpop.f32.mrf.mxu0
    %974 = vmatprep.mubr.f32.mxu0 0.0
    %975 = vmatmul.mubr.f32.gmra.mxu0 %v903
    %v976 = vpop.f32.mrf.mxu0
    %v977 = vadd.f32 0.0, %v976
    %v978 = vpop.f32.mrf.mxu0
    %979 = vdwg.mxu0
    %980 = vset.pattern.permute.xlu0 1
    %981 = vperm.xlu0 %980, %v502
    %v982 = vpop.permute.xlu0 %981
    %984 = vset.pattern.permute.xlu0 1
    %985 = vperm.xlu0 %984, %v507
    %v986 = vpop.permute.xlu0 %985
    %v988 = vlaneseq
    %v989 = vshrl.u32 %v988, 7
    %v990 = vsub.s32 1, %v989
    %v991 = vrot.slane %v612, %v990
    %v992 = vsub.f32 %v982, %v991
    %v993 = vsub.f32 %v986, %v991
    %v994 = vsel %vm112, %v992, -1e+30
    %v995 = vsel %vm113, %v993, -1e+30
    %v996 = vmul.f32 %v994, 1.442695
    %v997 = vpow.pop %v996
    %v998 = vmul.f32 %v995, 1.442695
    %v999 = vpow.pop %v998
    %v1000 = vmul.f32 %v700, %v997
    %v1001 = vmul.f32 %v705, %v999
    %1004 = vrot.lane.b32.xlu0 %v805, 96
    %v1005 = vpop.permute.xlu0 %1004
    %1006 = vrot.lane.b32.xlu0 %v806, 96
    %v1007 = vpop.permute.xlu0 %1006
    %v1011 = vsel %vm428, %v1000, 0
    %v1014 = vsel %vm428, %v1001, 0
    %1016 = vmatprep.subr.mxu0 0.0
    %1017 = vmatpush1.msra.mxu0 0.0
    %1018 = vmatprep.subr.mxu0 0.0
    %1019 = vmatpush1.msra.mxu0 0.0
    %1020 = vmatprep.subr.mxu0 0.0
    %1021 = vmatpush1.msra.mxu0 0.0
    %1022 = vmatprep.subr.mxu0 0.0
    %1023 = vmatpush1.msra.mxu0 0.0
    %1024 = vmatprep.subr.mxu0 0.0
    %1025 = vmatpush1.msra.mxu0 0.0
    %1026 = vmatprep.subr.mxu0 0.0
    %1027 = vmatpush1.msra.mxu0 0.0
    %1028 = vmatprep.subr.mxu0 0.0
    %1029 = vmatpush1.msra.mxu0 0.0
    %1030 = vmatprep.subr.mxu0 0.0
    %1031 = vmatpush1.msra.mxu0 0.0
    %1032 = vmatprep.subr.mxu0 0.0
    %1033 = vmatpush1.msra.mxu0 0.0
    %1034 = vmatprep.subr.mxu0 0.0
    %1035 = vmatpush1.msra.mxu0 0.0
    %1036 = vmatprep.subr.mxu0 0.0
    %1037 = vmatpush1.msra.mxu0 0.0
    %1038 = vmatprep.subr.mxu0 0.0
    %1039 = vmatpush1.msra.mxu0 0.0
    %1040 = vmatprep.subr.mxu0 0.0
    %1041 = vmatpush1.msra.mxu0 0.0
    %1042 = vmatprep.subr.mxu0 0.0
    %1043 = vmatpush1.msra.mxu0 0.0
    %1044 = vmatprep.subr.mxu0 0.0
    %1045 = vmatpush1.msra.mxu0 %v1007
    %1046 = vmatprep.subr.mxu0 0.0
    %1047 = vmatpush1.msra.mxu0 %v1005
    %1048 = vmatprep.subr.mxu0 0.0
    %1049 = vmatpush2.msra.mxu0 0.0
    %1050 = vmatprep.subr.mxu0 0.0
    %1051 = vmatpush2.msra.mxu0 0.0
    %1052 = vmatprep.subr.mxu0 0.0
    %1053 = vmatpush2.msra.mxu0 0.0
    %1054 = vmatprep.subr.mxu0 0.0
    %1055 = vmatpush2.msra.mxu0 0.0
    %1056 = vmatprep.subr.mxu0 0.0
    %1057 = vmatpush2.msra.mxu0 0.0
    %1058 = vmatprep.subr.mxu0 0.0
    %1059 = vmatpush2.msra.mxu0 0.0
    %1060 = vmatprep.subr.mxu0 0.0
    %1061 = vmatpush2.msra.mxu0 0.0
    %1062 = vmatprep.subr.mxu0 0.0
    %1063 = vmatpush2.msra.mxu0 0.0
    %1064 = vmatprep.subr.mxu0 0.0
    %1065 = vmatpush2.msra.mxu0 0.0
    %1066 = vmatprep.subr.mxu0 0.0
    %1067 = vmatpush2.msra.mxu0 0.0
    %1068 = vmatprep.subr.mxu0 0.0
    %1069 = vmatpush2.msra.mxu0 0.0
    %1070 = vmatprep.subr.mxu0 0.0
    %1071 = vmatpush2.msra.mxu0 0.0
    %1072 = vmatprep.subr.mxu0 0.0
    %1073 = vmatpush2.msra.mxu0 0.0
    %1074 = vmatprep.subr.mxu0 0.0
    %1075 = vmatpush2.msra.mxu0 0.0
    %1076 = vmatprep.subr.mxu0 0.0
    %1077 = vmatpush2.msra.mxu0 0.0
    %1078 = vmatprep.subr.mxu0 0.0
    %1079 = vmatpush2.msra.mxu0 0.0
    %1080 = vmatprep.mubr.f32.mxu0 0.0
    %1081 = vmatmul.mubr.f32.gmra.mxu0 %v1011
    %v1082 = vpop.f32.mrf.mxu0
    %v1083 = vadd.f32 0.0, %v1082
    %v1084 = vpop.f32.mrf.mxu0
    %1085 = vmatprep.mubr.f32.mxu0 0.0
    %1086 = vmatmul.mubr.f32.gmra.mxu0 %v1014
    %v1087 = vpop.f32.mrf.mxu0
    %v1088 = vadd.f32 0.0, %v1087
    %v1089 = vpop.f32.mrf.mxu0
    %1090 = vdwg.mxu0
    %1093 = vrot.lane.b32.xlu0 %v1083, 32
    %v1094 = vpop.permute.xlu0 %1093
    %1095 = vrot.lane.b32.xlu0 %v1088, 32
    %v1096 = vpop.permute.xlu0 %1095
    %v1099 = vsel %vm144, %v972, %v1094
    %v1100 = vsel %vm144, %v977, %v1096
    %v1101 = vmul.f32 %v839, %v777
    %v1102 = vmul.f32 %v840, %v782
    %v1103 = vadd.f32 %v1099, %v1101
    %v1104 = vadd.f32 %v1100, %v1102
    %v1105 = vlaneseq
    %v1106 = vshrl.u32 %v1105, 7
    %v1107 = vsub.s32 0, %v1106
    %v1108 = vrot.slane %v876, %v1107
    %v1109 = vmul.f32 %v1108, %v708
    %v1110 = vmul.f32 %v1108, %v709
    %v1111 = vmul.f32 %v863, %v805
    %v1112 = vmul.f32 %v864, %v806
    %1115 = vxpose.xlu0.b32.start [1/16] %v622, 128
    %1116 = vxpose.xlu0.b32.cont [2/16] %v624, 128
    %1117 = vxpose.xlu0.b32.cont [3/16] 0.0, 128
    %1118 = vxpose.xlu0.b32.cont [4/16] 0.0, 128
    %1119 = vxpose.xlu0.b32.cont [5/16] 0.0, 128
    %1120 = vxpose.xlu0.b32.cont [6/16] 0.0, 128
    %1121 = vxpose.xlu0.b32.cont [7/16] 0.0, 128
    %1122 = vxpose.xlu0.b32.cont [8/16] 0.0, 128
    %1123 = vxpose.xlu0.b32.cont [9/16] 0.0, 128
    %1124 = vxpose.xlu0.b32.cont [10/16] 0.0, 128
    %1125 = vxpose.xlu0.b32.cont [11/16] 0.0, 128
    %1126 = vxpose.xlu0.b32.cont [12/16] 0.0, 128
    %1127 = vxpose.xlu0.b32.cont [13/16] 0.0, 128
    %1128 = vxpose.xlu0.b32.cont [14/16] 0.0, 128
    %1129 = vxpose.xlu0.b32.cont [15/16] 0.0, 128
    %1130 = vxpose.xlu0.b32.end [16/16] 0.0, 128
    %v1131 = vpop.trf.xlu0
    %v1132 = vpop.trf.xlu0
    %v1133 = vpop.trf.xlu0
    %v1134 = vpop.trf.xlu0
    %v1135 = vpop.trf.xlu0
    %v1136 = vpop.trf.xlu0
    %v1137 = vpop.trf.xlu0
    %v1138 = vpop.trf.xlu0
    %v1139 = vpop.trf.xlu0
    %v1140 = vpop.trf.xlu0
    %v1141 = vpop.trf.xlu0
    %v1142 = vpop.trf.xlu0
    %v1143 = vpop.trf.xlu0
    %v1144 = vpop.trf.xlu0
    %v1145 = vpop.trf.xlu0
    %v1146 = vpop.trf.xlu0
    %v1148 = vsel %vm428, %v1131, 0
    %v1151 = vsel %vm428, %v1132, 0
    %1153 = vmatprep.subr.mxu0 0.0
    %1154 = vmatpush1.msra.mxu0 0.0
    %1155 = vmatprep.subr.mxu0 0.0
    %1156 = vmatpush1.msra.mxu0 0.0
    %1157 = vmatprep.subr.mxu0 0.0
    %1158 = vmatpush1.msra.mxu0 0.0
    %1159 = vmatprep.subr.mxu0 0.0
    %1160 = vmatpush1.msra.mxu0 0.0
    %1161 = vmatprep.subr.mxu0 0.0
    %1162 = vmatpush1.msra.mxu0 0.0
    %1163 = vmatprep.subr.mxu0 0.0
    %1164 = vmatpush1.msra.mxu0 0.0
    %1165 = vmatprep.subr.mxu0 0.0
    %1166 = vmatpush1.msra.mxu0 0.0
    %1167 = vmatprep.subr.mxu0 0.0
    %1168 = vmatpush1.msra.mxu0 0.0
    %1169 = vmatprep.subr.mxu0 0.0
    %1170 = vmatpush1.msra.mxu0 0.0
    %1171 = vmatprep.subr.mxu0 0.0
    %1172 = vmatpush1.msra.mxu0 0.0
    %1173 = vmatprep.subr.mxu0 0.0
    %1174 = vmatpush1.msra.mxu0 0.0
    %1175 = vmatprep.subr.mxu0 0.0
    %1176 = vmatpush1.msra.mxu0 0.0
    %1177 = vmatprep.subr.mxu0 0.0
    %1178 = vmatpush1.msra.mxu0 0.0
    %1179 = vmatprep.subr.mxu0 0.0
    %1180 = vmatpush1.msra.mxu0 0.0
    %1181 = vmatprep.subr.mxu0 0.0
    %1182 = vmatpush1.msra.mxu0 %v1112
    %1183 = vmatprep.subr.mxu0 0.0
    %1184 = vmatpush1.msra.mxu0 %v1111
    %1185 = vmatprep.subr.mxu0 0.0
    %1186 = vmatpush2.msra.mxu0 0.0
    %1187 = vmatprep.subr.mxu0 0.0
    %1188 = vmatpush2.msra.mxu0 0.0
    %1189 = vmatprep.subr.mxu0 0.0
    %1190 = vmatpush2.msra.mxu0 0.0
    %1191 = vmatprep.subr.mxu0 0.0
    %1192 = vmatpush2.msra.mxu0 0.0
    %1193 = vmatprep.subr.mxu0 0.0
    %1194 = vmatpush2.msra.mxu0 0.0
    %1195 = vmatprep.subr.mxu0 0.0
    %1196 = vmatpush2.msra.mxu0 0.0
    %1197 = vmatprep.subr.mxu0 0.0
    %1198 = vmatpush2.msra.mxu0 0.0
    %1199 = vmatprep.subr.mxu0 0.0
    %1200 = vmatpush2.msra.mxu0 0.0
    %1201 = vmatprep.subr.mxu0 0.0
    %1202 = vmatpush2.msra.mxu0 0.0
    %1203 = vmatprep.subr.mxu0 0.0
    %1204 = vmatpush2.msra.mxu0 0.0
    %1205 = vmatprep.subr.mxu0 0.0
    %1206 = vmatpush2.msra.mxu0 0.0
    %1207 = vmatprep.subr.mxu0 0.0
    %1208 = vmatpush2.msra.mxu0 0.0
    %1209 = vmatprep.subr.mxu0 0.0
    %1210 = vmatpush2.msra.mxu0 0.0
    %1211 = vmatprep.subr.mxu0 0.0
    %1212 = vmatpush2.msra.mxu0 0.0
    %1213 = vmatprep.subr.mxu0 0.0
    %1214 = vmatpush2.msra.mxu0 0.0
    %1215 = vmatprep.subr.mxu0 0.0
    %1216 = vmatpush2.msra.mxu0 0.0
    %1217 = vmatprep.mubr.f32.mxu0 0.0
    %1218 = vmatmul.mubr.f32.gmra.mxu0 %v1148
    %v1219 = vpop.f32.mrf.mxu0
    %v1220 = vadd.f32 0.0, %v1219
    %v1221 = vpop.f32.mrf.mxu0
    %1222 = vmatprep.mubr.f32.mxu0 0.0
    %1223 = vmatmul.mubr.f32.gmra.mxu0 %v1151
    %v1224 = vpop.f32.mrf.mxu0
    %v1225 = vadd.f32 0.0, %v1224
    %v1226 = vpop.f32.mrf.mxu0
    %1227 = vdwg.mxu0
    %v1228 = vadd.f32 %v1109, %v1220
    %v1229 = vadd.f32 %v1110, %v1225
    %1230 = vst.msk [vmem:[#allocation2] sm:$0xff] %vm302, %v1228
    %1231 = vst.msk [vmem:[#allocation2 + $0x8] sm:$0xff] %vm302, %v1229
    %v1233 = vlaneseq
    %v1234 = vshrl.u32 %v1233, 7
    %v1235 = vsub.s32 0, %v1234
    %v1236 = vrot.slane %v137, %v1235
    %v1238 = vmul.f32 %v1236, %v398
    %v1239 = vmul.f32 %v1236, %v399
    %v1240 = vadd.f32 %v1103, %v1238
    %v1241 = vadd.f32 %v1104, %v1239
    %v1242 = vsub.f32 0.0, %v224
    %v1243 = vsub.f32 0.0, %v230
    %v1244 = vmul.f32 %v1242, 1.442695
    %v1245 = vpow.pop %v1244
    %v1246 = vmul.f32 %v1243, 1.442695
    %v1247 = vpow.pop %v1246
    %v1248 = vadd.f32 %v1245, 1.0
    %v1249 = vadd.f32 %v1247, 1.0
    %v1250 = vrcp.pop %v1248
    %v1251 = vmul.f32 1.0, %v1250
    %v1252 = vrcp.pop %v1249
    %v1253 = vmul.f32 1.0, %v1252
    %v1254 = vmul.f32 %v224, %v1251
    %v1255 = vmul.f32 %v230, %v1253
    %v1256 = vmul.f32 %v1240, %v1254
    %v1257 = vmul.f32 %v1241, %v1255
    %v1258 = vmul.f32 %v1256, %v1256
    %v1259 = vmul.f32 %v1257, %v1257
    %v1260 = vsel %vm302, %v1258, 0.0
    %1261 = vadd.xlane.f32.xlu0 %v1260
    %v1262 = vpop.xlane.xlu0 %1261
    %v1263 = vsel %vm302, %v1259, 0.0
    %1264 = vadd.xlane.f32.xlu0 %v1263
    %v1265 = vpop.xlane.xlu0 %1264
    %v1266 = vrcp.pop 64.0
    %v1267 = vmul.f32 %v1262, %v1266
    %v1268 = vmul.f32 %v1265, %v1266
    %v1269 = vadd.f32 %v1267, 1e-05
    %v1270 = vadd.f32 %v1268, 1e-05
    %v1271 = vrsqrt.pop %v1269
    %v1272 = vrsqrt.pop %v1270
    %v1273 = vmul.f32 %v1256, %v1271
    %v1274 = vmul.f32 %v1257, %v1272
    %v1276 = vlaneseq
    %v1277 = vshrl.u32 %v1276, 7
    %v1278 = vsub.s32 0, %v1277
    %v1279 = vrot.slane %v138, %v1278
    %v1281 = vmul.f32 %v1273, %v1279
    %v1282 = vmul.f32 %v1274, %v1279
    %v1283 = vadd.f32 %v238, %v252
    %v1284 = vadd.f32 %v244, %v252
    %vm1285 = vcmp.gt.f32.partialorder %v1283, 20.0
    %vm1286 = vcmp.gt.f32.partialorder %v1284, 20.0
    %v1287 = vmin.f32 %v1283, 20.0
    %v1288 = vmin.f32 %v1284, 20.0
    %v1289 = vmul.f32 %v1287, 1.442695
    %v1290 = vpow.pop %v1289
    %v1291 = vmul.f32 %v1288, 1.442695
    %v1292 = vpow.pop %v1291
    %v1293 = vadd.f32 %v1290, 1.0
    %v1294 = vadd.f32 %v1292, 1.0
    %v1295 = vlog2.pop %v1293
    %v1296 = vmul.f32 %v1295, 0.6931472
    %v1297 = vlog2.pop %v1294
    %v1298 = vmul.f32 %v1297, 0.6931472
    %v1299 = vsel %vm1285, %v1283, %v1296
    %v1300 = vsel %vm1286, %v1284, %v1298
    %s1301 = scalar_lea.vmem [#allocation3], 4
    %v1302 = vld [vmem:[%s1301] sm:$0x7]
    %v1307 = vrot.slane %v236, 5
    %v1308 = vrot.slane %v238, 5
    %v1309 = vrot.slane %v242, 5
    %v1310 = vsel %vm283, %v1307, %v1309
    %v1311 = vrot.slane %v244, 5
    %v1312 = vsel %vm283, %v1308, %v1311
    %1313 = vrot.lane.b32.xlu0 %v1307, 64
    %v1314 = vpop.permute.xlu0 %1313
    %1315 = vrot.lane.b32.xlu0 %v1308, 64
    %v1316 = vpop.permute.xlu0 %1315
    %1317 = vrot.lane.b32.xlu0 %v1310, 64
    %v1318 = vpop.permute.xlu0 %1317
    %1319 = vrot.lane.b32.xlu0 %v1312, 64
    %v1320 = vpop.permute.xlu0 %1319
    %1321 = vrot.lane.b32.xlu0 %v1309, 64
    %v1322 = vpop.permute.xlu0 %1321
    %1323 = vrot.lane.b32.xlu0 %v1311, 64
    %v1324 = vpop.permute.xlu0 %1323
    %v1325 = vsel %vm302, %v1314, %v1316
    %v1326 = vsel %vm302, %v1318, %v1320
    %v1327 = vsel %vm302, %v1322, %v1324
    %v1331 = vsel %vm283, %v1302, %v1325
    %v1332 = vmul.f32 %v313, %v1331
    %v1333 = vmul.f32 %v313, %v1326
    %v1334 = vadd.f32 %v277, %v1332
    %v1335 = vadd.f32 %v277, %v1333
    %v1336 = vmul.f32 %v321, %v1331
    %v1337 = vmul.f32 %v321, %v1326
    %v1338 = vmul.f32 %v321, %v1327
    %v1342 = vrot.slane %v1336, 1
    %v1343 = vrot.slane %v1337, 1
    %v1344 = vsel %vm328, %v1342, %v1343
    %v1345 = vrot.slane %v1338, 1
    %v1346 = vsel %vm328, %v1343, %v1345
    %v1349 = vadd.f32 %v1334, %v1344
    %v1350 = vadd.f32 %v1335, %v1346
    %v1351 = vmul.f32 %v341, %v1331
    %v1352 = vmul.f32 %v341, %v1326
    %v1353 = vmul.f32 %v341, %v1327
    %v1357 = vrot.slane %v1351, 2
    %v1358 = vrot.slane %v1352, 2
    %v1359 = vsel %vm348, %v1357, %v1358
    %v1360 = vrot.slane %v1353, 2
    %v1361 = vsel %vm348, %v1358, %v1360
    %v1364 = vadd.f32 %v1349, %v1359
    %v1365 = vadd.f32 %v1350, %v1361
    %v1366 = vmul.f32 %v361, %v1331
    %v1367 = vmul.f32 %v361, %v1326
    %v1368 = vmul.f32 %v361, %v1327
    %v1372 = vrot.slane %v1366, 3
    %v1373 = vrot.slane %v1367, 3
    %v1374 = vsel %vm368, %v1372, %v1373
    %v1375 = vrot.slane %v1368, 3
    %v1376 = vsel %vm368, %v1373, %v1375
    %v1379 = vadd.f32 %v1364, %v1374
    %v1380 = vadd.f32 %v1365, %v1376
    %1381 = vrot.lane.b32.xlu0 %v242, 64
    %v1382 = vpop.permute.xlu0 %1381
    %1383 = vrot.lane.b32.xlu0 %v244, 64
    %v1384 = vpop.permute.xlu0 %1383
    %v1385 = vsel %vm302, %v1382, %v1384
    %1387 = vst.msk [vmem:[%s1301 - $0x5] sm:$0xe0] %vm384, %v1385
    %v1388 = vsub.f32 0.0, %v1379
    %v1389 = vsub.f32 0.0, %v1380
    %v1390 = vmul.f32 %v1388, 1.442695
    %v1391 = vpow.pop %v1390
    %v1392 = vmul.f32 %v1389, 1.442695
    %v1393 = vpow.pop %v1392
    %v1394 = vadd.f32 %v1391, 1.0
    %v1395 = vadd.f32 %v1393, 1.0
    %v1396 = vrcp.pop %v1394
    %v1397 = vmul.f32 1.0, %v1396
    %v1398 = vrcp.pop %v1395
    %v1399 = vmul.f32 1.0, %v1398
    %v1400 = vmul.f32 %v1379, %v1397
    %v1401 = vmul.f32 %v1380, %v1399
    %v1402 = vmul.f32 %v1299, %v406
    %v1403 = vmul.f32 %v1300, %v406
    %v1404 = vsel %vm410, %v1402, 0.0
    %v1405 = vsel %vm410, %v1403, 0.0
    %v1406 = vadd.f32 %v1404, %v1405
    %v1407 = vrot.slane %v1406, 4
    %v1408 = vadd.f32 %v1406, %v1407
    %v1409 = vrot.slane %v1408, 2
    %v1410 = vadd.f32 %v1408, %v1409
    %v1411 = vrot.slane %v1410, 1
    %v1412 = vadd.f32 %v1410, %v1411
    %1415 = vrot.lane.b32.xlu0 %v1402, 96
    %v1416 = vpop.permute.xlu0 %1415
    %1417 = vrot.lane.b32.xlu0 %v1403, 96
    %v1418 = vpop.permute.xlu0 %1417
    %1421 = vmatprep.subr.mxu0 0.0
    %1422 = vmatpush1.msra.mxu0 0.0
    %1423 = vmatprep.subr.mxu0 0.0
    %1424 = vmatpush1.msra.mxu0 0.0
    %1425 = vmatprep.subr.mxu0 0.0
    %1426 = vmatpush1.msra.mxu0 0.0
    %1427 = vmatprep.subr.mxu0 0.0
    %1428 = vmatpush1.msra.mxu0 0.0
    %1429 = vmatprep.subr.mxu0 0.0
    %1430 = vmatpush1.msra.mxu0 0.0
    %1431 = vmatprep.subr.mxu0 0.0
    %1432 = vmatpush1.msra.mxu0 0.0
    %1433 = vmatprep.subr.mxu0 0.0
    %1434 = vmatpush1.msra.mxu0 0.0
    %1435 = vmatprep.subr.mxu0 0.0
    %1436 = vmatpush1.msra.mxu0 0.0
    %1437 = vmatprep.subr.mxu0 0.0
    %1438 = vmatpush1.msra.mxu0 0.0
    %1439 = vmatprep.subr.mxu0 0.0
    %1440 = vmatpush1.msra.mxu0 0.0
    %1441 = vmatprep.subr.mxu0 0.0
    %1442 = vmatpush1.msra.mxu0 0.0
    %1443 = vmatprep.subr.mxu0 0.0
    %1444 = vmatpush1.msra.mxu0 0.0
    %1445 = vmatprep.subr.mxu0 0.0
    %1446 = vmatpush1.msra.mxu0 0.0
    %1447 = vmatprep.subr.mxu0 0.0
    %1448 = vmatpush1.msra.mxu0 0.0
    %1449 = vmatprep.subr.mxu0 0.0
    %1450 = vmatpush1.msra.mxu0 %v1418
    %1451 = vmatprep.subr.mxu0 0.0
    %1452 = vmatpush1.msra.mxu0 %v1416
    %1453 = vmatprep.subr.mxu0 0.0
    %1454 = vmatpush2.msra.mxu0 0.0
    %1455 = vmatprep.subr.mxu0 0.0
    %1456 = vmatpush2.msra.mxu0 0.0
    %1457 = vmatprep.subr.mxu0 0.0
    %1458 = vmatpush2.msra.mxu0 0.0
    %1459 = vmatprep.subr.mxu0 0.0
    %1460 = vmatpush2.msra.mxu0 0.0
    %1461 = vmatprep.subr.mxu0 0.0
    %1462 = vmatpush2.msra.mxu0 0.0
    %1463 = vmatprep.subr.mxu0 0.0
    %1464 = vmatpush2.msra.mxu0 0.0
    %1465 = vmatprep.subr.mxu0 0.0
    %1466 = vmatpush2.msra.mxu0 0.0
    %1467 = vmatprep.subr.mxu0 0.0
    %1468 = vmatpush2.msra.mxu0 0.0
    %1469 = vmatprep.subr.mxu0 0.0
    %1470 = vmatpush2.msra.mxu0 0.0
    %1471 = vmatprep.subr.mxu0 0.0
    %1472 = vmatpush2.msra.mxu0 0.0
    %1473 = vmatprep.subr.mxu0 0.0
    %1474 = vmatpush2.msra.mxu0 0.0
    %1475 = vmatprep.subr.mxu0 0.0
    %1476 = vmatpush2.msra.mxu0 0.0
    %1477 = vmatprep.subr.mxu0 0.0
    %1478 = vmatpush2.msra.mxu0 0.0
    %1479 = vmatprep.subr.mxu0 0.0
    %1480 = vmatpush2.msra.mxu0 0.0
    %1481 = vmatprep.subr.mxu0 0.0
    %1482 = vmatpush2.msra.mxu0 0.0
    %1483 = vmatprep.subr.mxu0 0.0
    %1484 = vmatpush2.msra.mxu0 0.0
    %1485 = vmatprep.mubr.f32.mxu0 0.0
    %1486 = vmatmul.mubr.f32.gmra.mxu0 %v430
    %v1487 = vpop.f32.mrf.mxu0
    %v1488 = vadd.f32 0.0, %v1487
    %v1489 = vpop.f32.mrf.mxu0
    %1490 = vmatprep.mubr.f32.mxu0 0.0
    %1491 = vmatmul.mubr.f32.gmra.mxu0 %v433
    %v1492 = vpop.f32.mrf.mxu0
    %v1493 = vadd.f32 0.0, %v1492
    %v1494 = vpop.f32.mrf.mxu0
    %1495 = vdwg.mxu0
    %1496 = vxpose.xlu0.b32.start [1/16] %v1416, 128
    %1497 = vxpose.xlu0.b32.cont [2/16] %v1418, 128
    %1498 = vxpose.xlu0.b32.cont [3/16] 0.0, 128
    %1499 = vxpose.xlu0.b32.cont [4/16] 0.0, 128
    %1500 = vxpose.xlu0.b32.cont [5/16] 0.0, 128
    %1501 = vxpose.xlu0.b32.cont [6/16] 0.0, 128
    %1502 = vxpose.xlu0.b32.cont [7/16] 0.0, 128
    %1503 = vxpose.xlu0.b32.cont [8/16] 0.0, 128
    %1504 = vxpose.xlu0.b32.cont [9/16] 0.0, 128
    %1505 = vxpose.xlu0.b32.cont [10/16] 0.0, 128
    %1506 = vxpose.xlu0.b32.cont [11/16] 0.0, 128
    %1507 = vxpose.xlu0.b32.cont [12/16] 0.0, 128
    %1508 = vxpose.xlu0.b32.cont [13/16] 0.0, 128
    %1509 = vxpose.xlu0.b32.cont [14/16] 0.0, 128
    %1510 = vxpose.xlu0.b32.cont [15/16] 0.0, 128
    %1511 = vxpose.xlu0.b32.end [16/16] 0.0, 128
    %v1512 = vpop.trf.xlu0
    %v1513 = vpop.trf.xlu0
    %v1514 = vpop.trf.xlu0
    %v1515 = vpop.trf.xlu0
    %v1516 = vpop.trf.xlu0
    %v1517 = vpop.trf.xlu0
    %v1518 = vpop.trf.xlu0
    %v1519 = vpop.trf.xlu0
    %v1520 = vpop.trf.xlu0
    %v1521 = vpop.trf.xlu0
    %v1522 = vpop.trf.xlu0
    %v1523 = vpop.trf.xlu0
    %v1524 = vpop.trf.xlu0
    %v1525 = vpop.trf.xlu0
    %v1526 = vpop.trf.xlu0
    %v1527 = vpop.trf.xlu0
    %v1529 = vsel %vm428, %v1512, 0
    %1531 = vmatprep.subr.mxu0 0.0
    %1532 = vmatpush1.msra.mxu0 0.0
    %1533 = vmatprep.subr.mxu0 0.0
    %1534 = vmatpush1.msra.mxu0 0.0
    %1535 = vmatprep.subr.mxu0 0.0
    %1536 = vmatpush1.msra.mxu0 0.0
    %1537 = vmatprep.subr.mxu0 0.0
    %1538 = vmatpush1.msra.mxu0 0.0
    %1539 = vmatprep.subr.mxu0 0.0
    %1540 = vmatpush1.msra.mxu0 0.0
    %1541 = vmatprep.subr.mxu0 0.0
    %1542 = vmatpush1.msra.mxu0 0.0
    %1543 = vmatprep.subr.mxu0 0.0
    %1544 = vmatpush1.msra.mxu0 0.0
    %1545 = vmatprep.subr.mxu0 0.0
    %1546 = vmatpush1.msra.mxu0 0.0
    %1547 = vmatprep.subr.mxu0 0.0
    %1548 = vmatpush1.msra.mxu0 0.0
    %1549 = vmatprep.subr.mxu0 0.0
    %1550 = vmatpush1.msra.mxu0 0.0
    %1551 = vmatprep.subr.mxu0 0.0
    %1552 = vmatpush1.msra.mxu0 0.0
    %1553 = vmatprep.subr.mxu0 0.0
    %1554 = vmatpush1.msra.mxu0 0.0
    %1555 = vmatprep.subr.mxu0 0.0
    %1556 = vmatpush1.msra.mxu0 0.0
    %1557 = vmatprep.subr.mxu0 0.0
    %1558 = vmatpush1.msra.mxu0 0.0
    %1559 = vmatprep.subr.mxu0 0.0
    %1560 = vmatpush1.msra.mxu0 %v111
    %1561 = vmatprep.subr.mxu0 0.0
    %1562 = vmatpush1.msra.mxu0 %v110
    %1563 = vmatprep.subr.mxu0 0.0
    %1564 = vmatpush2.msra.mxu0 0.0
    %1565 = vmatprep.subr.mxu0 0.0
    %1566 = vmatpush2.msra.mxu0 0.0
    %1567 = vmatprep.subr.mxu0 0.0
    %1568 = vmatpush2.msra.mxu0 0.0
    %1569 = vmatprep.subr.mxu0 0.0
    %1570 = vmatpush2.msra.mxu0 0.0
    %1571 = vmatprep.subr.mxu0 0.0
    %1572 = vmatpush2.msra.mxu0 0.0
    %1573 = vmatprep.subr.mxu0 0.0
    %1574 = vmatpush2.msra.mxu0 0.0
    %1575 = vmatprep.subr.mxu0 0.0
    %1576 = vmatpush2.msra.mxu0 0.0
    %1577 = vmatprep.subr.mxu0 0.0
    %1578 = vmatpush2.msra.mxu0 0.0
    %1579 = vmatprep.subr.mxu0 0.0
    %1580 = vmatpush2.msra.mxu0 0.0
    %1581 = vmatprep.subr.mxu0 0.0
    %1582 = vmatpush2.msra.mxu0 0.0
    %1583 = vmatprep.subr.mxu0 0.0
    %1584 = vmatpush2.msra.mxu0 0.0
    %1585 = vmatprep.subr.mxu0 0.0
    %1586 = vmatpush2.msra.mxu0 0.0
    %1587 = vmatprep.subr.mxu0 0.0
    %1588 = vmatpush2.msra.mxu0 0.0
    %1589 = vmatprep.subr.mxu0 0.0
    %1590 = vmatpush2.msra.mxu0 0.0
    %1591 = vmatprep.subr.mxu0 0.0
    %1592 = vmatpush2.msra.mxu0 0.0
    %1593 = vmatprep.subr.mxu0 0.0
    %1594 = vmatpush2.msra.mxu0 0.0
    %1595 = vmatprep.mubr.f32.mxu0 0.0
    %1596 = vmatmul.mubr.f32.gmra.mxu0 %v1529
    %v1597 = vpop.f32.mrf.mxu0
    %v1598 = vadd.f32 0.0, %v1597
    %v1599 = vpop.f32.mrf.mxu0
    %1600 = vdwg.mxu0
    %1603 = vrot.lane.b32.xlu0 %v1400, 48
    %v1604 = vpop.permute.xlu0 %1603
    %1605 = vrot.lane.b32.xlu0 %v1401, 48
    %v1606 = vpop.permute.xlu0 %1605
    %1607 = vrot.lane.b32.xlu0 %v1400, 64
    %v1608 = vpop.permute.xlu0 %1607
    %1609 = vrot.lane.b32.xlu0 %v1401, 64
    %v1610 = vpop.permute.xlu0 %1609
    %v1611 = vsel %vm428, %v1604, 0
    %v1613 = vsel %vm428, %v1606, 0
    %v1615 = vsel %vm428, %v1608, 0
    %v1617 = vsel %vm428, %v1610, 0
    %1619 = vmatprep.subr.mxu0 0.0
    %1620 = vmatpush1.xpose.msra.mxu0 0.0
    %1621 = vmatprep.subr.mxu0 0.0
    %1622 = vmatpush1.xpose.msra.mxu0 0.0
    %1623 = vmatprep.subr.mxu0 0.0
    %1624 = vmatpush1.xpose.msra.mxu0 0.0
    %1625 = vmatprep.subr.mxu0 0.0
    %1626 = vmatpush1.xpose.msra.mxu0 0.0
    %1627 = vmatprep.subr.mxu0 0.0
    %1628 = vmatpush1.xpose.msra.mxu0 0.0
    %1629 = vmatprep.subr.mxu0 0.0
    %1630 = vmatpush1.xpose.msra.mxu0 0.0
    %1631 = vmatprep.subr.mxu0 0.0
    %1632 = vmatpush1.xpose.msra.mxu0 0.0
    %1633 = vmatprep.subr.mxu0 0.0
    %1634 = vmatpush1.xpose.msra.mxu0 0.0
    %1635 = vmatprep.subr.mxu0 0.0
    %1636 = vmatpush1.xpose.msra.mxu0 0.0
    %1637 = vmatprep.subr.mxu0 0.0
    %1638 = vmatpush1.xpose.msra.mxu0 0.0
    %1639 = vmatprep.subr.mxu0 0.0
    %1640 = vmatpush1.xpose.msra.mxu0 0.0
    %1641 = vmatprep.subr.mxu0 0.0
    %1642 = vmatpush1.xpose.msra.mxu0 0.0
    %1643 = vmatprep.subr.mxu0 0.0
    %1644 = vmatpush1.xpose.msra.mxu0 0.0
    %1645 = vmatprep.subr.mxu0 0.0
    %1646 = vmatpush1.xpose.msra.mxu0 0.0
    %1647 = vmatprep.subr.mxu0 0.0
    %1648 = vmatpush1.xpose.msra.mxu0 %v1617
    %1649 = vmatprep.subr.mxu0 0.0
    %1650 = vmatpush1.xpose.msra.mxu0 %v1615
    %1651 = vmatprep.subr.mxu0 0.0
    %1652 = vmatpush2.xpose.msra.mxu0 0.0
    %1653 = vmatprep.subr.mxu0 0.0
    %1654 = vmatpush2.xpose.msra.mxu0 0.0
    %1655 = vmatprep.subr.mxu0 0.0
    %1656 = vmatpush2.xpose.msra.mxu0 0.0
    %1657 = vmatprep.subr.mxu0 0.0
    %1658 = vmatpush2.xpose.msra.mxu0 0.0
    %1659 = vmatprep.subr.mxu0 0.0
    %1660 = vmatpush2.xpose.msra.mxu0 0.0
    %1661 = vmatprep.subr.mxu0 0.0
    %1662 = vmatpush2.xpose.msra.mxu0 0.0
    %1663 = vmatprep.subr.mxu0 0.0
    %1664 = vmatpush2.xpose.msra.mxu0 0.0
    %1665 = vmatprep.subr.mxu0 0.0
    %1666 = vmatpush2.xpose.msra.mxu0 0.0
    %1667 = vmatprep.subr.mxu0 0.0
    %1668 = vmatpush2.xpose.msra.mxu0 0.0
    %1669 = vmatprep.subr.mxu0 0.0
    %1670 = vmatpush2.xpose.msra.mxu0 0.0
    %1671 = vmatprep.subr.mxu0 0.0
    %1672 = vmatpush2.xpose.msra.mxu0 0.0
    %1673 = vmatprep.subr.mxu0 0.0
    %1674 = vmatpush2.xpose.msra.mxu0 0.0
    %1675 = vmatprep.subr.mxu0 0.0
    %1676 = vmatpush2.xpose.msra.mxu0 0.0
    %1677 = vmatprep.subr.mxu0 0.0
    %1678 = vmatpush2.xpose.msra.mxu0 0.0
    %1679 = vmatprep.subr.mxu0 0.0
    %1680 = vmatpush2.xpose.msra.mxu0 0.0
    %1681 = vmatprep.subr.mxu0 0.0
    %1682 = vmatpush2.xpose.msra.mxu0 0.0
    %1683 = vmatprep.mubr.f32.mxu0 0.0
    %1684 = vmatmul.mubr.f32.gmra.mxu0 %v1611
    %v1685 = vpop.f32.mrf.mxu0
    %v1686 = vadd.f32 0.0, %v1685
    %v1687 = vpop.f32.mrf.mxu0
    %1688 = vmatprep.mubr.f32.mxu0 0.0
    %1689 = vmatmul.mubr.f32.gmra.mxu0 %v1613
    %v1690 = vpop.f32.mrf.mxu0
    %v1691 = vadd.f32 0.0, %v1690
    %v1692 = vpop.f32.mrf.mxu0
    %1693 = vdwg.mxu0
    %s1694 = scalar_lea.vmem [#allocation2], 16
    %v1695 = vld [vmem:[%s1694] sm:$0xff]
    %v1696 = vld [vmem:[%s1694 + $0x8] sm:$0xff]
    %1697 = vmatprep.subr.mxu0 0.0
    %1698 = vmatpush1.msra.mxu0 0.0
    %1699 = vmatprep.subr.mxu0 0.0
    %1700 = vmatpush1.msra.mxu0 0.0
    %1701 = vmatprep.subr.mxu0 0.0
    %1702 = vmatpush1.msra.mxu0 0.0
    %1703 = vmatprep.subr.mxu0 0.0
    %1704 = vmatpush1.msra.mxu0 0.0
    %1705 = vmatprep.subr.mxu0 0.0
    %1706 = vmatpush1.msra.mxu0 0.0
    %1707 = vmatprep.subr.mxu0 0.0
    %1708 = vmatpush1.msra.mxu0 0.0
    %1709 = vmatprep.subr.mxu0 0.0
    %1710 = vmatpush1.msra.mxu0 0.0
    %1711 = vmatprep.subr.mxu0 0.0
    %1712 = vmatpush1.msra.mxu0 0.0
    %1713 = vmatprep.subr.mxu0 0.0
    %1714 = vmatpush1.msra.mxu0 0.0
    %1715 = vmatprep.subr.mxu0 0.0
    %1716 = vmatpush1.msra.mxu0 0.0
    %1717 = vmatprep.subr.mxu0 0.0
    %1718 = vmatpush1.msra.mxu0 0.0
    %1719 = vmatprep.subr.mxu0 0.0
    %1720 = vmatpush1.msra.mxu0 0.0
    %1721 = vmatprep.subr.mxu0 0.0
    %1722 = vmatpush1.msra.mxu0 0.0
    %1723 = vmatprep.subr.mxu0 0.0
    %1724 = vmatpush1.msra.mxu0 0.0
    %1725 = vmatprep.subr.mxu0 0.0
    %1726 = vmatpush1.msra.mxu0 %v1696
    %1727 = vmatprep.subr.mxu0 0.0
    %1728 = vmatpush1.msra.mxu0 %v1695
    %1729 = vmatprep.subr.mxu0 0.0
    %1730 = vmatpush2.msra.mxu0 0.0
    %1731 = vmatprep.subr.mxu0 0.0
    %1732 = vmatpush2.msra.mxu0 0.0
    %1733 = vmatprep.subr.mxu0 0.0
    %1734 = vmatpush2.msra.mxu0 0.0
    %1735 = vmatprep.subr.mxu0 0.0
    %1736 = vmatpush2.msra.mxu0 0.0
    %1737 = vmatprep.subr.mxu0 0.0
    %1738 = vmatpush2.msra.mxu0 0.0
    %1739 = vmatprep.subr.mxu0 0.0
    %1740 = vmatpush2.msra.mxu0 0.0
    %1741 = vmatprep.subr.mxu0 0.0
    %1742 = vmatpush2.msra.mxu0 0.0
    %1743 = vmatprep.subr.mxu0 0.0
    %1744 = vmatpush2.msra.mxu0 0.0
    %1745 = vmatprep.subr.mxu0 0.0
    %1746 = vmatpush2.msra.mxu0 0.0
    %1747 = vmatprep.subr.mxu0 0.0
    %1748 = vmatpush2.msra.mxu0 0.0
    %1749 = vmatprep.subr.mxu0 0.0
    %1750 = vmatpush2.msra.mxu0 0.0
    %1751 = vmatprep.subr.mxu0 0.0
    %1752 = vmatpush2.msra.mxu0 0.0
    %1753 = vmatprep.subr.mxu0 0.0
    %1754 = vmatpush2.msra.mxu0 0.0
    %1755 = vmatprep.subr.mxu0 0.0
    %1756 = vmatpush2.msra.mxu0 0.0
    %1757 = vmatprep.subr.mxu0 0.0
    %1758 = vmatpush2.msra.mxu0 0.0
    %1759 = vmatprep.subr.mxu0 0.0
    %1760 = vmatpush2.msra.mxu0 0.0
    %1761 = vmatprep.mubr.f32.mxu0 0.0
    %1762 = vmatmul.mubr.f32.gmra.mxu0 %v1611
    %v1763 = vpop.f32.mrf.mxu0
    %v1764 = vadd.f32 0.0, %v1763
    %v1765 = vpop.f32.mrf.mxu0
    %1766 = vmatprep.mubr.f32.mxu0 0.0
    %1767 = vmatmul.mubr.f32.gmra.mxu0 %v1613
    %v1768 = vpop.f32.mrf.mxu0
    %v1769 = vadd.f32 0.0, %v1768
    %v1770 = vpop.f32.mrf.mxu0
    %1771 = vdwg.mxu0
    %1773 = vset.pattern.permute.xlu0 32
    %1774 = vperm.xlu0 %1773, %v1299
    %v1775 = vpop.permute.xlu0 %1774
    %1778 = vset.pattern.permute.xlu0 32
    %1779 = vperm.xlu0 %1778, %v1300
    %v1780 = vpop.permute.xlu0 %1779
    %1782 = vset.pattern.permute.xlu0 33
    %1783 = vperm.xlu0 %1782, %v1299
    %v1784 = vpop.permute.xlu0 %1783
    %1786 = vset.pattern.permute.xlu0 33
    %1787 = vperm.xlu0 %1786, %v1300
    %v1788 = vpop.permute.xlu0 %1787
    %v1790 = vsel %vm144, %v1775, %v1784
    %v1791 = vsel %vm144, %v1780, %v1788
    %v1792 = vmul.f32 %v1790, %v1400
    %v1793 = vmul.f32 %v1791, %v1401
    %1796 = vrot.lane.b32.xlu0 %v1488, 32
    %v1797 = vpop.permute.xlu0 %1796
    %1798 = vrot.lane.b32.xlu0 %v1493, 32
    %v1799 = vpop.permute.xlu0 %1798
    %v1802 = vsub.f32 %v1412, %v1797
    %v1803 = vsub.f32 %v1412, %v1799
    %v1804 = vmul.f32 %v1488, 1.442695
    %v1805 = vpow.pop %v1804
    %v1806 = vmul.f32 %v1493, 1.442695
    %v1807 = vpow.pop %v1806
    %1809 = vset.pattern.permute.xlu0 0
    %1810 = vperm.xlu0 %1809, %v1805
    %v1811 = vpop.permute.xlu0 %1810
    %1814 = vset.pattern.permute.xlu0 0
    %1815 = vperm.xlu0 %1814, %v1807
    %v1816 = vpop.permute.xlu0 %1815
    %1818 = vset.pattern.permute.xlu0 1
    %1819 = vperm.xlu0 %1818, %v1805
    %v1820 = vpop.permute.xlu0 %1819
    %1822 = vset.pattern.permute.xlu0 1
    %1823 = vperm.xlu0 %1822, %v1807
    %v1824 = vpop.permute.xlu0 %1823
    %v1826 = vsel %vm144, %v1811, %v1820
    %v1827 = vsel %vm144, %v1816, %v1824
    %v1828 = vmul.f32 %v1802, 1.442695
    %v1829 = vpow.pop %v1828
    %v1830 = vmul.f32 %v1803, 1.442695
    %v1831 = vpow.pop %v1830
    %1833 = vset.pattern.permute.xlu0 32
    %1834 = vperm.xlu0 %1833, %v1829
    %v1835 = vpop.permute.xlu0 %1834
    %1838 = vset.pattern.permute.xlu0 32
    %1839 = vperm.xlu0 %1838, %v1831
    %v1840 = vpop.permute.xlu0 %1839
    %1842 = vset.pattern.permute.xlu0 33
    %1843 = vperm.xlu0 %1842, %v1829
    %v1844 = vpop.permute.xlu0 %1843
    %1846 = vset.pattern.permute.xlu0 33
    %1847 = vperm.xlu0 %1846, %v1831
    %v1848 = vpop.permute.xlu0 %1847
    %v1850 = vsel %vm144, %v1835, %v1844
    %v1851 = vsel %vm144, %v1840, %v1848
    %v1852 = vmul.f32 %v1412, 1.442695
    %v1853 = vpow.pop %v1852
    %1855 = vset.pattern.permute.xlu0 32
    %1856 = vperm.xlu0 %1855, %v1853
    %v1857 = vpop.permute.xlu0 %1856
    %1859 = vset.pattern.permute.xlu0 33
    %1860 = vperm.xlu0 %1859, %v1853
    %v1861 = vpop.permute.xlu0 %1860
    %v1863 = vsel %vm144, %v1857, %v1861
    %1864 = vset.pattern.permute.xlu0 0
    %1865 = vperm.xlu0 %1864, %v1488
    %v1866 = vpop.permute.xlu0 %1865
    %1868 = vset.pattern.permute.xlu0 0
    %1869 = vperm.xlu0 %1868, %v1493
    %v1870 = vpop.permute.xlu0 %1869
    %v1872 = vlaneseq
    %v1873 = vshrl.u32 %v1872, 7
    %v1874 = vsub.s32 0, %v1873
    %v1875 = vrot.slane %v1598, %v1874
    %v1876 = vsub.f32 %v1866, %v1875
    %v1877 = vsub.f32 %v1870, %v1875
    %v1878 = vsel %vm112, %v1876, -1e+30
    %v1879 = vsel %vm113, %v1877, -1e+30
    %v1880 = vmul.f32 %v1878, 1.442695
    %v1881 = vpow.pop %v1880
    %v1882 = vmul.f32 %v1879, 1.442695
    %v1883 = vpow.pop %v1882
    %v1884 = vmul.f32 %v1686, %v1881
    %v1885 = vmul.f32 %v1691, %v1883
    %v1887 = vsel %vm428, %v1884, 0
    %v1890 = vsel %vm428, %v1885, 0
    %1892 = vmatprep.subr.mxu0 0.0
    %1893 = vmatpush1.msra.mxu0 0.0
    %1894 = vmatprep.subr.mxu0 0.0
    %1895 = vmatpush1.msra.mxu0 0.0
    %1896 = vmatprep.subr.mxu0 0.0
    %1897 = vmatpush1.msra.mxu0 0.0
    %1898 = vmatprep.subr.mxu0 0.0
    %1899 = vmatpush1.msra.mxu0 0.0
    %1900 = vmatprep.subr.mxu0 0.0
    %1901 = vmatpush1.msra.mxu0 0.0
    %1902 = vmatprep.subr.mxu0 0.0
    %1903 = vmatpush1.msra.mxu0 0.0
    %1904 = vmatprep.subr.mxu0 0.0
    %1905 = vmatpush1.msra.mxu0 0.0
    %1906 = vmatprep.subr.mxu0 0.0
    %1907 = vmatpush1.msra.mxu0 0.0
    %1908 = vmatprep.subr.mxu0 0.0
    %1909 = vmatpush1.msra.mxu0 0.0
    %1910 = vmatprep.subr.mxu0 0.0
    %1911 = vmatpush1.msra.mxu0 0.0
    %1912 = vmatprep.subr.mxu0 0.0
    %1913 = vmatpush1.msra.mxu0 0.0
    %1914 = vmatprep.subr.mxu0 0.0
    %1915 = vmatpush1.msra.mxu0 0.0
    %1916 = vmatprep.subr.mxu0 0.0
    %1917 = vmatpush1.msra.mxu0 0.0
    %1918 = vmatprep.subr.mxu0 0.0
    %1919 = vmatpush1.msra.mxu0 0.0
    %1920 = vmatprep.subr.mxu0 0.0
    %1921 = vmatpush1.msra.mxu0 %v1793
    %1922 = vmatprep.subr.mxu0 0.0
    %1923 = vmatpush1.msra.mxu0 %v1792
    %1924 = vmatprep.subr.mxu0 0.0
    %1925 = vmatpush2.msra.mxu0 0.0
    %1926 = vmatprep.subr.mxu0 0.0
    %1927 = vmatpush2.msra.mxu0 0.0
    %1928 = vmatprep.subr.mxu0 0.0
    %1929 = vmatpush2.msra.mxu0 0.0
    %1930 = vmatprep.subr.mxu0 0.0
    %1931 = vmatpush2.msra.mxu0 0.0
    %1932 = vmatprep.subr.mxu0 0.0
    %1933 = vmatpush2.msra.mxu0 0.0
    %1934 = vmatprep.subr.mxu0 0.0
    %1935 = vmatpush2.msra.mxu0 0.0
    %1936 = vmatprep.subr.mxu0 0.0
    %1937 = vmatpush2.msra.mxu0 0.0
    %1938 = vmatprep.subr.mxu0 0.0
    %1939 = vmatpush2.msra.mxu0 0.0
    %1940 = vmatprep.subr.mxu0 0.0
    %1941 = vmatpush2.msra.mxu0 0.0
    %1942 = vmatprep.subr.mxu0 0.0
    %1943 = vmatpush2.msra.mxu0 0.0
    %1944 = vmatprep.subr.mxu0 0.0
    %1945 = vmatpush2.msra.mxu0 0.0
    %1946 = vmatprep.subr.mxu0 0.0
    %1947 = vmatpush2.msra.mxu0 0.0
    %1948 = vmatprep.subr.mxu0 0.0
    %1949 = vmatpush2.msra.mxu0 0.0
    %1950 = vmatprep.subr.mxu0 0.0
    %1951 = vmatpush2.msra.mxu0 0.0
    %1952 = vmatprep.subr.mxu0 0.0
    %1953 = vmatpush2.msra.mxu0 0.0
    %1954 = vmatprep.subr.mxu0 0.0
    %1955 = vmatpush2.msra.mxu0 0.0
    %1956 = vmatprep.mubr.f32.mxu0 0.0
    %1957 = vmatmul.mubr.f32.gmra.mxu0 %v1887
    %v1958 = vpop.f32.mrf.mxu0
    %v1959 = vadd.f32 0.0, %v1958
    %v1960 = vpop.f32.mrf.mxu0
    %1961 = vmatprep.mubr.f32.mxu0 0.0
    %1962 = vmatmul.mubr.f32.gmra.mxu0 %v1890
    %v1963 = vpop.f32.mrf.mxu0
    %v1964 = vadd.f32 0.0, %v1963
    %v1965 = vpop.f32.mrf.mxu0
    %1966 = vdwg.mxu0
    %1967 = vset.pattern.permute.xlu0 1
    %1968 = vperm.xlu0 %1967, %v1488
    %v1969 = vpop.permute.xlu0 %1968
    %1971 = vset.pattern.permute.xlu0 1
    %1972 = vperm.xlu0 %1971, %v1493
    %v1973 = vpop.permute.xlu0 %1972
    %v1975 = vlaneseq
    %v1976 = vshrl.u32 %v1975, 7
    %v1977 = vsub.s32 1, %v1976
    %v1978 = vrot.slane %v1598, %v1977
    %v1979 = vsub.f32 %v1969, %v1978
    %v1980 = vsub.f32 %v1973, %v1978
    %v1981 = vsel %vm112, %v1979, -1e+30
    %v1982 = vsel %vm113, %v1980, -1e+30
    %v1983 = vmul.f32 %v1981, 1.442695
    %v1984 = vpow.pop %v1983
    %v1985 = vmul.f32 %v1982, 1.442695
    %v1986 = vpow.pop %v1985
    %v1987 = vmul.f32 %v1686, %v1984
    %v1988 = vmul.f32 %v1691, %v1986
    %1991 = vrot.lane.b32.xlu0 %v1792, 96
    %v1992 = vpop.permute.xlu0 %1991
    %1993 = vrot.lane.b32.xlu0 %v1793, 96
    %v1994 = vpop.permute.xlu0 %1993
    %v1998 = vsel %vm428, %v1987, 0
    %v2001 = vsel %vm428, %v1988, 0
    %2003 = vmatprep.subr.mxu0 0.0
    %2004 = vmatpush1.msra.mxu0 0.0
    %2005 = vmatprep.subr.mxu0 0.0
    %2006 = vmatpush1.msra.mxu0 0.0
    %2007 = vmatprep.subr.mxu0 0.0
    %2008 = vmatpush1.msra.mxu0 0.0
    %2009 = vmatprep.subr.mxu0 0.0
    %2010 = vmatpush1.msra.mxu0 0.0
    %2011 = vmatprep.subr.mxu0 0.0
    %2012 = vmatpush1.msra.mxu0 0.0
    %2013 = vmatprep.subr.mxu0 0.0
    %2014 = vmatpush1.msra.mxu0 0.0
    %2015 = vmatprep.subr.mxu0 0.0
    %2016 = vmatpush1.msra.mxu0 0.0
    %2017 = vmatprep.subr.mxu0 0.0
    %2018 = vmatpush1.msra.mxu0 0.0
    %2019 = vmatprep.subr.mxu0 0.0
    %2020 = vmatpush1.msra.mxu0 0.0
    %2021 = vmatprep.subr.mxu0 0.0
    %2022 = vmatpush1.msra.mxu0 0.0
    %2023 = vmatprep.subr.mxu0 0.0
    %2024 = vmatpush1.msra.mxu0 0.0
    %2025 = vmatprep.subr.mxu0 0.0
    %2026 = vmatpush1.msra.mxu0 0.0
    %2027 = vmatprep.subr.mxu0 0.0
    %2028 = vmatpush1.msra.mxu0 0.0
    %2029 = vmatprep.subr.mxu0 0.0
    %2030 = vmatpush1.msra.mxu0 0.0
    %2031 = vmatprep.subr.mxu0 0.0
    %2032 = vmatpush1.msra.mxu0 %v1994
    %2033 = vmatprep.subr.mxu0 0.0
    %2034 = vmatpush1.msra.mxu0 %v1992
    %2035 = vmatprep.subr.mxu0 0.0
    %2036 = vmatpush2.msra.mxu0 0.0
    %2037 = vmatprep.subr.mxu0 0.0
    %2038 = vmatpush2.msra.mxu0 0.0
    %2039 = vmatprep.subr.mxu0 0.0
    %2040 = vmatpush2.msra.mxu0 0.0
    %2041 = vmatprep.subr.mxu0 0.0
    %2042 = vmatpush2.msra.mxu0 0.0
    %2043 = vmatprep.subr.mxu0 0.0
    %2044 = vmatpush2.msra.mxu0 0.0
    %2045 = vmatprep.subr.mxu0 0.0
    %2046 = vmatpush2.msra.mxu0 0.0
    %2047 = vmatprep.subr.mxu0 0.0
    %2048 = vmatpush2.msra.mxu0 0.0
    %2049 = vmatprep.subr.mxu0 0.0
    %2050 = vmatpush2.msra.mxu0 0.0
    %2051 = vmatprep.subr.mxu0 0.0
    %2052 = vmatpush2.msra.mxu0 0.0
    %2053 = vmatprep.subr.mxu0 0.0
    %2054 = vmatpush2.msra.mxu0 0.0
    %2055 = vmatprep.subr.mxu0 0.0
    %2056 = vmatpush2.msra.mxu0 0.0
    %2057 = vmatprep.subr.mxu0 0.0
    %2058 = vmatpush2.msra.mxu0 0.0
    %2059 = vmatprep.subr.mxu0 0.0
    %2060 = vmatpush2.msra.mxu0 0.0
    %2061 = vmatprep.subr.mxu0 0.0
    %2062 = vmatpush2.msra.mxu0 0.0
    %2063 = vmatprep.subr.mxu0 0.0
    %2064 = vmatpush2.msra.mxu0 0.0
    %2065 = vmatprep.subr.mxu0 0.0
    %2066 = vmatpush2.msra.mxu0 0.0
    %2067 = vmatprep.mubr.f32.mxu0 0.0
    %2068 = vmatmul.mubr.f32.gmra.mxu0 %v1998
    %v2069 = vpop.f32.mrf.mxu0
    %v2070 = vadd.f32 0.0, %v2069
    %v2071 = vpop.f32.mrf.mxu0
    %2072 = vmatprep.mubr.f32.mxu0 0.0
    %2073 = vmatmul.mubr.f32.gmra.mxu0 %v2001
    %v2074 = vpop.f32.mrf.mxu0
    %v2075 = vadd.f32 0.0, %v2074
    %v2076 = vpop.f32.mrf.mxu0
    %2077 = vdwg.mxu0
    %2080 = vrot.lane.b32.xlu0 %v2070, 32
    %v2081 = vpop.permute.xlu0 %2080
    %2082 = vrot.lane.b32.xlu0 %v2075, 32
    %v2083 = vpop.permute.xlu0 %2082
    %v2086 = vsel %vm144, %v1959, %v2081
    %v2087 = vsel %vm144, %v1964, %v2083
    %v2088 = vmul.f32 %v1826, %v1764
    %v2089 = vmul.f32 %v1827, %v1769
    %v2090 = vadd.f32 %v2086, %v2088
    %v2091 = vadd.f32 %v2087, %v2089
    %v2092 = vlaneseq
    %v2093 = vshrl.u32 %v2092, 7
    %v2094 = vsub.s32 0, %v2093
    %v2095 = vrot.slane %v1863, %v2094
    %v2096 = vmul.f32 %v2095, %v1695
    %v2097 = vmul.f32 %v2095, %v1696
    %v2098 = vmul.f32 %v1850, %v1792
    %v2099 = vmul.f32 %v1851, %v1793
    %2102 = vxpose.xlu0.b32.start [1/16] %v1608, 128
    %2103 = vxpose.xlu0.b32.cont [2/16] %v1610, 128
    %2104 = vxpose.xlu0.b32.cont [3/16] 0.0, 128
    %2105 = vxpose.xlu0.b32.cont [4/16] 0.0, 128
    %2106 = vxpose.xlu0.b32.cont [5/16] 0.0, 128
    %2107 = vxpose.xlu0.b32.cont [6/16] 0.0, 128
    %2108 = vxpose.xlu0.b32.cont [7/16] 0.0, 128
    %2109 = vxpose.xlu0.b32.cont [8/16] 0.0, 128
    %2110 = vxpose.xlu0.b32.cont [9/16] 0.0, 128
    %2111 = vxpose.xlu0.b32.cont [10/16] 0.0, 128
    %2112 = vxpose.xlu0.b32.cont [11/16] 0.0, 128
    %2113 = vxpose.xlu0.b32.cont [12/16] 0.0, 128
    %2114 = vxpose.xlu0.b32.cont [13/16] 0.0, 128
    %2115 = vxpose.xlu0.b32.cont [14/16] 0.0, 128
    %2116 = vxpose.xlu0.b32.cont [15/16] 0.0, 128
    %2117 = vxpose.xlu0.b32.end [16/16] 0.0, 128
    %v2118 = vpop.trf.xlu0
    %v2119 = vpop.trf.xlu0
    %v2120 = vpop.trf.xlu0
    %v2121 = vpop.trf.xlu0
    %v2122 = vpop.trf.xlu0
    %v2123 = vpop.trf.xlu0
    %v2124 = vpop.trf.xlu0
    %v2125 = vpop.trf.xlu0
    %v2126 = vpop.trf.xlu0
    %v2127 = vpop.trf.xlu0
    %v2128 = vpop.trf.xlu0
    %v2129 = vpop.trf.xlu0
    %v2130 = vpop.trf.xlu0
    %v2131 = vpop.trf.xlu0
    %v2132 = vpop.trf.xlu0
    %v2133 = vpop.trf.xlu0
    %v2135 = vsel %vm428, %v2118, 0
    %v2138 = vsel %vm428, %v2119, 0
    %2140 = vmatprep.subr.mxu0 0.0
    %2141 = vmatpush1.msra.mxu0 0.0
    %2142 = vmatprep.subr.mxu0 0.0
    %2143 = vmatpush1.msra.mxu0 0.0
    %2144 = vmatprep.subr.mxu0 0.0
    %2145 = vmatpush1.msra.mxu0 0.0
    %2146 = vmatprep.subr.mxu0 0.0
    %2147 = vmatpush1.msra.mxu0 0.0
    %2148 = vmatprep.subr.mxu0 0.0
    %2149 = vmatpush1.msra.mxu0 0.0
    %2150 = vmatprep.subr.mxu0 0.0
    %2151 = vmatpush1.msra.mxu0 0.0
    %2152 = vmatprep.subr.mxu0 0.0
    %2153 = vmatpush1.msra.mxu0 0.0
    %2154 = vmatprep.subr.mxu0 0.0
    %2155 = vmatpush1.msra.mxu0 0.0
    %2156 = vmatprep.subr.mxu0 0.0
    %2157 = vmatpush1.msra.mxu0 0.0
    %2158 = vmatprep.subr.mxu0 0.0
    %2159 = vmatpush1.msra.mxu0 0.0
    %2160 = vmatprep.subr.mxu0 0.0
    %2161 = vmatpush1.msra.mxu0 0.0
    %2162 = vmatprep.subr.mxu0 0.0
    %2163 = vmatpush1.msra.mxu0 0.0
    %2164 = vmatprep.subr.mxu0 0.0
    %2165 = vmatpush1.msra.mxu0 0.0
    %2166 = vmatprep.subr.mxu0 0.0
    %2167 = vmatpush1.msra.mxu0 0.0
    %2168 = vmatprep.subr.mxu0 0.0
    %2169 = vmatpush1.msra.mxu0 %v2099
    %2170 = vmatprep.subr.mxu0 0.0
    %2171 = vmatpush1.msra.mxu0 %v2098
    %2172 = vmatprep.subr.mxu0 0.0
    %2173 = vmatpush2.msra.mxu0 0.0
    %2174 = vmatprep.subr.mxu0 0.0
    %2175 = vmatpush2.msra.mxu0 0.0
    %2176 = vmatprep.subr.mxu0 0.0
    %2177 = vmatpush2.msra.mxu0 0.0
    %2178 = vmatprep.subr.mxu0 0.0
    %2179 = vmatpush2.msra.mxu0 0.0
    %2180 = vmatprep.subr.mxu0 0.0
    %2181 = vmatpush2.msra.mxu0 0.0
    %2182 = vmatprep.subr.mxu0 0.0
    %2183 = vmatpush2.msra.mxu0 0.0
    %2184 = vmatprep.subr.mxu0 0.0
    %2185 = vmatpush2.msra.mxu0 0.0
    %2186 = vmatprep.subr.mxu0 0.0
    %2187 = vmatpush2.msra.mxu0 0.0
    %2188 = vmatprep.subr.mxu0 0.0
    %2189 = vmatpush2.msra.mxu0 0.0
    %2190 = vmatprep.subr.mxu0 0.0
    %2191 = vmatpush2.msra.mxu0 0.0
    %2192 = vmatprep.subr.mxu0 0.0
    %2193 = vmatpush2.msra.mxu0 0.0
    %2194 = vmatprep.subr.mxu0 0.0
    %2195 = vmatpush2.msra.mxu0 0.0
    %2196 = vmatprep.subr.mxu0 0.0
    %2197 = vmatpush2.msra.mxu0 0.0
    %2198 = vmatprep.subr.mxu0 0.0
    %2199 = vmatpush2.msra.mxu0 0.0
    %2200 = vmatprep.subr.mxu0 0.0
    %2201 = vmatpush2.msra.mxu0 0.0
    %2202 = vmatprep.subr.mxu0 0.0
    %2203 = vmatpush2.msra.mxu0 0.0
    %2204 = vmatprep.mubr.f32.mxu0 0.0
    %2205 = vmatmul.mubr.f32.gmra.mxu0 %v2135
    %v2206 = vpop.f32.mrf.mxu0
    %v2207 = vadd.f32 0.0, %v2206
    %v2208 = vpop.f32.mrf.mxu0
    %2209 = vmatprep.mubr.f32.mxu0 0.0
    %2210 = vmatmul.mubr.f32.gmra.mxu0 %v2138
    %v2211 = vpop.f32.mrf.mxu0
    %v2212 = vadd.f32 0.0, %v2211
    %v2213 = vpop.f32.mrf.mxu0
    %2214 = vdwg.mxu0
    %v2215 = vadd.f32 %v2096, %v2207
    %v2216 = vadd.f32 %v2097, %v2212
    %2217 = vst.msk [vmem:[%s1694] sm:$0xff] %vm302, %v2215
    %2218 = vst.msk [vmem:[%s1694 + $0x8] sm:$0xff] %vm302, %v2216
    %v2219 = vmul.f32 %v1236, %v1400
    %v2220 = vmul.f32 %v1236, %v1401
    %v2221 = vadd.f32 %v2090, %v2219
    %v2222 = vadd.f32 %v2091, %v2220
    %v2223 = vsub.f32 0.0, %v236
    %v2224 = vsub.f32 0.0, %v242
    %v2225 = vmul.f32 %v2223, 1.442695
    %v2226 = vpow.pop %v2225
    %v2227 = vmul.f32 %v2224, 1.442695
    %v2228 = vpow.pop %v2227
    %v2229 = vadd.f32 %v2226, 1.0
    %v2230 = vadd.f32 %v2228, 1.0
    %v2231 = vrcp.pop %v2229
    %v2232 = vmul.f32 1.0, %v2231
    %v2233 = vrcp.pop %v2230
    %v2234 = vmul.f32 1.0, %v2233
    %v2235 = vmul.f32 %v236, %v2232
    %v2236 = vmul.f32 %v242, %v2234
    %v2237 = vmul.f32 %v2221, %v2235
    %v2238 = vmul.f32 %v2222, %v2236
    %v2239 = vmul.f32 %v2237, %v2237
    %v2240 = vmul.f32 %v2238, %v2238
    %v2241 = vsel %vm302, %v2239, 0.0
    %2242 = vadd.xlane.f32.xlu0 %v2241
    %v2243 = vpop.xlane.xlu0 %2242
    %v2244 = vsel %vm302, %v2240, 0.0
    %2245 = vadd.xlane.f32.xlu0 %v2244
    %v2246 = vpop.xlane.xlu0 %2245
    %v2247 = vmul.f32 %v2243, %v1266
    %v2248 = vmul.f32 %v2246, %v1266
    %v2249 = vadd.f32 %v2247, 1e-05
    %v2250 = vadd.f32 %v2248, 1e-05
    %v2251 = vrsqrt.pop %v2249
    %v2252 = vrsqrt.pop %v2250
    %v2253 = vmul.f32 %v2237, %v2251
    %v2254 = vmul.f32 %v2238, %v2252
    %v2255 = vmul.f32 %v2253, %v1279
    %v2256 = vmul.f32 %v2254, %v1279
    %v2258 = vsel %vm302, %v1281, 0
    %v2261 = vsel %vm302, %v1282, 0
    %v2264 = vsel %vm302, %v2255, 0
    %v2267 = vsel %vm302, %v2256, 0
    %2269 = vmatprep.subr.mxu0 0.0
    %2270 = vmatpush1.msra.mxu0 0.0
    %2271 = vmatprep.subr.mxu0 0.0
    %2272 = vmatpush1.msra.mxu0 0.0
    %2273 = vmatprep.subr.mxu0 0.0
    %2274 = vmatpush1.msra.mxu0 0.0
    %2275 = vmatprep.subr.mxu0 0.0
    %2276 = vmatpush1.msra.mxu0 0.0
    %2277 = vmatprep.subr.mxu0 0.0
    %2278 = vmatpush1.msra.mxu0 0.0
    %2279 = vmatprep.subr.mxu0 0.0
    %2280 = vmatpush1.msra.mxu0 0.0
    %2281 = vmatprep.subr.mxu0 0.0
    %2282 = vmatpush1.msra.mxu0 0.0
    %2283 = vmatprep.subr.mxu0 0.0
    %2284 = vmatpush1.msra.mxu0 0.0
    %2285 = vmatprep.subr.mxu0 0.0
    %2286 = vmatpush1.msra.mxu0 %v129
    %2287 = vmatprep.subr.mxu0 0.0
    %2288 = vmatpush1.msra.mxu0 %v128
    %2289 = vmatprep.subr.mxu0 0.0
    %2290 = vmatpush1.msra.mxu0 %v127
    %2291 = vmatprep.subr.mxu0 0.0
    %2292 = vmatpush1.msra.mxu0 %v126
    %2293 = vmatprep.subr.mxu0 0.0
    %2294 = vmatpush1.msra.mxu0 %v125
    %2295 = vmatprep.subr.mxu0 0.0
    %2296 = vmatpush1.msra.mxu0 %v124
    %2297 = vmatprep.subr.mxu0 0.0
    %2298 = vmatpush1.msra.mxu0 %v123
    %2299 = vmatprep.subr.mxu0 0.0
    %2300 = vmatpush1.msra.mxu0 %v122
    %2301 = vmatprep.subr.mxu0 0.0
    %2302 = vmatpush2.msra.mxu0 0.0
    %2303 = vmatprep.subr.mxu0 0.0
    %2304 = vmatpush2.msra.mxu0 0.0
    %2305 = vmatprep.subr.mxu0 0.0
    %2306 = vmatpush2.msra.mxu0 0.0
    %2307 = vmatprep.subr.mxu0 0.0
    %2308 = vmatpush2.msra.mxu0 0.0
    %2309 = vmatprep.subr.mxu0 0.0
    %2310 = vmatpush2.msra.mxu0 0.0
    %2311 = vmatprep.subr.mxu0 0.0
    %2312 = vmatpush2.msra.mxu0 0.0
    %2313 = vmatprep.subr.mxu0 0.0
    %2314 = vmatpush2.msra.mxu0 0.0
    %2315 = vmatprep.subr.mxu0 0.0
    %2316 = vmatpush2.msra.mxu0 0.0
    %2317 = vmatprep.subr.mxu0 0.0
    %2318 = vmatpush2.msra.mxu0 0.0
    %2319 = vmatprep.subr.mxu0 0.0
    %2320 = vmatpush2.msra.mxu0 0.0
    %2321 = vmatprep.subr.mxu0 0.0
    %2322 = vmatpush2.msra.mxu0 0.0
    %2323 = vmatprep.subr.mxu0 0.0
    %2324 = vmatpush2.msra.mxu0 0.0
    %2325 = vmatprep.subr.mxu0 0.0
    %2326 = vmatpush2.msra.mxu0 0.0
    %2327 = vmatprep.subr.mxu0 0.0
    %2328 = vmatpush2.msra.mxu0 0.0
    %2329 = vmatprep.subr.mxu0 0.0
    %2330 = vmatpush2.msra.mxu0 0.0
    %2331 = vmatprep.subr.mxu0 0.0
    %2332 = vmatpush2.msra.mxu0 0.0
    %2333 = vmatprep.mubr.f32.mxu0 0.0
    %2334 = vmatmul.mubr.f32.gmra.mxu0 %v2258
    %v2335 = vpop.f32.mrf.mxu0
    %v2336 = vadd.f32 0.0, %v2335
    %v2337 = vpop.f32.mrf.mxu0
    %2338 = vmatprep.mubr.f32.mxu0 0.0
    %2339 = vmatmul.mubr.f32.gmra.mxu0 %v2261
    %v2340 = vpop.f32.mrf.mxu0
    %v2341 = vadd.f32 0.0, %v2340
    %v2342 = vpop.f32.mrf.mxu0
    %2343 = vmatprep.mubr.f32.mxu0 0.0
    %2344 = vmatmul.mubr.f32.gmra.mxu0 %v2264
    %v2345 = vpop.f32.mrf.mxu0
    %v2346 = vadd.f32 0.0, %v2345
    %v2347 = vpop.f32.mrf.mxu0
    %2348 = vmatprep.mubr.f32.mxu0 0.0
    %2349 = vmatmul.mubr.f32.gmra.mxu0 %v2267
    %v2350 = vpop.f32.mrf.mxu0
    %v2351 = vadd.f32 0.0, %v2350
    %v2352 = vpop.f32.mrf.mxu0
    %2353 = vdwg.mxu0
    %2354 = vst.msk [vmem:[#allocation9] sm:$0xff] %vm144, %v2336
    %2355 = vst.msk [vmem:[#allocation9 + $0x8] sm:$0xff] %vm144, %v2341
    %s2356 = scalar_lea.vmem [#allocation9], 16
    %2357 = vst.msk [vmem:[%s2356] sm:$0xff] %vm144, %v2346
    %2358 = vst.msk [vmem:[%s2356 + $0x8] sm:$0xff] %vm144, %v2351
    %vm2359 = vcmp.gt.s32.totalorder %v96, %v99
    %vm2360 = vcmp.gt.s32.totalorder %v97, %v99
    %v2361 = vsel %vm2359, 1, 0
    %v2362 = vsel %vm2360, 1, 0
    %v2363 = vcvt.s32.f32 %v2361
    %v2364 = vcvt.s32.f32 %v2362
    %vm2365 = vcmp.gt.s32.totalorder %v99, %v96
    %vm2366 = vcmp.gt.s32.totalorder %v99, %v97
    %v2367 = vsel %vm2365, 1, 0
    %v2368 = vsel %vm2366, 1, 0
    %v2369 = vcvt.s32.f32 %v2367
    %v2370 = vcvt.s32.f32 %v2368
    %vm2371 = vcmp.ge.s32.totalorder %v99, %v96
    %vm2372 = vcmp.ge.s32.totalorder %v99, %v97
    %s2373 = scalar_lea.vmem %s2, 64
    %v2374 = vld [vmem:[%s2373] sm:$0xff]
    %v2375 = vld [vmem:[%s2373 + $0x8] sm:$0xff]
    %v2376 = vld [vmem:[%s2373 + $0x10] sm:$0xff]
    %v2377 = vld [vmem:[%s2373 + $0x18] sm:$0xff]
    %v2378 = vld [vmem:[%s2373 + $0x20] sm:$0xff]
    %v2379 = vld [vmem:[%s2373 + $0x28] sm:$0xff]
    %v2380 = vld [vmem:[%s2373 + $0x30] sm:$0xff]
    %v2381 = vld [vmem:[%s2373 + $0x38] sm:$0xff]
    %s2382 = scalar_lea.vmem %s9, 64
    %v2383 = vld [vmem:[%s2382] sm:$0xff]
    %v2384 = vld [vmem:[%s2382 + $0x8] sm:$0xff]
    %v2385 = vld [vmem:[%s2382 + $0x10] sm:$0xff]
    %v2386 = vld [vmem:[%s2382 + $0x18] sm:$0xff]
    %v2387 = vld [vmem:[%s2382 + $0x20] sm:$0xff]
    %v2388 = vld [vmem:[%s2382 + $0x28] sm:$0xff]
    %v2389 = vld [vmem:[%s2382 + $0x30] sm:$0xff]
    %v2390 = vld [vmem:[%s2382 + $0x38] sm:$0xff]
    %s2391 = scalar_lea.vmem [#allocation6], 4
    %v2392 = vld [vmem:[%s2391] sm:$0xf]
    %s2393 = scalar_lea.vmem %s4, 1
    %v2394 = vld [vmem:[%s2393] sm:$0x1]
    %s2395 = scalar_lea.vmem %s6, 1
    %v2396 = vld [vmem:[%s2395] sm:$0x1]
    %v2397 = vmul.f32 %v2396, 1.442695
    %v2398 = vpow.pop %v2397
    %v2399 = vsub.f32 0.0, %v2398
    %s2400 = scalar_lea.vmem %s5, 1
    %v2401 = vld [vmem:[%s2400] sm:$0x1]
    %s2402 = scalar_lea.vmem %s7, 1
    %v2403 = vld [vmem:[%s2402] sm:$0x1]
    %s2404 = scalar_lea.vmem %s8, 1
    %v2405 = vld [vmem:[%s2404] sm:$0x1]
    %v2406 = vld [vmem:[%s72] sm:$0xff]
    %v2407 = vld [vmem:[%s72 + $0x8] sm:$0xff]
    %s2408 = scalar_lea.vmem %s72, 16
    %v2409 = vld [vmem:[%s2408] sm:$0xff]
    %v2410 = vld [vmem:[%s2408 + $0x8] sm:$0xff]
    %v2412 = vsel %vm144, %v2406, 0
    %v2415 = vsel %vm144, %v2407, 0
    %v2418 = vsel %vm144, %v2409, 0
    %v2421 = vsel %vm144, %v2410, 0
    %2423 = vmatprep.subr.mxu0 0.0
    %2424 = vmatpush1.msra.mxu0 0.0
    %2425 = vmatprep.subr.mxu0 0.0
    %2426 = vmatpush1.msra.mxu0 0.0
    %2427 = vmatprep.subr.mxu0 0.0
    %2428 = vmatpush1.msra.mxu0 0.0
    %2429 = vmatprep.subr.mxu0 0.0
    %2430 = vmatpush1.msra.mxu0 0.0
    %2431 = vmatprep.subr.mxu0 0.0
    %2432 = vmatpush1.msra.mxu0 0.0
    %2433 = vmatprep.subr.mxu0 0.0
    %2434 = vmatpush1.msra.mxu0 0.0
    %2435 = vmatprep.subr.mxu0 0.0
    %2436 = vmatpush1.msra.mxu0 0.0
    %2437 = vmatprep.subr.mxu0 0.0
    %2438 = vmatpush1.msra.mxu0 0.0
    %2439 = vmatprep.subr.mxu0 0.0
    %2440 = vmatpush1.msra.mxu0 0.0
    %2441 = vmatprep.subr.mxu0 0.0
    %2442 = vmatpush1.msra.mxu0 0.0
    %2443 = vmatprep.subr.mxu0 0.0
    %2444 = vmatpush1.msra.mxu0 0.0
    %2445 = vmatprep.subr.mxu0 0.0
    %2446 = vmatpush1.msra.mxu0 0.0
    %2447 = vmatprep.subr.mxu0 %v2381
    %2448 = vmatpush1.msra.mxu0 %v2380
    %2449 = vmatprep.subr.mxu0 %v2379
    %2450 = vmatpush1.msra.mxu0 %v2378
    %2451 = vmatprep.subr.mxu0 %v2377
    %2452 = vmatpush1.msra.mxu0 %v2376
    %2453 = vmatprep.subr.mxu0 %v2375
    %2454 = vmatpush1.msra.mxu0 %v2374
    %2455 = vmatprep.subr.mxu0 0.0
    %2456 = vmatpush2.msra.mxu0 0.0
    %2457 = vmatprep.subr.mxu0 0.0
    %2458 = vmatpush2.msra.mxu0 0.0
    %2459 = vmatprep.subr.mxu0 0.0
    %2460 = vmatpush2.msra.mxu0 0.0
    %2461 = vmatprep.subr.mxu0 0.0
    %2462 = vmatpush2.msra.mxu0 0.0
    %2463 = vmatprep.subr.mxu0 0.0
    %2464 = vmatpush2.msra.mxu0 0.0
    %2465 = vmatprep.subr.mxu0 0.0
    %2466 = vmatpush2.msra.mxu0 0.0
    %2467 = vmatprep.subr.mxu0 0.0
    %2468 = vmatpush2.msra.mxu0 0.0
    %2469 = vmatprep.subr.mxu0 0.0
    %2470 = vmatpush2.msra.mxu0 0.0
    %2471 = vmatprep.subr.mxu0 0.0
    %2472 = vmatpush2.msra.mxu0 0.0
    %2473 = vmatprep.subr.mxu0 0.0
    %2474 = vmatpush2.msra.mxu0 0.0
    %2475 = vmatprep.subr.mxu0 0.0
    %2476 = vmatpush2.msra.mxu0 0.0
    %2477 = vmatprep.subr.mxu0 0.0
    %2478 = vmatpush2.msra.mxu0 0.0
    %2479 = vmatprep.subr.mxu0 0.0
    %2480 = vmatpush2.msra.mxu0 0.0
    %2481 = vmatprep.subr.mxu0 0.0
    %2482 = vmatpush2.msra.mxu0 0.0
    %2483 = vmatprep.subr.mxu0 0.0
    %2484 = vmatpush2.msra.mxu0 0.0
    %2485 = vmatprep.subr.mxu0 0.0
    %2486 = vmatpush2.msra.mxu0 0.0
    %2487 = vmatprep.mubr.f32.mxu0 0.0
    %2488 = vmatmul.mubr.f32.gmra.mxu0 %v2412
    %v2489 = vpop.f32.mrf.mxu0
    %v2490 = vadd.f32 0.0, %v2489
    %v2491 = vpop.f32.mrf.mxu0
    %v2492 = vadd.f32 0.0, %v2491
    %2493 = vmatprep.mubr.f32.mxu0 0.0
    %2494 = vmatmul.mubr.f32.gmra.mxu0 %v2415
    %v2495 = vpop.f32.mrf.mxu0
    %v2496 = vadd.f32 0.0, %v2495
    %v2497 = vpop.f32.mrf.mxu0
    %v2498 = vadd.f32 0.0, %v2497
    %2499 = vmatprep.mubr.f32.mxu0 0.0
    %2500 = vmatmul.mubr.f32.gmra.mxu0 %v2418
    %v2501 = vpop.f32.mrf.mxu0
    %v2502 = vadd.f32 0.0, %v2501
    %v2503 = vpop.f32.mrf.mxu0
    %v2504 = vadd.f32 0.0, %v2503
    %2505 = vmatprep.mubr.f32.mxu0 0.0
    %2506 = vmatmul.mubr.f32.gmra.mxu0 %v2421
    %v2507 = vpop.f32.mrf.mxu0
    %v2508 = vadd.f32 0.0, %v2507
    %v2509 = vpop.f32.mrf.mxu0
    %v2510 = vadd.f32 0.0, %v2509
    %2511 = vdwg.mxu0
    %v2513 = vlaneseq
    %v2514 = vshrl.u32 %v2513, 7
    %v2515 = vsub.s32 0, %v2514
    %v2516 = vrot.slane %v2401, %v2515
    %2517 = vrot.lane.b32.xlu0 %v2516, 32
    %v2518 = vpop.permute.xlu0 %2517
    %v2520 = vadd.f32 %v2492, %v2518
    %v2521 = vadd.f32 %v2498, %v2518
    %vm2522 = vcmp.gt.f32.partialorder %v2520, 20.0
    %vm2523 = vcmp.gt.f32.partialorder %v2521, 20.0
    %v2524 = vmin.f32 %v2520, 20.0
    %v2525 = vmin.f32 %v2521, 20.0
    %v2526 = vmul.f32 %v2524, 1.442695
    %v2527 = vpow.pop %v2526
    %v2528 = vmul.f32 %v2525, 1.442695
    %v2529 = vpow.pop %v2528
    %v2530 = vadd.f32 %v2527, 1.0
    %v2531 = vadd.f32 %v2529, 1.0
    %v2532 = vlog2.pop %v2530
    %v2533 = vmul.f32 %v2532, 0.6931472
    %v2534 = vlog2.pop %v2531
    %v2535 = vmul.f32 %v2534, 0.6931472
    %v2536 = vsel %vm2522, %v2520, %v2533
    %v2537 = vsel %vm2523, %v2521, %v2535
    %v2538 = vld [vmem:[#allocation5] sm:$0x7]
    %v2540 = vlaneseq
    %v2541 = vshrl.u32 %v2540, 7
    %v2542 = vsub.s32 0, %v2541
    %v2543 = vrot.slane %v2394, %v2542
    %2546 = vrot.lane.b32.xlu0 %v2538, 64
    %v2547 = vpop.permute.xlu0 %2546
    %v2548 = vlaneseq
    %v2549 = vshrl.u32 %v2548, 7
    %v2550 = vsub.s32 3, %v2549
    %v2551 = vrot.slane %v2392, %v2550
    %2556 = vrot.lane.b32.xlu0 %v2490, 64
    %v2557 = vpop.permute.xlu0 %2556
    %2558 = vrot.lane.b32.xlu0 %v2492, 64
    %v2559 = vpop.permute.xlu0 %2558
    %2560 = vrot.lane.b32.xlu0 %v2496, 64
    %v2561 = vpop.permute.xlu0 %2560
    %2562 = vrot.lane.b32.xlu0 %v2498, 64
    %v2563 = vpop.permute.xlu0 %2562
    %v2564 = vsel %vm302, %v2557, %v2559
    %v2565 = vsel %vm302, %v2561, %v2563
    %v2568 = vmul.f32 %v2551, %v2564
    %v2569 = vmul.f32 %v2551, %v2565
    %v2570 = vadd.f32 %v2543, %v2568
    %v2571 = vadd.f32 %v2543, %v2569
    %v2572 = vlaneseq
    %v2573 = vshrl.u32 %v2572, 7
    %v2574 = vsub.s32 2, %v2573
    %v2575 = vrot.slane %v2392, %v2574
    %v2576 = vrot.slane %v2490, 1
    %v2577 = vrot.slane %v2496, 1
    %v2578 = vsel %vm328, %v2576, %v2577
    %v2579 = vrot.slane %v2492, 1
    %v2580 = vrot.slane %v2498, 1
    %v2581 = vsel %vm328, %v2579, %v2580
    %v2582 = vrot.slane %v2547, 1
    %v2583 = vsel %vm328, %v2577, %v2582
    %v2584 = vsel %vm328, %v2580, %v2582
    %2585 = vrot.lane.b32.xlu0 %v2578, 64
    %v2586 = vpop.permute.xlu0 %2585
    %2587 = vrot.lane.b32.xlu0 %v2581, 64
    %v2588 = vpop.permute.xlu0 %2587
    %2589 = vrot.lane.b32.xlu0 %v2583, 64
    %v2590 = vpop.permute.xlu0 %2589
    %2591 = vrot.lane.b32.xlu0 %v2584, 64
    %v2592 = vpop.permute.xlu0 %2591
    %v2593 = vsel %vm302, %v2586, %v2588
    %v2594 = vsel %vm302, %v2590, %v2592
    %v2597 = vmul.f32 %v2575, %v2593
    %v2598 = vmul.f32 %v2575, %v2594
    %v2599 = vadd.f32 %v2570, %v2597
    %v2600 = vadd.f32 %v2571, %v2598
    %v2601 = vlaneseq
    %v2602 = vshrl.u32 %v2601, 7
    %v2603 = vsub.s32 1, %v2602
    %v2604 = vrot.slane %v2392, %v2603
    %v2605 = vrot.slane %v2490, 2
    %v2606 = vrot.slane %v2496, 2
    %v2607 = vsel %vm348, %v2605, %v2606
    %v2608 = vrot.slane %v2492, 2
    %v2609 = vrot.slane %v2498, 2
    %v2610 = vsel %vm348, %v2608, %v2609
    %v2611 = vrot.slane %v2547, 2
    %v2612 = vsel %vm348, %v2606, %v2611
    %v2613 = vsel %vm348, %v2609, %v2611
    %2614 = vrot.lane.b32.xlu0 %v2607, 64
    %v2615 = vpop.permute.xlu0 %2614
    %2616 = vrot.lane.b32.xlu0 %v2610, 64
    %v2617 = vpop.permute.xlu0 %2616
    %2618 = vrot.lane.b32.xlu0 %v2612, 64
    %v2619 = vpop.permute.xlu0 %2618
    %2620 = vrot.lane.b32.xlu0 %v2613, 64
    %v2621 = vpop.permute.xlu0 %2620
    %v2622 = vsel %vm302, %v2615, %v2617
    %v2623 = vsel %vm302, %v2619, %v2621
    %v2626 = vmul.f32 %v2604, %v2622
    %v2627 = vmul.f32 %v2604, %v2623
    %v2628 = vadd.f32 %v2599, %v2626
    %v2629 = vadd.f32 %v2600, %v2627
    %v2630 = vlaneseq
    %v2631 = vshrl.u32 %v2630, 7
    %v2632 = vsub.s32 0, %v2631
    %v2633 = vrot.slane %v2392, %v2632
    %v2634 = vrot.slane %v2490, 3
    %v2635 = vrot.slane %v2496, 3
    %v2636 = vsel %vm368, %v2634, %v2635
    %v2637 = vrot.slane %v2492, 3
    %v2638 = vrot.slane %v2498, 3
    %v2639 = vsel %vm368, %v2637, %v2638
    %v2640 = vrot.slane %v2547, 3
    %v2641 = vsel %vm368, %v2635, %v2640
    %v2642 = vsel %vm368, %v2638, %v2640
    %2643 = vrot.lane.b32.xlu0 %v2636, 64
    %v2644 = vpop.permute.xlu0 %2643
    %2645 = vrot.lane.b32.xlu0 %v2639, 64
    %v2646 = vpop.permute.xlu0 %2645
    %2647 = vrot.lane.b32.xlu0 %v2641, 64
    %v2648 = vpop.permute.xlu0 %2647
    %2649 = vrot.lane.b32.xlu0 %v2642, 64
    %v2650 = vpop.permute.xlu0 %2649
    %v2651 = vsel %vm302, %v2644, %v2646
    %v2652 = vsel %vm302, %v2648, %v2650
    %v2655 = vmul.f32 %v2633, %v2651
    %v2656 = vmul.f32 %v2633, %v2652
    %v2657 = vadd.f32 %v2628, %v2655
    %v2658 = vadd.f32 %v2629, %v2656
    %vm2659 = vcmask 780288
    %2660 = vst.msk [vmem:[#allocation5] sm:$0x7] %vm2659, %v2564
    %v2661 = vsub.f32 0.0, %v2657
    %v2662 = vsub.f32 0.0, %v2658
    %v2663 = vmul.f32 %v2661, 1.442695
    %v2664 = vpow.pop %v2663
    %v2665 = vmul.f32 %v2662, 1.442695
    %v2666 = vpow.pop %v2665
    %v2667 = vadd.f32 %v2664, 1.0
    %v2668 = vadd.f32 %v2666, 1.0
    %v2669 = vrcp.pop %v2667
    %v2670 = vmul.f32 1.0, %v2669
    %v2671 = vrcp.pop %v2668
    %v2672 = vmul.f32 1.0, %v2671
    %v2673 = vmul.f32 %v2657, %v2670
    %v2674 = vmul.f32 %v2658, %v2672
    %v2676 = vlaneseq
    %v2677 = vshrl.u32 %v2676, 7
    %v2678 = vsub.s32 0, %v2677
    %v2679 = vrot.slane %v2399, %v2678
    %2680 = vrot.lane.b32.xlu0 %v2679, 32
    %v2681 = vpop.permute.xlu0 %2680
    %v2683 = vmul.f32 %v2536, %v2681
    %v2684 = vmul.f32 %v2537, %v2681
    %v2685 = vsel %vm410, %v2683, 0.0
    %v2686 = vsel %vm410, %v2684, 0.0
    %v2687 = vadd.f32 %v2685, %v2686
    %v2688 = vrot.slane %v2687, 4
    %v2689 = vadd.f32 %v2687, %v2688
    %v2690 = vrot.slane %v2689, 2
    %v2691 = vadd.f32 %v2689, %v2690
    %v2692 = vrot.slane %v2691, 1
    %v2693 = vadd.f32 %v2691, %v2692
    %2696 = vrot.lane.b32.xlu0 %v2683, 96
    %v2697 = vpop.permute.xlu0 %2696
    %2698 = vrot.lane.b32.xlu0 %v2684, 96
    %v2699 = vpop.permute.xlu0 %2698
    %v2703 = vsel %vm428, %v2363, 0
    %v2706 = vsel %vm428, %v2364, 0
    %2708 = vmatprep.subr.mxu0 0.0
    %2709 = vmatpush1.msra.mxu0 0.0
    %2710 = vmatprep.subr.mxu0 0.0
    %2711 = vmatpush1.msra.mxu0 0.0
    %2712 = vmatprep.subr.mxu0 0.0
    %2713 = vmatpush1.msra.mxu0 0.0
    %2714 = vmatprep.subr.mxu0 0.0
    %2715 = vmatpush1.msra.mxu0 0.0
    %2716 = vmatprep.subr.mxu0 0.0
    %2717 = vmatpush1.msra.mxu0 0.0
    %2718 = vmatprep.subr.mxu0 0.0
    %2719 = vmatpush1.msra.mxu0 0.0
    %2720 = vmatprep.subr.mxu0 0.0
    %2721 = vmatpush1.msra.mxu0 0.0
    %2722 = vmatprep.subr.mxu0 0.0
    %2723 = vmatpush1.msra.mxu0 0.0
    %2724 = vmatprep.subr.mxu0 0.0
    %2725 = vmatpush1.msra.mxu0 0.0
    %2726 = vmatprep.subr.mxu0 0.0
    %2727 = vmatpush1.msra.mxu0 0.0
    %2728 = vmatprep.subr.mxu0 0.0
    %2729 = vmatpush1.msra.mxu0 0.0
    %2730 = vmatprep.subr.mxu0 0.0
    %2731 = vmatpush1.msra.mxu0 0.0
    %2732 = vmatprep.subr.mxu0 0.0
    %2733 = vmatpush1.msra.mxu0 0.0
    %2734 = vmatprep.subr.mxu0 0.0
    %2735 = vmatpush1.msra.mxu0 0.0
    %2736 = vmatprep.subr.mxu0 0.0
    %2737 = vmatpush1.msra.mxu0 %v2699
    %2738 = vmatprep.subr.mxu0 0.0
    %2739 = vmatpush1.msra.mxu0 %v2697
    %2740 = vmatprep.subr.mxu0 0.0
    %2741 = vmatpush2.msra.mxu0 0.0
    %2742 = vmatprep.subr.mxu0 0.0
    %2743 = vmatpush2.msra.mxu0 0.0
    %2744 = vmatprep.subr.mxu0 0.0
    %2745 = vmatpush2.msra.mxu0 0.0
    %2746 = vmatprep.subr.mxu0 0.0
    %2747 = vmatpush2.msra.mxu0 0.0
    %2748 = vmatprep.subr.mxu0 0.0
    %2749 = vmatpush2.msra.mxu0 0.0
    %2750 = vmatprep.subr.mxu0 0.0
    %2751 = vmatpush2.msra.mxu0 0.0
    %2752 = vmatprep.subr.mxu0 0.0
    %2753 = vmatpush2.msra.mxu0 0.0
    %2754 = vmatprep.subr.mxu0 0.0
    %2755 = vmatpush2.msra.mxu0 0.0
    %2756 = vmatprep.subr.mxu0 0.0
    %2757 = vmatpush2.msra.mxu0 0.0
    %2758 = vmatprep.subr.mxu0 0.0
    %2759 = vmatpush2.msra.mxu0 0.0
    %2760 = vmatprep.subr.mxu0 0.0
    %2761 = vmatpush2.msra.mxu0 0.0
    %2762 = vmatprep.subr.mxu0 0.0
    %2763 = vmatpush2.msra.mxu0 0.0
    %2764 = vmatprep.subr.mxu0 0.0
    %2765 = vmatpush2.msra.mxu0 0.0
    %2766 = vmatprep.subr.mxu0 0.0
    %2767 = vmatpush2.msra.mxu0 0.0
    %2768 = vmatprep.subr.mxu0 0.0
    %2769 = vmatpush2.msra.mxu0 0.0
    %2770 = vmatprep.subr.mxu0 0.0
    %2771 = vmatpush2.msra.mxu0 0.0
    %2772 = vmatprep.mubr.f32.mxu0 0.0
    %2773 = vmatmul.mubr.f32.gmra.mxu0 %v2703
    %v2774 = vpop.f32.mrf.mxu0
    %v2775 = vadd.f32 0.0, %v2774
    %v2776 = vpop.f32.mrf.mxu0
    %2777 = vmatprep.mubr.f32.mxu0 0.0
    %2778 = vmatmul.mubr.f32.gmra.mxu0 %v2706
    %v2779 = vpop.f32.mrf.mxu0
    %v2780 = vadd.f32 0.0, %v2779
    %v2781 = vpop.f32.mrf.mxu0
    %2782 = vdwg.mxu0
    %2783 = vxpose.xlu0.b32.start [1/16] %v2697, 128
    %2784 = vxpose.xlu0.b32.cont [2/16] %v2699, 128
    %2785 = vxpose.xlu0.b32.cont [3/16] 0.0, 128
    %2786 = vxpose.xlu0.b32.cont [4/16] 0.0, 128
    %2787 = vxpose.xlu0.b32.cont [5/16] 0.0, 128
    %2788 = vxpose.xlu0.b32.cont [6/16] 0.0, 128
    %2789 = vxpose.xlu0.b32.cont [7/16] 0.0, 128
    %2790 = vxpose.xlu0.b32.cont [8/16] 0.0, 128
    %2791 = vxpose.xlu0.b32.cont [9/16] 0.0, 128
    %2792 = vxpose.xlu0.b32.cont [10/16] 0.0, 128
    %2793 = vxpose.xlu0.b32.cont [11/16] 0.0, 128
    %2794 = vxpose.xlu0.b32.cont [12/16] 0.0, 128
    %2795 = vxpose.xlu0.b32.cont [13/16] 0.0, 128
    %2796 = vxpose.xlu0.b32.cont [14/16] 0.0, 128
    %2797 = vxpose.xlu0.b32.cont [15/16] 0.0, 128
    %2798 = vxpose.xlu0.b32.end [16/16] 0.0, 128
    %v2799 = vpop.trf.xlu0
    %v2800 = vpop.trf.xlu0
    %v2801 = vpop.trf.xlu0
    %v2802 = vpop.trf.xlu0
    %v2803 = vpop.trf.xlu0
    %v2804 = vpop.trf.xlu0
    %v2805 = vpop.trf.xlu0
    %v2806 = vpop.trf.xlu0
    %v2807 = vpop.trf.xlu0
    %v2808 = vpop.trf.xlu0
    %v2809 = vpop.trf.xlu0
    %v2810 = vpop.trf.xlu0
    %v2811 = vpop.trf.xlu0
    %v2812 = vpop.trf.xlu0
    %v2813 = vpop.trf.xlu0
    %v2814 = vpop.trf.xlu0
    %v2816 = vsel %vm428, %v2799, 0
    %2818 = vmatprep.subr.mxu0 0.0
    %2819 = vmatpush1.msra.mxu0 0.0
    %2820 = vmatprep.subr.mxu0 0.0
    %2821 = vmatpush1.msra.mxu0 0.0
    %2822 = vmatprep.subr.mxu0 0.0
    %2823 = vmatpush1.msra.mxu0 0.0
    %2824 = vmatprep.subr.mxu0 0.0
    %2825 = vmatpush1.msra.mxu0 0.0
    %2826 = vmatprep.subr.mxu0 0.0
    %2827 = vmatpush1.msra.mxu0 0.0
    %2828 = vmatprep.subr.mxu0 0.0
    %2829 = vmatpush1.msra.mxu0 0.0
    %2830 = vmatprep.subr.mxu0 0.0
    %2831 = vmatpush1.msra.mxu0 0.0
    %2832 = vmatprep.subr.mxu0 0.0
    %2833 = vmatpush1.msra.mxu0 0.0
    %2834 = vmatprep.subr.mxu0 0.0
    %2835 = vmatpush1.msra.mxu0 0.0
    %2836 = vmatprep.subr.mxu0 0.0
    %2837 = vmatpush1.msra.mxu0 0.0
    %2838 = vmatprep.subr.mxu0 0.0
    %2839 = vmatpush1.msra.mxu0 0.0
    %2840 = vmatprep.subr.mxu0 0.0
    %2841 = vmatpush1.msra.mxu0 0.0
    %2842 = vmatprep.subr.mxu0 0.0
    %2843 = vmatpush1.msra.mxu0 0.0
    %2844 = vmatprep.subr.mxu0 0.0
    %2845 = vmatpush1.msra.mxu0 0.0
    %2846 = vmatprep.subr.mxu0 0.0
    %2847 = vmatpush1.msra.mxu0 %v2370
    %2848 = vmatprep.subr.mxu0 0.0
    %2849 = vmatpush1.msra.mxu0 %v2369
    %2850 = vmatprep.subr.mxu0 0.0
    %2851 = vmatpush2.msra.mxu0 0.0
    %2852 = vmatprep.subr.mxu0 0.0
    %2853 = vmatpush2.msra.mxu0 0.0
    %2854 = vmatprep.subr.mxu0 0.0
    %2855 = vmatpush2.msra.mxu0 0.0
    %2856 = vmatprep.subr.mxu0 0.0
    %2857 = vmatpush2.msra.mxu0 0.0
    %2858 = vmatprep.subr.mxu0 0.0
    %2859 = vmatpush2.msra.mxu0 0.0
    %2860 = vmatprep.subr.mxu0 0.0
    %2861 = vmatpush2.msra.mxu0 0.0
    %2862 = vmatprep.subr.mxu0 0.0
    %2863 = vmatpush2.msra.mxu0 0.0
    %2864 = vmatprep.subr.mxu0 0.0
    %2865 = vmatpush2.msra.mxu0 0.0
    %2866 = vmatprep.subr.mxu0 0.0
    %2867 = vmatpush2.msra.mxu0 0.0
    %2868 = vmatprep.subr.mxu0 0.0
    %2869 = vmatpush2.msra.mxu0 0.0
    %2870 = vmatprep.subr.mxu0 0.0
    %2871 = vmatpush2.msra.mxu0 0.0
    %2872 = vmatprep.subr.mxu0 0.0
    %2873 = vmatpush2.msra.mxu0 0.0
    %2874 = vmatprep.subr.mxu0 0.0
    %2875 = vmatpush2.msra.mxu0 0.0
    %2876 = vmatprep.subr.mxu0 0.0
    %2877 = vmatpush2.msra.mxu0 0.0
    %2878 = vmatprep.subr.mxu0 0.0
    %2879 = vmatpush2.msra.mxu0 0.0
    %2880 = vmatprep.subr.mxu0 0.0
    %2881 = vmatpush2.msra.mxu0 0.0
    %2882 = vmatprep.mubr.f32.mxu0 0.0
    %2883 = vmatmul.mubr.f32.gmra.mxu0 %v2816
    %v2884 = vpop.f32.mrf.mxu0
    %v2885 = vadd.f32 0.0, %v2884
    %v2886 = vpop.f32.mrf.mxu0
    %2887 = vdwg.mxu0
    %2890 = vrot.lane.b32.xlu0 %v2673, 48
    %v2891 = vpop.permute.xlu0 %2890
    %2892 = vrot.lane.b32.xlu0 %v2674, 48
    %v2893 = vpop.permute.xlu0 %2892
    %2894 = vrot.lane.b32.xlu0 %v2673, 64
    %v2895 = vpop.permute.xlu0 %2894
    %2896 = vrot.lane.b32.xlu0 %v2674, 64
    %v2897 = vpop.permute.xlu0 %2896
    %v2898 = vsel %vm428, %v2891, 0
    %v2900 = vsel %vm428, %v2893, 0
    %v2902 = vsel %vm428, %v2895, 0
    %v2904 = vsel %vm428, %v2897, 0
    %2906 = vmatprep.subr.mxu0 0.0
    %2907 = vmatpush1.xpose.msra.mxu0 0.0
    %2908 = vmatprep.subr.mxu0 0.0
    %2909 = vmatpush1.xpose.msra.mxu0 0.0
    %2910 = vmatprep.subr.mxu0 0.0
    %2911 = vmatpush1.xpose.msra.mxu0 0.0
    %2912 = vmatprep.subr.mxu0 0.0
    %2913 = vmatpush1.xpose.msra.mxu0 0.0
    %2914 = vmatprep.subr.mxu0 0.0
    %2915 = vmatpush1.xpose.msra.mxu0 0.0
    %2916 = vmatprep.subr.mxu0 0.0
    %2917 = vmatpush1.xpose.msra.mxu0 0.0
    %2918 = vmatprep.subr.mxu0 0.0
    %2919 = vmatpush1.xpose.msra.mxu0 0.0
    %2920 = vmatprep.subr.mxu0 0.0
    %2921 = vmatpush1.xpose.msra.mxu0 0.0
    %2922 = vmatprep.subr.mxu0 0.0
    %2923 = vmatpush1.xpose.msra.mxu0 0.0
    %2924 = vmatprep.subr.mxu0 0.0
    %2925 = vmatpush1.xpose.msra.mxu0 0.0
    %2926 = vmatprep.subr.mxu0 0.0
    %2927 = vmatpush1.xpose.msra.mxu0 0.0
    %2928 = vmatprep.subr.mxu0 0.0
    %2929 = vmatpush1.xpose.msra.mxu0 0.0
    %2930 = vmatprep.subr.mxu0 0.0
    %2931 = vmatpush1.xpose.msra.mxu0 0.0
    %2932 = vmatprep.subr.mxu0 0.0
    %2933 = vmatpush1.xpose.msra.mxu0 0.0
    %2934 = vmatprep.subr.mxu0 0.0
    %2935 = vmatpush1.xpose.msra.mxu0 %v2904
    %2936 = vmatprep.subr.mxu0 0.0
    %2937 = vmatpush1.xpose.msra.mxu0 %v2902
    %2938 = vmatprep.subr.mxu0 0.0
    %2939 = vmatpush2.xpose.msra.mxu0 0.0
    %2940 = vmatprep.subr.mxu0 0.0
    %2941 = vmatpush2.xpose.msra.mxu0 0.0
    %2942 = vmatprep.subr.mxu0 0.0
    %2943 = vmatpush2.xpose.msra.mxu0 0.0
    %2944 = vmatprep.subr.mxu0 0.0
    %2945 = vmatpush2.xpose.msra.mxu0 0.0
    %2946 = vmatprep.subr.mxu0 0.0
    %2947 = vmatpush2.xpose.msra.mxu0 0.0
    %2948 = vmatprep.subr.mxu0 0.0
    %2949 = vmatpush2.xpose.msra.mxu0 0.0
    %2950 = vmatprep.subr.mxu0 0.0
    %2951 = vmatpush2.xpose.msra.mxu0 0.0
    %2952 = vmatprep.subr.mxu0 0.0
    %2953 = vmatpush2.xpose.msra.mxu0 0.0
    %2954 = vmatprep.subr.mxu0 0.0
    %2955 = vmatpush2.xpose.msra.mxu0 0.0
    %2956 = vmatprep.subr.mxu0 0.0
    %2957 = vmatpush2.xpose.msra.mxu0 0.0
    %2958 = vmatprep.subr.mxu0 0.0
    %2959 = vmatpush2.xpose.msra.mxu0 0.0
    %2960 = vmatprep.subr.mxu0 0.0
    %2961 = vmatpush2.xpose.msra.mxu0 0.0
    %2962 = vmatprep.subr.mxu0 0.0
    %2963 = vmatpush2.xpose.msra.mxu0 0.0
    %2964 = vmatprep.subr.mxu0 0.0
    %2965 = vmatpush2.xpose.msra.mxu0 0.0
    %2966 = vmatprep.subr.mxu0 0.0
    %2967 = vmatpush2.xpose.msra.mxu0 0.0
    %2968 = vmatprep.subr.mxu0 0.0
    %2969 = vmatpush2.xpose.msra.mxu0 0.0
    %2970 = vmatprep.mubr.f32.mxu0 0.0
    %2971 = vmatmul.mubr.f32.gmra.mxu0 %v2898
    %v2972 = vpop.f32.mrf.mxu0
    %v2973 = vadd.f32 0.0, %v2972
    %v2974 = vpop.f32.mrf.mxu0
    %2975 = vmatprep.mubr.f32.mxu0 0.0
    %2976 = vmatmul.mubr.f32.gmra.mxu0 %v2900
    %v2977 = vpop.f32.mrf.mxu0
    %v2978 = vadd.f32 0.0, %v2977
    %v2979 = vpop.f32.mrf.mxu0
    %2980 = vdwg.mxu0
    %v2981 = vld [vmem:[#allocation4] sm:$0xff]
    %v2982 = vld [vmem:[#allocation4 + $0x8] sm:$0xff]
    %2983 = vmatprep.subr.mxu0 0.0
    %2984 = vmatpush1.msra.mxu0 0.0
    %2985 = vmatprep.subr.mxu0 0.0
    %2986 = vmatpush1.msra.mxu0 0.0
    %2987 = vmatprep.subr.mxu0 0.0
    %2988 = vmatpush1.msra.mxu0 0.0
    %2989 = vmatprep.subr.mxu0 0.0
    %2990 = vmatpush1.msra.mxu0 0.0
    %2991 = vmatprep.subr.mxu0 0.0
    %2992 = vmatpush1.msra.mxu0 0.0
    %2993 = vmatprep.subr.mxu0 0.0
    %2994 = vmatpush1.msra.mxu0 0.0
    %2995 = vmatprep.subr.mxu0 0.0
    %2996 = vmatpush1.msra.mxu0 0.0
    %2997 = vmatprep.subr.mxu0 0.0
    %2998 = vmatpush1.msra.mxu0 0.0
    %2999 = vmatprep.subr.mxu0 0.0
    %3000 = vmatpush1.msra.mxu0 0.0
    %3001 = vmatprep.subr.mxu0 0.0
    %3002 = vmatpush1.msra.mxu0 0.0
    %3003 = vmatprep.subr.mxu0 0.0
    %3004 = vmatpush1.msra.mxu0 0.0
    %3005 = vmatprep.subr.mxu0 0.0
    %3006 = vmatpush1.msra.mxu0 0.0
    %3007 = vmatprep.subr.mxu0 0.0
    %3008 = vmatpush1.msra.mxu0 0.0
    %3009 = vmatprep.subr.mxu0 0.0
    %3010 = vmatpush1.msra.mxu0 0.0
    %3011 = vmatprep.subr.mxu0 0.0
    %3012 = vmatpush1.msra.mxu0 %v2982
    %3013 = vmatprep.subr.mxu0 0.0
    %3014 = vmatpush1.msra.mxu0 %v2981
    %3015 = vmatprep.subr.mxu0 0.0
    %3016 = vmatpush2.msra.mxu0 0.0
    %3017 = vmatprep.subr.mxu0 0.0
    %3018 = vmatpush2.msra.mxu0 0.0
    %3019 = vmatprep.subr.mxu0 0.0
    %3020 = vmatpush2.msra.mxu0 0.0
    %3021 = vmatprep.subr.mxu0 0.0
    %3022 = vmatpush2.msra.mxu0 0.0
    %3023 = vmatprep.subr.mxu0 0.0
    %3024 = vmatpush2.msra.mxu0 0.0
    %3025 = vmatprep.subr.mxu0 0.0
    %3026 = vmatpush2.msra.mxu0 0.0
    %3027 = vmatprep.subr.mxu0 0.0
    %3028 = vmatpush2.msra.mxu0 0.0
    %3029 = vmatprep.subr.mxu0 0.0
    %3030 = vmatpush2.msra.mxu0 0.0
    %3031 = vmatprep.subr.mxu0 0.0
    %3032 = vmatpush2.msra.mxu0 0.0
    %3033 = vmatprep.subr.mxu0 0.0
    %3034 = vmatpush2.msra.mxu0 0.0
    %3035 = vmatprep.subr.mxu0 0.0
    %3036 = vmatpush2.msra.mxu0 0.0
    %3037 = vmatprep.subr.mxu0 0.0
    %3038 = vmatpush2.msra.mxu0 0.0
    %3039 = vmatprep.subr.mxu0 0.0
    %3040 = vmatpush2.msra.mxu0 0.0
    %3041 = vmatprep.subr.mxu0 0.0
    %3042 = vmatpush2.msra.mxu0 0.0
    %3043 = vmatprep.subr.mxu0 0.0
    %3044 = vmatpush2.msra.mxu0 0.0
    %3045 = vmatprep.subr.mxu0 0.0
    %3046 = vmatpush2.msra.mxu0 0.0
    %3047 = vmatprep.mubr.f32.mxu0 0.0
    %3048 = vmatmul.mubr.f32.gmra.mxu0 %v2898
    %v3049 = vpop.f32.mrf.mxu0
    %v3050 = vadd.f32 0.0, %v3049
    %v3051 = vpop.f32.mrf.mxu0
    %3052 = vmatprep.mubr.f32.mxu0 0.0
    %3053 = vmatmul.mubr.f32.gmra.mxu0 %v2900
    %v3054 = vpop.f32.mrf.mxu0
    %v3055 = vadd.f32 0.0, %v3054
    %v3056 = vpop.f32.mrf.mxu0
    %3057 = vdwg.mxu0
    %3059 = vset.pattern.permute.xlu0 32
    %3060 = vperm.xlu0 %3059, %v2536
    %v3061 = vpop.permute.xlu0 %3060
    %3064 = vset.pattern.permute.xlu0 32
    %3065 = vperm.xlu0 %3064, %v2537
    %v3066 = vpop.permute.xlu0 %3065
    %3068 = vset.pattern.permute.xlu0 33
    %3069 = vperm.xlu0 %3068, %v2536
    %v3070 = vpop.permute.xlu0 %3069
    %3072 = vset.pattern.permute.xlu0 33
    %3073 = vperm.xlu0 %3072, %v2537
    %v3074 = vpop.permute.xlu0 %3073
    %v3076 = vsel %vm144, %v3061, %v3070
    %v3077 = vsel %vm144, %v3066, %v3074
    %v3078 = vmul.f32 %v3076, %v2673
    %v3079 = vmul.f32 %v3077, %v2674
    %3082 = vrot.lane.b32.xlu0 %v2775, 32
    %v3083 = vpop.permute.xlu0 %3082
    %3084 = vrot.lane.b32.xlu0 %v2780, 32
    %v3085 = vpop.permute.xlu0 %3084
    %v3088 = vsub.f32 %v2693, %v3083
    %v3089 = vsub.f32 %v2693, %v3085
    %v3090 = vmul.f32 %v3088, 1.442695
    %v3091 = vpow.pop %v3090
    %v3092 = vmul.f32 %v3089, 1.442695
    %v3093 = vpow.pop %v3092
    %3095 = vset.pattern.permute.xlu0 32
    %3096 = vperm.xlu0 %3095, %v3091
    %v3097 = vpop.permute.xlu0 %3096
    %3100 = vset.pattern.permute.xlu0 32
    %3101 = vperm.xlu0 %3100, %v3093
    %v3102 = vpop.permute.xlu0 %3101
    %3104 = vset.pattern.permute.xlu0 33
    %3105 = vperm.xlu0 %3104, %v3091
    %v3106 = vpop.permute.xlu0 %3105
    %3108 = vset.pattern.permute.xlu0 33
    %3109 = vperm.xlu0 %3108, %v3093
    %v3110 = vpop.permute.xlu0 %3109
    %v3112 = vsel %vm144, %v3097, %v3106
    %v3113 = vsel %vm144, %v3102, %v3110
    %v3114 = vmul.f32 %v2775, 1.442695
    %v3115 = vpow.pop %v3114
    %v3116 = vmul.f32 %v2780, 1.442695
    %v3117 = vpow.pop %v3116
    %3119 = vset.pattern.permute.xlu0 0
    %3120 = vperm.xlu0 %3119, %v3115
    %v3121 = vpop.permute.xlu0 %3120
    %3124 = vset.pattern.permute.xlu0 0
    %3125 = vperm.xlu0 %3124, %v3117
    %v3126 = vpop.permute.xlu0 %3125
    %3128 = vset.pattern.permute.xlu0 1
    %3129 = vperm.xlu0 %3128, %v3115
    %v3130 = vpop.permute.xlu0 %3129
    %3132 = vset.pattern.permute.xlu0 1
    %3133 = vperm.xlu0 %3132, %v3117
    %v3134 = vpop.permute.xlu0 %3133
    %v3136 = vsel %vm144, %v3121, %v3130
    %v3137 = vsel %vm144, %v3126, %v3134
    %v3138 = vmul.f32 %v2693, 1.442695
    %v3139 = vpow.pop %v3138
    %3141 = vset.pattern.permute.xlu0 32
    %3142 = vperm.xlu0 %3141, %v3139
    %v3143 = vpop.permute.xlu0 %3142
    %3145 = vset.pattern.permute.xlu0 33
    %3146 = vperm.xlu0 %3145, %v3139
    %v3147 = vpop.permute.xlu0 %3146
    %v3149 = vsel %vm144, %v3143, %v3147
    %3150 = vset.pattern.permute.xlu0 0
    %3151 = vperm.xlu0 %3150, %v2775
    %v3152 = vpop.permute.xlu0 %3151
    %3154 = vset.pattern.permute.xlu0 0
    %3155 = vperm.xlu0 %3154, %v2780
    %v3156 = vpop.permute.xlu0 %3155
    %v3158 = vlaneseq
    %v3159 = vshrl.u32 %v3158, 7
    %v3160 = vsub.s32 0, %v3159
    %v3161 = vrot.slane %v2885, %v3160
    %v3162 = vsub.f32 %v3152, %v3161
    %v3163 = vsub.f32 %v3156, %v3161
    %v3164 = vsub.f32 0.0, %v3162
    %v3165 = vsub.f32 0.0, %v3163
    %v3166 = vsel %vm2371, %v3164, -1e+30
    %v3167 = vsel %vm2372, %v3165, -1e+30
    %v3168 = vmul.f32 %v3166, 1.442695
    %v3169 = vpow.pop %v3168
    %v3170 = vmul.f32 %v3167, 1.442695
    %v3171 = vpow.pop %v3170
    %v3172 = vmul.f32 %v2973, %v3169
    %v3173 = vmul.f32 %v2978, %v3171
    %v3175 = vsel %vm428, %v3172, 0
    %v3178 = vsel %vm428, %v3173, 0
    %3180 = vmatprep.subr.mxu0 0.0
    %3181 = vmatpush1.msra.mxu0 0.0
    %3182 = vmatprep.subr.mxu0 0.0
    %3183 = vmatpush1.msra.mxu0 0.0
    %3184 = vmatprep.subr.mxu0 0.0
    %3185 = vmatpush1.msra.mxu0 0.0
    %3186 = vmatprep.subr.mxu0 0.0
    %3187 = vmatpush1.msra.mxu0 0.0
    %3188 = vmatprep.subr.mxu0 0.0
    %3189 = vmatpush1.msra.mxu0 0.0
    %3190 = vmatprep.subr.mxu0 0.0
    %3191 = vmatpush1.msra.mxu0 0.0
    %3192 = vmatprep.subr.mxu0 0.0
    %3193 = vmatpush1.msra.mxu0 0.0
    %3194 = vmatprep.subr.mxu0 0.0
    %3195 = vmatpush1.msra.mxu0 0.0
    %3196 = vmatprep.subr.mxu0 0.0
    %3197 = vmatpush1.msra.mxu0 0.0
    %3198 = vmatprep.subr.mxu0 0.0
    %3199 = vmatpush1.msra.mxu0 0.0
    %3200 = vmatprep.subr.mxu0 0.0
    %3201 = vmatpush1.msra.mxu0 0.0
    %3202 = vmatprep.subr.mxu0 0.0
    %3203 = vmatpush1.msra.mxu0 0.0
    %3204 = vmatprep.subr.mxu0 0.0
    %3205 = vmatpush1.msra.mxu0 0.0
    %3206 = vmatprep.subr.mxu0 0.0
    %3207 = vmatpush1.msra.mxu0 0.0
    %3208 = vmatprep.subr.mxu0 0.0
    %3209 = vmatpush1.msra.mxu0 %v3079
    %3210 = vmatprep.subr.mxu0 0.0
    %3211 = vmatpush1.msra.mxu0 %v3078
    %3212 = vmatprep.subr.mxu0 0.0
    %3213 = vmatpush2.msra.mxu0 0.0
    %3214 = vmatprep.subr.mxu0 0.0
    %3215 = vmatpush2.msra.mxu0 0.0
    %3216 = vmatprep.subr.mxu0 0.0
    %3217 = vmatpush2.msra.mxu0 0.0
    %3218 = vmatprep.subr.mxu0 0.0
    %3219 = vmatpush2.msra.mxu0 0.0
    %3220 = vmatprep.subr.mxu0 0.0
    %3221 = vmatpush2.msra.mxu0 0.0
    %3222 = vmatprep.subr.mxu0 0.0
    %3223 = vmatpush2.msra.mxu0 0.0
    %3224 = vmatprep.subr.mxu0 0.0
    %3225 = vmatpush2.msra.mxu0 0.0
    %3226 = vmatprep.subr.mxu0 0.0
    %3227 = vmatpush2.msra.mxu0 0.0
    %3228 = vmatprep.subr.mxu0 0.0
    %3229 = vmatpush2.msra.mxu0 0.0
    %3230 = vmatprep.subr.mxu0 0.0
    %3231 = vmatpush2.msra.mxu0 0.0
    %3232 = vmatprep.subr.mxu0 0.0
    %3233 = vmatpush2.msra.mxu0 0.0
    %3234 = vmatprep.subr.mxu0 0.0
    %3235 = vmatpush2.msra.mxu0 0.0
    %3236 = vmatprep.subr.mxu0 0.0
    %3237 = vmatpush2.msra.mxu0 0.0
    %3238 = vmatprep.subr.mxu0 0.0
    %3239 = vmatpush2.msra.mxu0 0.0
    %3240 = vmatprep.subr.mxu0 0.0
    %3241 = vmatpush2.msra.mxu0 0.0
    %3242 = vmatprep.subr.mxu0 0.0
    %3243 = vmatpush2.msra.mxu0 0.0
    %3244 = vmatprep.mubr.f32.mxu0 0.0
    %3245 = vmatmul.mubr.f32.gmra.mxu0 %v3175
    %v3246 = vpop.f32.mrf.mxu0
    %v3247 = vadd.f32 0.0, %v3246
    %v3248 = vpop.f32.mrf.mxu0
    %3249 = vmatprep.mubr.f32.mxu0 0.0
    %3250 = vmatmul.mubr.f32.gmra.mxu0 %v3178
    %v3251 = vpop.f32.mrf.mxu0
    %v3252 = vadd.f32 0.0, %v3251
    %v3253 = vpop.f32.mrf.mxu0
    %3254 = vdwg.mxu0
    %3255 = vset.pattern.permute.xlu0 1
    %3256 = vperm.xlu0 %3255, %v2775
    %v3257 = vpop.permute.xlu0 %3256
    %3259 = vset.pattern.permute.xlu0 1
    %3260 = vperm.xlu0 %3259, %v2780
    %v3261 = vpop.permute.xlu0 %3260
    %v3263 = vlaneseq
    %v3264 = vshrl.u32 %v3263, 7
    %v3265 = vsub.s32 1, %v3264
    %v3266 = vrot.slane %v2885, %v3265
    %v3267 = vsub.f32 %v3257, %v3266
    %v3268 = vsub.f32 %v3261, %v3266
    %v3269 = vsub.f32 0.0, %v3267
    %v3270 = vsub.f32 0.0, %v3268
    %v3271 = vsel %vm2371, %v3269, -1e+30
    %v3272 = vsel %vm2372, %v3270, -1e+30
    %v3273 = vmul.f32 %v3271, 1.442695
    %v3274 = vpow.pop %v3273
    %v3275 = vmul.f32 %v3272, 1.442695
    %v3276 = vpow.pop %v3275
    %v3277 = vmul.f32 %v2973, %v3274
    %v3278 = vmul.f32 %v2978, %v3276
    %3281 = vrot.lane.b32.xlu0 %v3078, 96
    %v3282 = vpop.permute.xlu0 %3281
    %3283 = vrot.lane.b32.xlu0 %v3079, 96
    %v3284 = vpop.permute.xlu0 %3283
    %v3288 = vsel %vm428, %v3277, 0
    %v3291 = vsel %vm428, %v3278, 0
    %3293 = vmatprep.subr.mxu0 0.0
    %3294 = vmatpush1.msra.mxu0 0.0
    %3295 = vmatprep.subr.mxu0 0.0
    %3296 = vmatpush1.msra.mxu0 0.0
    %3297 = vmatprep.subr.mxu0 0.0
    %3298 = vmatpush1.msra.mxu0 0.0
    %3299 = vmatprep.subr.mxu0 0.0
    %3300 = vmatpush1.msra.mxu0 0.0
    %3301 = vmatprep.subr.mxu0 0.0
    %3302 = vmatpush1.msra.mxu0 0.0
    %3303 = vmatprep.subr.mxu0 0.0
    %3304 = vmatpush1.msra.mxu0 0.0
    %3305 = vmatprep.subr.mxu0 0.0
    %3306 = vmatpush1.msra.mxu0 0.0
    %3307 = vmatprep.subr.mxu0 0.0
    %3308 = vmatpush1.msra.mxu0 0.0
    %3309 = vmatprep.subr.mxu0 0.0
    %3310 = vmatpush1.msra.mxu0 0.0
    %3311 = vmatprep.subr.mxu0 0.0
    %3312 = vmatpush1.msra.mxu0 0.0
    %3313 = vmatprep.subr.mxu0 0.0
    %3314 = vmatpush1.msra.mxu0 0.0
    %3315 = vmatprep.subr.mxu0 0.0
    %3316 = vmatpush1.msra.mxu0 0.0
    %3317 = vmatprep.subr.mxu0 0.0
    %3318 = vmatpush1.msra.mxu0 0.0
    %3319 = vmatprep.subr.mxu0 0.0
    %3320 = vmatpush1.msra.mxu0 0.0
    %3321 = vmatprep.subr.mxu0 0.0
    %3322 = vmatpush1.msra.mxu0 %v3284
    %3323 = vmatprep.subr.mxu0 0.0
    %3324 = vmatpush1.msra.mxu0 %v3282
    %3325 = vmatprep.subr.mxu0 0.0
    %3326 = vmatpush2.msra.mxu0 0.0
    %3327 = vmatprep.subr.mxu0 0.0
    %3328 = vmatpush2.msra.mxu0 0.0
    %3329 = vmatprep.subr.mxu0 0.0
    %3330 = vmatpush2.msra.mxu0 0.0
    %3331 = vmatprep.subr.mxu0 0.0
    %3332 = vmatpush2.msra.mxu0 0.0
    %3333 = vmatprep.subr.mxu0 0.0
    %3334 = vmatpush2.msra.mxu0 0.0
    %3335 = vmatprep.subr.mxu0 0.0
    %3336 = vmatpush2.msra.mxu0 0.0
    %3337 = vmatprep.subr.mxu0 0.0
    %3338 = vmatpush2.msra.mxu0 0.0
    %3339 = vmatprep.subr.mxu0 0.0
    %3340 = vmatpush2.msra.mxu0 0.0
    %3341 = vmatprep.subr.mxu0 0.0
    %3342 = vmatpush2.msra.mxu0 0.0
    %3343 = vmatprep.subr.mxu0 0.0
    %3344 = vmatpush2.msra.mxu0 0.0
    %3345 = vmatprep.subr.mxu0 0.0
    %3346 = vmatpush2.msra.mxu0 0.0
    %3347 = vmatprep.subr.mxu0 0.0
    %3348 = vmatpush2.msra.mxu0 0.0
    %3349 = vmatprep.subr.mxu0 0.0
    %3350 = vmatpush2.msra.mxu0 0.0
    %3351 = vmatprep.subr.mxu0 0.0
    %3352 = vmatpush2.msra.mxu0 0.0
    %3353 = vmatprep.subr.mxu0 0.0
    %3354 = vmatpush2.msra.mxu0 0.0
    %3355 = vmatprep.subr.mxu0 0.0
    %3356 = vmatpush2.msra.mxu0 0.0
    %3357 = vmatprep.mubr.f32.mxu0 0.0
    %3358 = vmatmul.mubr.f32.gmra.mxu0 %v3288
    %v3359 = vpop.f32.mrf.mxu0
    %v3360 = vadd.f32 0.0, %v3359
    %v3361 = vpop.f32.mrf.mxu0
    %3362 = vmatprep.mubr.f32.mxu0 0.0
    %3363 = vmatmul.mubr.f32.gmra.mxu0 %v3291
    %v3364 = vpop.f32.mrf.mxu0
    %v3365 = vadd.f32 0.0, %v3364
    %v3366 = vpop.f32.mrf.mxu0
    %3367 = vdwg.mxu0
    %3370 = vrot.lane.b32.xlu0 %v3360, 32
    %v3371 = vpop.permute.xlu0 %3370
    %3372 = vrot.lane.b32.xlu0 %v3365, 32
    %v3373 = vpop.permute.xlu0 %3372
    %v3376 = vsel %vm144, %v3247, %v3371
    %v3377 = vsel %vm144, %v3252, %v3373
    %v3378 = vmul.f32 %v3112, %v3050
    %v3379 = vmul.f32 %v3113, %v3055
    %v3380 = vadd.f32 %v3376, %v3378
    %v3381 = vadd.f32 %v3377, %v3379
    %v3382 = vlaneseq
    %v3383 = vshrl.u32 %v3382, 7
    %v3384 = vsub.s32 0, %v3383
    %v3385 = vrot.slane %v3149, %v3384
    %v3386 = vmul.f32 %v3385, %v2981
    %v3387 = vmul.f32 %v3385, %v2982
    %v3388 = vmul.f32 %v3136, %v3078
    %v3389 = vmul.f32 %v3137, %v3079
    %3392 = vxpose.xlu0.b32.start [1/16] %v2895, 128
    %3393 = vxpose.xlu0.b32.cont [2/16] %v2897, 128
    %3394 = vxpose.xlu0.b32.cont [3/16] 0.0, 128
    %3395 = vxpose.xlu0.b32.cont [4/16] 0.0, 128
    %3396 = vxpose.xlu0.b32.cont [5/16] 0.0, 128
    %3397 = vxpose.xlu0.b32.cont [6/16] 0.0, 128
    %3398 = vxpose.xlu0.b32.cont [7/16] 0.0, 128
    %3399 = vxpose.xlu0.b32.cont [8/16] 0.0, 128
    %3400 = vxpose.xlu0.b32.cont [9/16] 0.0, 128
    %3401 = vxpose.xlu0.b32.cont [10/16] 0.0, 128
    %3402 = vxpose.xlu0.b32.cont [11/16] 0.0, 128
    %3403 = vxpose.xlu0.b32.cont [12/16] 0.0, 128
    %3404 = vxpose.xlu0.b32.cont [13/16] 0.0, 128
    %3405 = vxpose.xlu0.b32.cont [14/16] 0.0, 128
    %3406 = vxpose.xlu0.b32.cont [15/16] 0.0, 128
    %3407 = vxpose.xlu0.b32.end [16/16] 0.0, 128
    %v3408 = vpop.trf.xlu0
    %v3409 = vpop.trf.xlu0
    %v3410 = vpop.trf.xlu0
    %v3411 = vpop.trf.xlu0
    %v3412 = vpop.trf.xlu0
    %v3413 = vpop.trf.xlu0
    %v3414 = vpop.trf.xlu0
    %v3415 = vpop.trf.xlu0
    %v3416 = vpop.trf.xlu0
    %v3417 = vpop.trf.xlu0
    %v3418 = vpop.trf.xlu0
    %v3419 = vpop.trf.xlu0
    %v3420 = vpop.trf.xlu0
    %v3421 = vpop.trf.xlu0
    %v3422 = vpop.trf.xlu0
    %v3423 = vpop.trf.xlu0
    %v3425 = vsel %vm428, %v3408, 0
    %v3428 = vsel %vm428, %v3409, 0
    %3430 = vmatprep.subr.mxu0 0.0
    %3431 = vmatpush1.msra.mxu0 0.0
    %3432 = vmatprep.subr.mxu0 0.0
    %3433 = vmatpush1.msra.mxu0 0.0
    %3434 = vmatprep.subr.mxu0 0.0
    %3435 = vmatpush1.msra.mxu0 0.0
    %3436 = vmatprep.subr.mxu0 0.0
    %3437 = vmatpush1.msra.mxu0 0.0
    %3438 = vmatprep.subr.mxu0 0.0
    %3439 = vmatpush1.msra.mxu0 0.0
    %3440 = vmatprep.subr.mxu0 0.0
    %3441 = vmatpush1.msra.mxu0 0.0
    %3442 = vmatprep.subr.mxu0 0.0
    %3443 = vmatpush1.msra.mxu0 0.0
    %3444 = vmatprep.subr.mxu0 0.0
    %3445 = vmatpush1.msra.mxu0 0.0
    %3446 = vmatprep.subr.mxu0 0.0
    %3447 = vmatpush1.msra.mxu0 0.0
    %3448 = vmatprep.subr.mxu0 0.0
    %3449 = vmatpush1.msra.mxu0 0.0
    %3450 = vmatprep.subr.mxu0 0.0
    %3451 = vmatpush1.msra.mxu0 0.0
    %3452 = vmatprep.subr.mxu0 0.0
    %3453 = vmatpush1.msra.mxu0 0.0
    %3454 = vmatprep.subr.mxu0 0.0
    %3455 = vmatpush1.msra.mxu0 0.0
    %3456 = vmatprep.subr.mxu0 0.0
    %3457 = vmatpush1.msra.mxu0 0.0
    %3458 = vmatprep.subr.mxu0 0.0
    %3459 = vmatpush1.msra.mxu0 %v3389
    %3460 = vmatprep.subr.mxu0 0.0
    %3461 = vmatpush1.msra.mxu0 %v3388
    %3462 = vmatprep.subr.mxu0 0.0
    %3463 = vmatpush2.msra.mxu0 0.0
    %3464 = vmatprep.subr.mxu0 0.0
    %3465 = vmatpush2.msra.mxu0 0.0
    %3466 = vmatprep.subr.mxu0 0.0
    %3467 = vmatpush2.msra.mxu0 0.0
    %3468 = vmatprep.subr.mxu0 0.0
    %3469 = vmatpush2.msra.mxu0 0.0
    %3470 = vmatprep.subr.mxu0 0.0
    %3471 = vmatpush2.msra.mxu0 0.0
    %3472 = vmatprep.subr.mxu0 0.0
    %3473 = vmatpush2.msra.mxu0 0.0
    %3474 = vmatprep.subr.mxu0 0.0
    %3475 = vmatpush2.msra.mxu0 0.0
    %3476 = vmatprep.subr.mxu0 0.0
    %3477 = vmatpush2.msra.mxu0 0.0
    %3478 = vmatprep.subr.mxu0 0.0
    %3479 = vmatpush2.msra.mxu0 0.0
    %3480 = vmatprep.subr.mxu0 0.0
    %3481 = vmatpush2.msra.mxu0 0.0
    %3482 = vmatprep.subr.mxu0 0.0
    %3483 = vmatpush2.msra.mxu0 0.0
    %3484 = vmatprep.subr.mxu0 0.0
    %3485 = vmatpush2.msra.mxu0 0.0
    %3486 = vmatprep.subr.mxu0 0.0
    %3487 = vmatpush2.msra.mxu0 0.0
    %3488 = vmatprep.subr.mxu0 0.0
    %3489 = vmatpush2.msra.mxu0 0.0
    %3490 = vmatprep.subr.mxu0 0.0
    %3491 = vmatpush2.msra.mxu0 0.0
    %3492 = vmatprep.subr.mxu0 0.0
    %3493 = vmatpush2.msra.mxu0 0.0
    %3494 = vmatprep.mubr.f32.mxu0 0.0
    %3495 = vmatmul.mubr.f32.gmra.mxu0 %v3425
    %v3496 = vpop.f32.mrf.mxu0
    %v3497 = vadd.f32 0.0, %v3496
    %v3498 = vpop.f32.mrf.mxu0
    %3499 = vmatprep.mubr.f32.mxu0 0.0
    %3500 = vmatmul.mubr.f32.gmra.mxu0 %v3428
    %v3501 = vpop.f32.mrf.mxu0
    %v3502 = vadd.f32 0.0, %v3501
    %v3503 = vpop.f32.mrf.mxu0
    %3504 = vdwg.mxu0
    %v3505 = vadd.f32 %v3386, %v3497
    %v3506 = vadd.f32 %v3387, %v3502
    %3507 = vst.msk [vmem:[#allocation4] sm:$0xff] %vm302, %v3505
    %3508 = vst.msk [vmem:[#allocation4 + $0x8] sm:$0xff] %vm302, %v3506
    %v3510 = vlaneseq
    %v3511 = vshrl.u32 %v3510, 7
    %v3512 = vsub.s32 0, %v3511
    %v3513 = vrot.slane %v2403, %v3512
    %v3515 = vmul.f32 %v3513, %v2673
    %v3516 = vmul.f32 %v3513, %v2674
    %v3517 = vadd.f32 %v3380, %v3515
    %v3518 = vadd.f32 %v3381, %v3516
    %v3519 = vsub.f32 0.0, %v2490
    %v3520 = vsub.f32 0.0, %v2496
    %v3521 = vmul.f32 %v3519, 1.442695
    %v3522 = vpow.pop %v3521
    %v3523 = vmul.f32 %v3520, 1.442695
    %v3524 = vpow.pop %v3523
    %v3525 = vadd.f32 %v3522, 1.0
    %v3526 = vadd.f32 %v3524, 1.0
    %v3527 = vrcp.pop %v3525
    %v3528 = vmul.f32 1.0, %v3527
    %v3529 = vrcp.pop %v3526
    %v3530 = vmul.f32 1.0, %v3529
    %v3531 = vmul.f32 %v2490, %v3528
    %v3532 = vmul.f32 %v2496, %v3530
    %v3533 = vmul.f32 %v3517, %v3531
    %v3534 = vmul.f32 %v3518, %v3532
    %v3535 = vmul.f32 %v3533, %v3533
    %v3536 = vmul.f32 %v3534, %v3534
    %v3537 = vsel %vm302, %v3535, 0.0
    %3538 = vadd.xlane.f32.xlu0 %v3537
    %v3539 = vpop.xlane.xlu0 %3538
    %v3540 = vsel %vm302, %v3536, 0.0
    %3541 = vadd.xlane.f32.xlu0 %v3540
    %v3542 = vpop.xlane.xlu0 %3541
    %v3543 = vmul.f32 %v3539, %v1266
    %v3544 = vmul.f32 %v3542, %v1266
    %v3545 = vadd.f32 %v3543, 1e-05
    %v3546 = vadd.f32 %v3544, 1e-05
    %v3547 = vrsqrt.pop %v3545
    %v3548 = vrsqrt.pop %v3546
    %v3549 = vmul.f32 %v3533, %v3547
    %v3550 = vmul.f32 %v3534, %v3548
    %v3552 = vlaneseq
    %v3553 = vshrl.u32 %v3552, 7
    %v3554 = vsub.s32 0, %v3553
    %v3555 = vrot.slane %v2405, %v3554
    %v3557 = vmul.f32 %v3549, %v3555
    %v3558 = vmul.f32 %v3550, %v3555
    %v3559 = vadd.f32 %v2504, %v2518
    %v3560 = vadd.f32 %v2510, %v2518
    %vm3561 = vcmp.gt.f32.partialorder %v3559, 20.0
    %vm3562 = vcmp.gt.f32.partialorder %v3560, 20.0
    %v3563 = vmin.f32 %v3559, 20.0
    %v3564 = vmin.f32 %v3560, 20.0
    %v3565 = vmul.f32 %v3563, 1.442695
    %v3566 = vpow.pop %v3565
    %v3567 = vmul.f32 %v3564, 1.442695
    %v3568 = vpow.pop %v3567
    %v3569 = vadd.f32 %v3566, 1.0
    %v3570 = vadd.f32 %v3568, 1.0
    %v3571 = vlog2.pop %v3569
    %v3572 = vmul.f32 %v3571, 0.6931472
    %v3573 = vlog2.pop %v3570
    %v3574 = vmul.f32 %v3573, 0.6931472
    %v3575 = vsel %vm3561, %v3559, %v3572
    %v3576 = vsel %vm3562, %v3560, %v3574
    %s3577 = scalar_lea.vmem [#allocation5], 4
    %v3578 = vld [vmem:[%s3577] sm:$0x7]
    %3580 = vrot.lane.b32.xlu0 %v3578, 64
    %v3581 = vpop.permute.xlu0 %3580
    %3586 = vrot.lane.b32.xlu0 %v2502, 64
    %v3587 = vpop.permute.xlu0 %3586
    %3588 = vrot.lane.b32.xlu0 %v2504, 64
    %v3589 = vpop.permute.xlu0 %3588
    %3590 = vrot.lane.b32.xlu0 %v2508, 64
    %v3591 = vpop.permute.xlu0 %3590
    %3592 = vrot.lane.b32.xlu0 %v2510, 64
    %v3593 = vpop.permute.xlu0 %3592
    %v3594 = vsel %vm302, %v3587, %v3589
    %v3595 = vsel %vm302, %v3591, %v3593
    %v3598 = vmul.f32 %v2551, %v3594
    %v3599 = vmul.f32 %v2551, %v3595
    %v3600 = vadd.f32 %v2543, %v3598
    %v3601 = vadd.f32 %v2543, %v3599
    %v3602 = vrot.slane %v2502, 1
    %v3603 = vrot.slane %v2508, 1
    %v3604 = vsel %vm328, %v3602, %v3603
    %v3605 = vrot.slane %v2504, 1
    %v3606 = vrot.slane %v2510, 1
    %v3607 = vsel %vm328, %v3605, %v3606
    %v3608 = vrot.slane %v3581, 1
    %v3609 = vsel %vm328, %v3603, %v3608
    %v3610 = vsel %vm328, %v3606, %v3608
    %3611 = vrot.lane.b32.xlu0 %v3604, 64
    %v3612 = vpop.permute.xlu0 %3611
    %3613 = vrot.lane.b32.xlu0 %v3607, 64
    %v3614 = vpop.permute.xlu0 %3613
    %3615 = vrot.lane.b32.xlu0 %v3609, 64
    %v3616 = vpop.permute.xlu0 %3615
    %3617 = vrot.lane.b32.xlu0 %v3610, 64
    %v3618 = vpop.permute.xlu0 %3617
    %v3619 = vsel %vm302, %v3612, %v3614
    %v3620 = vsel %vm302, %v3616, %v3618
    %v3623 = vmul.f32 %v2575, %v3619
    %v3624 = vmul.f32 %v2575, %v3620
    %v3625 = vadd.f32 %v3600, %v3623
    %v3626 = vadd.f32 %v3601, %v3624
    %v3627 = vrot.slane %v2502, 2
    %v3628 = vrot.slane %v2508, 2
    %v3629 = vsel %vm348, %v3627, %v3628
    %v3630 = vrot.slane %v2504, 2
    %v3631 = vrot.slane %v2510, 2
    %v3632 = vsel %vm348, %v3630, %v3631
    %v3633 = vrot.slane %v3581, 2
    %v3634 = vsel %vm348, %v3628, %v3633
    %v3635 = vsel %vm348, %v3631, %v3633
    %3636 = vrot.lane.b32.xlu0 %v3629, 64
    %v3637 = vpop.permute.xlu0 %3636
    %3638 = vrot.lane.b32.xlu0 %v3632, 64
    %v3639 = vpop.permute.xlu0 %3638
    %3640 = vrot.lane.b32.xlu0 %v3634, 64
    %v3641 = vpop.permute.xlu0 %3640
    %3642 = vrot.lane.b32.xlu0 %v3635, 64
    %v3643 = vpop.permute.xlu0 %3642
    %v3644 = vsel %vm302, %v3637, %v3639
    %v3645 = vsel %vm302, %v3641, %v3643
    %v3648 = vmul.f32 %v2604, %v3644
    %v3649 = vmul.f32 %v2604, %v3645
    %v3650 = vadd.f32 %v3625, %v3648
    %v3651 = vadd.f32 %v3626, %v3649
    %v3652 = vrot.slane %v2502, 3
    %v3653 = vrot.slane %v2508, 3
    %v3654 = vsel %vm368, %v3652, %v3653
    %v3655 = vrot.slane %v2504, 3
    %v3656 = vrot.slane %v2510, 3
    %v3657 = vsel %vm368, %v3655, %v3656
    %v3658 = vrot.slane %v3581, 3
    %v3659 = vsel %vm368, %v3653, %v3658
    %v3660 = vsel %vm368, %v3656, %v3658
    %3661 = vrot.lane.b32.xlu0 %v3654, 64
    %v3662 = vpop.permute.xlu0 %3661
    %3663 = vrot.lane.b32.xlu0 %v3657, 64
    %v3664 = vpop.permute.xlu0 %3663
    %3665 = vrot.lane.b32.xlu0 %v3659, 64
    %v3666 = vpop.permute.xlu0 %3665
    %3667 = vrot.lane.b32.xlu0 %v3660, 64
    %v3668 = vpop.permute.xlu0 %3667
    %v3669 = vsel %vm302, %v3662, %v3664
    %v3670 = vsel %vm302, %v3666, %v3668
    %v3673 = vmul.f32 %v2633, %v3669
    %v3674 = vmul.f32 %v2633, %v3670
    %v3675 = vadd.f32 %v3650, %v3673
    %v3676 = vadd.f32 %v3651, %v3674
    %3677 = vst.msk [vmem:[%s3577] sm:$0x7] %vm2659, %v3594
    %v3678 = vsub.f32 0.0, %v3675
    %v3679 = vsub.f32 0.0, %v3676
    %v3680 = vmul.f32 %v3678, 1.442695
    %v3681 = vpow.pop %v3680
    %v3682 = vmul.f32 %v3679, 1.442695
    %v3683 = vpow.pop %v3682
    %v3684 = vadd.f32 %v3681, 1.0
    %v3685 = vadd.f32 %v3683, 1.0
    %v3686 = vrcp.pop %v3684
    %v3687 = vmul.f32 1.0, %v3686
    %v3688 = vrcp.pop %v3685
    %v3689 = vmul.f32 1.0, %v3688
    %v3690 = vmul.f32 %v3675, %v3687
    %v3691 = vmul.f32 %v3676, %v3689
    %v3692 = vmul.f32 %v3575, %v2681
    %v3693 = vmul.f32 %v3576, %v2681
    %v3694 = vsel %vm410, %v3692, 0.0
    %v3695 = vsel %vm410, %v3693, 0.0
    %v3696 = vadd.f32 %v3694, %v3695
    %v3697 = vrot.slane %v3696, 4
    %v3698 = vadd.f32 %v3696, %v3697
    %v3699 = vrot.slane %v3698, 2
    %v3700 = vadd.f32 %v3698, %v3699
    %v3701 = vrot.slane %v3700, 1
    %v3702 = vadd.f32 %v3700, %v3701
    %3705 = vrot.lane.b32.xlu0 %v3692, 96
    %v3706 = vpop.permute.xlu0 %3705
    %3707 = vrot.lane.b32.xlu0 %v3693, 96
    %v3708 = vpop.permute.xlu0 %3707
    %3711 = vmatprep.subr.mxu0 0.0
    %3712 = vmatpush1.msra.mxu0 0.0
    %3713 = vmatprep.subr.mxu0 0.0
    %3714 = vmatpush1.msra.mxu0 0.0
    %3715 = vmatprep.subr.mxu0 0.0
    %3716 = vmatpush1.msra.mxu0 0.0
    %3717 = vmatprep.subr.mxu0 0.0
    %3718 = vmatpush1.msra.mxu0 0.0
    %3719 = vmatprep.subr.mxu0 0.0
    %3720 = vmatpush1.msra.mxu0 0.0
    %3721 = vmatprep.subr.mxu0 0.0
    %3722 = vmatpush1.msra.mxu0 0.0
    %3723 = vmatprep.subr.mxu0 0.0
    %3724 = vmatpush1.msra.mxu0 0.0
    %3725 = vmatprep.subr.mxu0 0.0
    %3726 = vmatpush1.msra.mxu0 0.0
    %3727 = vmatprep.subr.mxu0 0.0
    %3728 = vmatpush1.msra.mxu0 0.0
    %3729 = vmatprep.subr.mxu0 0.0
    %3730 = vmatpush1.msra.mxu0 0.0
    %3731 = vmatprep.subr.mxu0 0.0
    %3732 = vmatpush1.msra.mxu0 0.0
    %3733 = vmatprep.subr.mxu0 0.0
    %3734 = vmatpush1.msra.mxu0 0.0
    %3735 = vmatprep.subr.mxu0 0.0
    %3736 = vmatpush1.msra.mxu0 0.0
    %3737 = vmatprep.subr.mxu0 0.0
    %3738 = vmatpush1.msra.mxu0 0.0
    %3739 = vmatprep.subr.mxu0 0.0
    %3740 = vmatpush1.msra.mxu0 %v3708
    %3741 = vmatprep.subr.mxu0 0.0
    %3742 = vmatpush1.msra.mxu0 %v3706
    %3743 = vmatprep.subr.mxu0 0.0
    %3744 = vmatpush2.msra.mxu0 0.0
    %3745 = vmatprep.subr.mxu0 0.0
    %3746 = vmatpush2.msra.mxu0 0.0
    %3747 = vmatprep.subr.mxu0 0.0
    %3748 = vmatpush2.msra.mxu0 0.0
    %3749 = vmatprep.subr.mxu0 0.0
    %3750 = vmatpush2.msra.mxu0 0.0
    %3751 = vmatprep.subr.mxu0 0.0
    %3752 = vmatpush2.msra.mxu0 0.0
    %3753 = vmatprep.subr.mxu0 0.0
    %3754 = vmatpush2.msra.mxu0 0.0
    %3755 = vmatprep.subr.mxu0 0.0
    %3756 = vmatpush2.msra.mxu0 0.0
    %3757 = vmatprep.subr.mxu0 0.0
    %3758 = vmatpush2.msra.mxu0 0.0
    %3759 = vmatprep.subr.mxu0 0.0
    %3760 = vmatpush2.msra.mxu0 0.0
    %3761 = vmatprep.subr.mxu0 0.0
    %3762 = vmatpush2.msra.mxu0 0.0
    %3763 = vmatprep.subr.mxu0 0.0
    %3764 = vmatpush2.msra.mxu0 0.0
    %3765 = vmatprep.subr.mxu0 0.0
    %3766 = vmatpush2.msra.mxu0 0.0
    %3767 = vmatprep.subr.mxu0 0.0
    %3768 = vmatpush2.msra.mxu0 0.0
    %3769 = vmatprep.subr.mxu0 0.0
    %3770 = vmatpush2.msra.mxu0 0.0
    %3771 = vmatprep.subr.mxu0 0.0
    %3772 = vmatpush2.msra.mxu0 0.0
    %3773 = vmatprep.subr.mxu0 0.0
    %3774 = vmatpush2.msra.mxu0 0.0
    %3775 = vmatprep.mubr.f32.mxu0 0.0
    %3776 = vmatmul.mubr.f32.gmra.mxu0 %v2703
    %v3777 = vpop.f32.mrf.mxu0
    %v3778 = vadd.f32 0.0, %v3777
    %v3779 = vpop.f32.mrf.mxu0
    %3780 = vmatprep.mubr.f32.mxu0 0.0
    %3781 = vmatmul.mubr.f32.gmra.mxu0 %v2706
    %v3782 = vpop.f32.mrf.mxu0
    %v3783 = vadd.f32 0.0, %v3782
    %v3784 = vpop.f32.mrf.mxu0
    %3785 = vdwg.mxu0
    %3786 = vxpose.xlu0.b32.start [1/16] %v3706, 128
    %3787 = vxpose.xlu0.b32.cont [2/16] %v3708, 128
    %3788 = vxpose.xlu0.b32.cont [3/16] 0.0, 128
    %3789 = vxpose.xlu0.b32.cont [4/16] 0.0, 128
    %3790 = vxpose.xlu0.b32.cont [5/16] 0.0, 128
    %3791 = vxpose.xlu0.b32.cont [6/16] 0.0, 128
    %3792 = vxpose.xlu0.b32.cont [7/16] 0.0, 128
    %3793 = vxpose.xlu0.b32.cont [8/16] 0.0, 128
    %3794 = vxpose.xlu0.b32.cont [9/16] 0.0, 128
    %3795 = vxpose.xlu0.b32.cont [10/16] 0.0, 128
    %3796 = vxpose.xlu0.b32.cont [11/16] 0.0, 128
    %3797 = vxpose.xlu0.b32.cont [12/16] 0.0, 128
    %3798 = vxpose.xlu0.b32.cont [13/16] 0.0, 128
    %3799 = vxpose.xlu0.b32.cont [14/16] 0.0, 128
    %3800 = vxpose.xlu0.b32.cont [15/16] 0.0, 128
    %3801 = vxpose.xlu0.b32.end [16/16] 0.0, 128
    %v3802 = vpop.trf.xlu0
    %v3803 = vpop.trf.xlu0
    %v3804 = vpop.trf.xlu0
    %v3805 = vpop.trf.xlu0
    %v3806 = vpop.trf.xlu0
    %v3807 = vpop.trf.xlu0
    %v3808 = vpop.trf.xlu0
    %v3809 = vpop.trf.xlu0
    %v3810 = vpop.trf.xlu0
    %v3811 = vpop.trf.xlu0
    %v3812 = vpop.trf.xlu0
    %v3813 = vpop.trf.xlu0
    %v3814 = vpop.trf.xlu0
    %v3815 = vpop.trf.xlu0
    %v3816 = vpop.trf.xlu0
    %v3817 = vpop.trf.xlu0
    %v3819 = vsel %vm428, %v3802, 0
    %3821 = vmatprep.subr.mxu0 0.0
    %3822 = vmatpush1.msra.mxu0 0.0
    %3823 = vmatprep.subr.mxu0 0.0
    %3824 = vmatpush1.msra.mxu0 0.0
    %3825 = vmatprep.subr.mxu0 0.0
    %3826 = vmatpush1.msra.mxu0 0.0
    %3827 = vmatprep.subr.mxu0 0.0
    %3828 = vmatpush1.msra.mxu0 0.0
    %3829 = vmatprep.subr.mxu0 0.0
    %3830 = vmatpush1.msra.mxu0 0.0
    %3831 = vmatprep.subr.mxu0 0.0
    %3832 = vmatpush1.msra.mxu0 0.0
    %3833 = vmatprep.subr.mxu0 0.0
    %3834 = vmatpush1.msra.mxu0 0.0
    %3835 = vmatprep.subr.mxu0 0.0
    %3836 = vmatpush1.msra.mxu0 0.0
    %3837 = vmatprep.subr.mxu0 0.0
    %3838 = vmatpush1.msra.mxu0 0.0
    %3839 = vmatprep.subr.mxu0 0.0
    %3840 = vmatpush1.msra.mxu0 0.0
    %3841 = vmatprep.subr.mxu0 0.0
    %3842 = vmatpush1.msra.mxu0 0.0
    %3843 = vmatprep.subr.mxu0 0.0
    %3844 = vmatpush1.msra.mxu0 0.0
    %3845 = vmatprep.subr.mxu0 0.0
    %3846 = vmatpush1.msra.mxu0 0.0
    %3847 = vmatprep.subr.mxu0 0.0
    %3848 = vmatpush1.msra.mxu0 0.0
    %3849 = vmatprep.subr.mxu0 0.0
    %3850 = vmatpush1.msra.mxu0 %v2370
    %3851 = vmatprep.subr.mxu0 0.0
    %3852 = vmatpush1.msra.mxu0 %v2369
    %3853 = vmatprep.subr.mxu0 0.0
    %3854 = vmatpush2.msra.mxu0 0.0
    %3855 = vmatprep.subr.mxu0 0.0
    %3856 = vmatpush2.msra.mxu0 0.0
    %3857 = vmatprep.subr.mxu0 0.0
    %3858 = vmatpush2.msra.mxu0 0.0
    %3859 = vmatprep.subr.mxu0 0.0
    %3860 = vmatpush2.msra.mxu0 0.0
    %3861 = vmatprep.subr.mxu0 0.0
    %3862 = vmatpush2.msra.mxu0 0.0
    %3863 = vmatprep.subr.mxu0 0.0
    %3864 = vmatpush2.msra.mxu0 0.0
    %3865 = vmatprep.subr.mxu0 0.0
    %3866 = vmatpush2.msra.mxu0 0.0
    %3867 = vmatprep.subr.mxu0 0.0
    %3868 = vmatpush2.msra.mxu0 0.0
    %3869 = vmatprep.subr.mxu0 0.0
    %3870 = vmatpush2.msra.mxu0 0.0
    %3871 = vmatprep.subr.mxu0 0.0
    %3872 = vmatpush2.msra.mxu0 0.0
    %3873 = vmatprep.subr.mxu0 0.0
    %3874 = vmatpush2.msra.mxu0 0.0
    %3875 = vmatprep.subr.mxu0 0.0
    %3876 = vmatpush2.msra.mxu0 0.0
    %3877 = vmatprep.subr.mxu0 0.0
    %3878 = vmatpush2.msra.mxu0 0.0
    %3879 = vmatprep.subr.mxu0 0.0
    %3880 = vmatpush2.msra.mxu0 0.0
    %3881 = vmatprep.subr.mxu0 0.0
    %3882 = vmatpush2.msra.mxu0 0.0
    %3883 = vmatprep.subr.mxu0 0.0
    %3884 = vmatpush2.msra.mxu0 0.0
    %3885 = vmatprep.mubr.f32.mxu0 0.0
    %3886 = vmatmul.mubr.f32.gmra.mxu0 %v3819
    %v3887 = vpop.f32.mrf.mxu0
    %v3888 = vadd.f32 0.0, %v3887
    %v3889 = vpop.f32.mrf.mxu0
    %3890 = vdwg.mxu0
    %3893 = vrot.lane.b32.xlu0 %v3690, 48
    %v3894 = vpop.permute.xlu0 %3893
    %3895 = vrot.lane.b32.xlu0 %v3691, 48
    %v3896 = vpop.permute.xlu0 %3895
    %3897 = vrot.lane.b32.xlu0 %v3690, 64
    %v3898 = vpop.permute.xlu0 %3897
    %3899 = vrot.lane.b32.xlu0 %v3691, 64
    %v3900 = vpop.permute.xlu0 %3899
    %v3901 = vsel %vm428, %v3894, 0
    %v3903 = vsel %vm428, %v3896, 0
    %v3905 = vsel %vm428, %v3898, 0
    %v3907 = vsel %vm428, %v3900, 0
    %3909 = vmatprep.subr.mxu0 0.0
    %3910 = vmatpush1.xpose.msra.mxu0 0.0
    %3911 = vmatprep.subr.mxu0 0.0
    %3912 = vmatpush1.xpose.msra.mxu0 0.0
    %3913 = vmatprep.subr.mxu0 0.0
    %3914 = vmatpush1.xpose.msra.mxu0 0.0
    %3915 = vmatprep.subr.mxu0 0.0
    %3916 = vmatpush1.xpose.msra.mxu0 0.0
    %3917 = vmatprep.subr.mxu0 0.0
    %3918 = vmatpush1.xpose.msra.mxu0 0.0
    %3919 = vmatprep.subr.mxu0 0.0
    %3920 = vmatpush1.xpose.msra.mxu0 0.0
    %3921 = vmatprep.subr.mxu0 0.0
    %3922 = vmatpush1.xpose.msra.mxu0 0.0
    %3923 = vmatprep.subr.mxu0 0.0
    %3924 = vmatpush1.xpose.msra.mxu0 0.0
    %3925 = vmatprep.subr.mxu0 0.0
    %3926 = vmatpush1.xpose.msra.mxu0 0.0
    %3927 = vmatprep.subr.mxu0 0.0
    %3928 = vmatpush1.xpose.msra.mxu0 0.0
    %3929 = vmatprep.subr.mxu0 0.0
    %3930 = vmatpush1.xpose.msra.mxu0 0.0
    %3931 = vmatprep.subr.mxu0 0.0
    %3932 = vmatpush1.xpose.msra.mxu0 0.0
    %3933 = vmatprep.subr.mxu0 0.0
    %3934 = vmatpush1.xpose.msra.mxu0 0.0
    %3935 = vmatprep.subr.mxu0 0.0
    %3936 = vmatpush1.xpose.msra.mxu0 0.0
    %3937 = vmatprep.subr.mxu0 0.0
    %3938 = vmatpush1.xpose.msra.mxu0 %v3907
    %3939 = vmatprep.subr.mxu0 0.0
    %3940 = vmatpush1.xpose.msra.mxu0 %v3905
    %3941 = vmatprep.subr.mxu0 0.0
    %3942 = vmatpush2.xpose.msra.mxu0 0.0
    %3943 = vmatprep.subr.mxu0 0.0
    %3944 = vmatpush2.xpose.msra.mxu0 0.0
    %3945 = vmatprep.subr.mxu0 0.0
    %3946 = vmatpush2.xpose.msra.mxu0 0.0
    %3947 = vmatprep.subr.mxu0 0.0
    %3948 = vmatpush2.xpose.msra.mxu0 0.0
    %3949 = vmatprep.subr.mxu0 0.0
    %3950 = vmatpush2.xpose.msra.mxu0 0.0
    %3951 = vmatprep.subr.mxu0 0.0
    %3952 = vmatpush2.xpose.msra.mxu0 0.0
    %3953 = vmatprep.subr.mxu0 0.0
    %3954 = vmatpush2.xpose.msra.mxu0 0.0
    %3955 = vmatprep.subr.mxu0 0.0
    %3956 = vmatpush2.xpose.msra.mxu0 0.0
    %3957 = vmatprep.subr.mxu0 0.0
    %3958 = vmatpush2.xpose.msra.mxu0 0.0
    %3959 = vmatprep.subr.mxu0 0.0
    %3960 = vmatpush2.xpose.msra.mxu0 0.0
    %3961 = vmatprep.subr.mxu0 0.0
    %3962 = vmatpush2.xpose.msra.mxu0 0.0
    %3963 = vmatprep.subr.mxu0 0.0
    %3964 = vmatpush2.xpose.msra.mxu0 0.0
    %3965 = vmatprep.subr.mxu0 0.0
    %3966 = vmatpush2.xpose.msra.mxu0 0.0
    %3967 = vmatprep.subr.mxu0 0.0
    %3968 = vmatpush2.xpose.msra.mxu0 0.0
    %3969 = vmatprep.subr.mxu0 0.0
    %3970 = vmatpush2.xpose.msra.mxu0 0.0
    %3971 = vmatprep.subr.mxu0 0.0
    %3972 = vmatpush2.xpose.msra.mxu0 0.0
    %3973 = vmatprep.mubr.f32.mxu0 0.0
    %3974 = vmatmul.mubr.f32.gmra.mxu0 %v3901
    %v3975 = vpop.f32.mrf.mxu0
    %v3976 = vadd.f32 0.0, %v3975
    %v3977 = vpop.f32.mrf.mxu0
    %3978 = vmatprep.mubr.f32.mxu0 0.0
    %3979 = vmatmul.mubr.f32.gmra.mxu0 %v3903
    %v3980 = vpop.f32.mrf.mxu0
    %v3981 = vadd.f32 0.0, %v3980
    %v3982 = vpop.f32.mrf.mxu0
    %3983 = vdwg.mxu0
    %s3984 = scalar_lea.vmem [#allocation4], 16
    %v3985 = vld [vmem:[%s3984] sm:$0xff]
    %v3986 = vld [vmem:[%s3984 + $0x8] sm:$0xff]
    %3987 = vmatprep.subr.mxu0 0.0
    %3988 = vmatpush1.msra.mxu0 0.0
    %3989 = vmatprep.subr.mxu0 0.0
    %3990 = vmatpush1.msra.mxu0 0.0
    %3991 = vmatprep.subr.mxu0 0.0
    %3992 = vmatpush1.msra.mxu0 0.0
    %3993 = vmatprep.subr.mxu0 0.0
    %3994 = vmatpush1.msra.mxu0 0.0
    %3995 = vmatprep.subr.mxu0 0.0
    %3996 = vmatpush1.msra.mxu0 0.0
    %3997 = vmatprep.subr.mxu0 0.0
    %3998 = vmatpush1.msra.mxu0 0.0
    %3999 = vmatprep.subr.mxu0 0.0
    %4000 = vmatpush1.msra.mxu0 0.0
    %4001 = vmatprep.subr.mxu0 0.0
    %4002 = vmatpush1.msra.mxu0 0.0
    %4003 = vmatprep.subr.mxu0 0.0
    %4004 = vmatpush1.msra.mxu0 0.0
    %4005 = vmatprep.subr.mxu0 0.0
    %4006 = vmatpush1.msra.mxu0 0.0
    %4007 = vmatprep.subr.mxu0 0.0
    %4008 = vmatpush1.msra.mxu0 0.0
    %4009 = vmatprep.subr.mxu0 0.0
    %4010 = vmatpush1.msra.mxu0 0.0
    %4011 = vmatprep.subr.mxu0 0.0
    %4012 = vmatpush1.msra.mxu0 0.0
    %4013 = vmatprep.subr.mxu0 0.0
    %4014 = vmatpush1.msra.mxu0 0.0
    %4015 = vmatprep.subr.mxu0 0.0
    %4016 = vmatpush1.msra.mxu0 %v3986
    %4017 = vmatprep.subr.mxu0 0.0
    %4018 = vmatpush1.msra.mxu0 %v3985
    %4019 = vmatprep.subr.mxu0 0.0
    %4020 = vmatpush2.msra.mxu0 0.0
    %4021 = vmatprep.subr.mxu0 0.0
    %4022 = vmatpush2.msra.mxu0 0.0
    %4023 = vmatprep.subr.mxu0 0.0
    %4024 = vmatpush2.msra.mxu0 0.0
    %4025 = vmatprep.subr.mxu0 0.0
    %4026 = vmatpush2.msra.mxu0 0.0
    %4027 = vmatprep.subr.mxu0 0.0
    %4028 = vmatpush2.msra.mxu0 0.0
    %4029 = vmatprep.subr.mxu0 0.0
    %4030 = vmatpush2.msra.mxu0 0.0
    %4031 = vmatprep.subr.mxu0 0.0
    %4032 = vmatpush2.msra.mxu0 0.0
    %4033 = vmatprep.subr.mxu0 0.0
    %4034 = vmatpush2.msra.mxu0 0.0
    %4035 = vmatprep.subr.mxu0 0.0
    %4036 = vmatpush2.msra.mxu0 0.0
    %4037 = vmatprep.subr.mxu0 0.0
    %4038 = vmatpush2.msra.mxu0 0.0
    %4039 = vmatprep.subr.mxu0 0.0
    %4040 = vmatpush2.msra.mxu0 0.0
    %4041 = vmatprep.subr.mxu0 0.0
    %4042 = vmatpush2.msra.mxu0 0.0
    %4043 = vmatprep.subr.mxu0 0.0
    %4044 = vmatpush2.msra.mxu0 0.0
    %4045 = vmatprep.subr.mxu0 0.0
    %4046 = vmatpush2.msra.mxu0 0.0
    %4047 = vmatprep.subr.mxu0 0.0
    %4048 = vmatpush2.msra.mxu0 0.0
    %4049 = vmatprep.subr.mxu0 0.0
    %4050 = vmatpush2.msra.mxu0 0.0
    %4051 = vmatprep.mubr.f32.mxu0 0.0
    %4052 = vmatmul.mubr.f32.gmra.mxu0 %v3901
    %v4053 = vpop.f32.mrf.mxu0
    %v4054 = vadd.f32 0.0, %v4053
    %v4055 = vpop.f32.mrf.mxu0
    %4056 = vmatprep.mubr.f32.mxu0 0.0
    %4057 = vmatmul.mubr.f32.gmra.mxu0 %v3903
    %v4058 = vpop.f32.mrf.mxu0
    %v4059 = vadd.f32 0.0, %v4058
    %v4060 = vpop.f32.mrf.mxu0
    %4061 = vdwg.mxu0
    %4063 = vset.pattern.permute.xlu0 32
    %4064 = vperm.xlu0 %4063, %v3575
    %v4065 = vpop.permute.xlu0 %4064
    %4068 = vset.pattern.permute.xlu0 32
    %4069 = vperm.xlu0 %4068, %v3576
    %v4070 = vpop.permute.xlu0 %4069
    %4072 = vset.pattern.permute.xlu0 33
    %4073 = vperm.xlu0 %4072, %v3575
    %v4074 = vpop.permute.xlu0 %4073
    %4076 = vset.pattern.permute.xlu0 33
    %4077 = vperm.xlu0 %4076, %v3576
    %v4078 = vpop.permute.xlu0 %4077
    %v4080 = vsel %vm144, %v4065, %v4074
    %v4081 = vsel %vm144, %v4070, %v4078
    %v4082 = vmul.f32 %v4080, %v3690
    %v4083 = vmul.f32 %v4081, %v3691
    %4086 = vrot.lane.b32.xlu0 %v3778, 32
    %v4087 = vpop.permute.xlu0 %4086
    %4088 = vrot.lane.b32.xlu0 %v3783, 32
    %v4089 = vpop.permute.xlu0 %4088
    %v4092 = vsub.f32 %v3702, %v4087
    %v4093 = vsub.f32 %v3702, %v4089
    %v4094 = vmul.f32 %v4092, 1.442695
    %v4095 = vpow.pop %v4094
    %v4096 = vmul.f32 %v4093, 1.442695
    %v4097 = vpow.pop %v4096
    %4099 = vset.pattern.permute.xlu0 32
    %4100 = vperm.xlu0 %4099, %v4095
    %v4101 = vpop.permute.xlu0 %4100
    %4104 = vset.pattern.permute.xlu0 32
    %4105 = vperm.xlu0 %4104, %v4097
    %v4106 = vpop.permute.xlu0 %4105
    %4108 = vset.pattern.permute.xlu0 33
    %4109 = vperm.xlu0 %4108, %v4095
    %v4110 = vpop.permute.xlu0 %4109
    %4112 = vset.pattern.permute.xlu0 33
    %4113 = vperm.xlu0 %4112, %v4097
    %v4114 = vpop.permute.xlu0 %4113
    %v4116 = vsel %vm144, %v4101, %v4110
    %v4117 = vsel %vm144, %v4106, %v4114
    %v4118 = vmul.f32 %v3778, 1.442695
    %v4119 = vpow.pop %v4118
    %v4120 = vmul.f32 %v3783, 1.442695
    %v4121 = vpow.pop %v4120
    %4123 = vset.pattern.permute.xlu0 0
    %4124 = vperm.xlu0 %4123, %v4119
    %v4125 = vpop.permute.xlu0 %4124
    %4128 = vset.pattern.permute.xlu0 0
    %4129 = vperm.xlu0 %4128, %v4121
    %v4130 = vpop.permute.xlu0 %4129
    %4132 = vset.pattern.permute.xlu0 1
    %4133 = vperm.xlu0 %4132, %v4119
    %v4134 = vpop.permute.xlu0 %4133
    %4136 = vset.pattern.permute.xlu0 1
    %4137 = vperm.xlu0 %4136, %v4121
    %v4138 = vpop.permute.xlu0 %4137
    %v4140 = vsel %vm144, %v4125, %v4134
    %v4141 = vsel %vm144, %v4130, %v4138
    %v4142 = vmul.f32 %v3702, 1.442695
    %v4143 = vpow.pop %v4142
    %4145 = vset.pattern.permute.xlu0 32
    %4146 = vperm.xlu0 %4145, %v4143
    %v4147 = vpop.permute.xlu0 %4146
    %4149 = vset.pattern.permute.xlu0 33
    %4150 = vperm.xlu0 %4149, %v4143
    %v4151 = vpop.permute.xlu0 %4150
    %v4153 = vsel %vm144, %v4147, %v4151
    %4154 = vset.pattern.permute.xlu0 0
    %4155 = vperm.xlu0 %4154, %v3778
    %v4156 = vpop.permute.xlu0 %4155
    %4158 = vset.pattern.permute.xlu0 0
    %4159 = vperm.xlu0 %4158, %v3783
    %v4160 = vpop.permute.xlu0 %4159
    %v4162 = vlaneseq
    %v4163 = vshrl.u32 %v4162, 7
    %v4164 = vsub.s32 0, %v4163
    %v4165 = vrot.slane %v3888, %v4164
    %v4166 = vsub.f32 %v4156, %v4165
    %v4167 = vsub.f32 %v4160, %v4165
    %v4168 = vsub.f32 0.0, %v4166
    %v4169 = vsub.f32 0.0, %v4167
    %v4170 = vsel %vm2371, %v4168, -1e+30
    %v4171 = vsel %vm2372, %v4169, -1e+30
    %v4172 = vmul.f32 %v4170, 1.442695
    %v4173 = vpow.pop %v4172
    %v4174 = vmul.f32 %v4171, 1.442695
    %v4175 = vpow.pop %v4174
    %v4176 = vmul.f32 %v3976, %v4173
    %v4177 = vmul.f32 %v3981, %v4175
    %v4179 = vsel %vm428, %v4176, 0
    %v4182 = vsel %vm428, %v4177, 0
    %4184 = vmatprep.subr.mxu0 0.0
    %4185 = vmatpush1.msra.mxu0 0.0
    %4186 = vmatprep.subr.mxu0 0.0
    %4187 = vmatpush1.msra.mxu0 0.0
    %4188 = vmatprep.subr.mxu0 0.0
    %4189 = vmatpush1.msra.mxu0 0.0
    %4190 = vmatprep.subr.mxu0 0.0
    %4191 = vmatpush1.msra.mxu0 0.0
    %4192 = vmatprep.subr.mxu0 0.0
    %4193 = vmatpush1.msra.mxu0 0.0
    %4194 = vmatprep.subr.mxu0 0.0
    %4195 = vmatpush1.msra.mxu0 0.0
    %4196 = vmatprep.subr.mxu0 0.0
    %4197 = vmatpush1.msra.mxu0 0.0
    %4198 = vmatprep.subr.mxu0 0.0
    %4199 = vmatpush1.msra.mxu0 0.0
    %4200 = vmatprep.subr.mxu0 0.0
    %4201 = vmatpush1.msra.mxu0 0.0
    %4202 = vmatprep.subr.mxu0 0.0
    %4203 = vmatpush1.msra.mxu0 0.0
    %4204 = vmatprep.subr.mxu0 0.0
    %4205 = vmatpush1.msra.mxu0 0.0
    %4206 = vmatprep.subr.mxu0 0.0
    %4207 = vmatpush1.msra.mxu0 0.0
    %4208 = vmatprep.subr.mxu0 0.0
    %4209 = vmatpush1.msra.mxu0 0.0
    %4210 = vmatprep.subr.mxu0 0.0
    %4211 = vmatpush1.msra.mxu0 0.0
    %4212 = vmatprep.subr.mxu0 0.0
    %4213 = vmatpush1.msra.mxu0 %v4083
    %4214 = vmatprep.subr.mxu0 0.0
    %4215 = vmatpush1.msra.mxu0 %v4082
    %4216 = vmatprep.subr.mxu0 0.0
    %4217 = vmatpush2.msra.mxu0 0.0
    %4218 = vmatprep.subr.mxu0 0.0
    %4219 = vmatpush2.msra.mxu0 0.0
    %4220 = vmatprep.subr.mxu0 0.0
    %4221 = vmatpush2.msra.mxu0 0.0
    %4222 = vmatprep.subr.mxu0 0.0
    %4223 = vmatpush2.msra.mxu0 0.0
    %4224 = vmatprep.subr.mxu0 0.0
    %4225 = vmatpush2.msra.mxu0 0.0
    %4226 = vmatprep.subr.mxu0 0.0
    %4227 = vmatpush2.msra.mxu0 0.0
    %4228 = vmatprep.subr.mxu0 0.0
    %4229 = vmatpush2.msra.mxu0 0.0
    %4230 = vmatprep.subr.mxu0 0.0
    %4231 = vmatpush2.msra.mxu0 0.0
    %4232 = vmatprep.subr.mxu0 0.0
    %4233 = vmatpush2.msra.mxu0 0.0
    %4234 = vmatprep.subr.mxu0 0.0
    %4235 = vmatpush2.msra.mxu0 0.0
    %4236 = vmatprep.subr.mxu0 0.0
    %4237 = vmatpush2.msra.mxu0 0.0
    %4238 = vmatprep.subr.mxu0 0.0
    %4239 = vmatpush2.msra.mxu0 0.0
    %4240 = vmatprep.subr.mxu0 0.0
    %4241 = vmatpush2.msra.mxu0 0.0
    %4242 = vmatprep.subr.mxu0 0.0
    %4243 = vmatpush2.msra.mxu0 0.0
    %4244 = vmatprep.subr.mxu0 0.0
    %4245 = vmatpush2.msra.mxu0 0.0
    %4246 = vmatprep.subr.mxu0 0.0
    %4247 = vmatpush2.msra.mxu0 0.0
    %4248 = vmatprep.mubr.f32.mxu0 0.0
    %4249 = vmatmul.mubr.f32.gmra.mxu0 %v4179
    %v4250 = vpop.f32.mrf.mxu0
    %v4251 = vadd.f32 0.0, %v4250
    %v4252 = vpop.f32.mrf.mxu0
    %4253 = vmatprep.mubr.f32.mxu0 0.0
    %4254 = vmatmul.mubr.f32.gmra.mxu0 %v4182
    %v4255 = vpop.f32.mrf.mxu0
    %v4256 = vadd.f32 0.0, %v4255
    %v4257 = vpop.f32.mrf.mxu0
    %4258 = vdwg.mxu0
    %4259 = vset.pattern.permute.xlu0 1
    %4260 = vperm.xlu0 %4259, %v3778
    %v4261 = vpop.permute.xlu0 %4260
    %4263 = vset.pattern.permute.xlu0 1
    %4264 = vperm.xlu0 %4263, %v3783
    %v4265 = vpop.permute.xlu0 %4264
    %v4267 = vlaneseq
    %v4268 = vshrl.u32 %v4267, 7
    %v4269 = vsub.s32 1, %v4268
    %v4270 = vrot.slane %v3888, %v4269
    %v4271 = vsub.f32 %v4261, %v4270
    %v4272 = vsub.f32 %v4265, %v4270
    %v4273 = vsub.f32 0.0, %v4271
    %v4274 = vsub.f32 0.0, %v4272
    %v4275 = vsel %vm2371, %v4273, -1e+30
    %v4276 = vsel %vm2372, %v4274, -1e+30
    %v4277 = vmul.f32 %v4275, 1.442695
    %v4278 = vpow.pop %v4277
    %v4279 = vmul.f32 %v4276, 1.442695
    %v4280 = vpow.pop %v4279
    %v4281 = vmul.f32 %v3976, %v4278
    %v4282 = vmul.f32 %v3981, %v4280
    %4285 = vrot.lane.b32.xlu0 %v4082, 96
    %v4286 = vpop.permute.xlu0 %4285
    %4287 = vrot.lane.b32.xlu0 %v4083, 96
    %v4288 = vpop.permute.xlu0 %4287
    %v4292 = vsel %vm428, %v4281, 0
    %v4295 = vsel %vm428, %v4282, 0
    %4297 = vmatprep.subr.mxu0 0.0
    %4298 = vmatpush1.msra.mxu0 0.0
    %4299 = vmatprep.subr.mxu0 0.0
    %4300 = vmatpush1.msra.mxu0 0.0
    %4301 = vmatprep.subr.mxu0 0.0
    %4302 = vmatpush1.msra.mxu0 0.0
    %4303 = vmatprep.subr.mxu0 0.0
    %4304 = vmatpush1.msra.mxu0 0.0
    %4305 = vmatprep.subr.mxu0 0.0
    %4306 = vmatpush1.msra.mxu0 0.0
    %4307 = vmatprep.subr.mxu0 0.0
    %4308 = vmatpush1.msra.mxu0 0.0
    %4309 = vmatprep.subr.mxu0 0.0
    %4310 = vmatpush1.msra.mxu0 0.0
    %4311 = vmatprep.subr.mxu0 0.0
    %4312 = vmatpush1.msra.mxu0 0.0
    %4313 = vmatprep.subr.mxu0 0.0
    %4314 = vmatpush1.msra.mxu0 0.0
    %4315 = vmatprep.subr.mxu0 0.0
    %4316 = vmatpush1.msra.mxu0 0.0
    %4317 = vmatprep.subr.mxu0 0.0
    %4318 = vmatpush1.msra.mxu0 0.0
    %4319 = vmatprep.subr.mxu0 0.0
    %4320 = vmatpush1.msra.mxu0 0.0
    %4321 = vmatprep.subr.mxu0 0.0
    %4322 = vmatpush1.msra.mxu0 0.0
    %4323 = vmatprep.subr.mxu0 0.0
    %4324 = vmatpush1.msra.mxu0 0.0
    %4325 = vmatprep.subr.mxu0 0.0
    %4326 = vmatpush1.msra.mxu0 %v4288
    %4327 = vmatprep.subr.mxu0 0.0
    %4328 = vmatpush1.msra.mxu0 %v4286
    %4329 = vmatprep.subr.mxu0 0.0
    %4330 = vmatpush2.msra.mxu0 0.0
    %4331 = vmatprep.subr.mxu0 0.0
    %4332 = vmatpush2.msra.mxu0 0.0
    %4333 = vmatprep.subr.mxu0 0.0
    %4334 = vmatpush2.msra.mxu0 0.0
    %4335 = vmatprep.subr.mxu0 0.0
    %4336 = vmatpush2.msra.mxu0 0.0
    %4337 = vmatprep.subr.mxu0 0.0
    %4338 = vmatpush2.msra.mxu0 0.0
    %4339 = vmatprep.subr.mxu0 0.0
    %4340 = vmatpush2.msra.mxu0 0.0
    %4341 = vmatprep.subr.mxu0 0.0
    %4342 = vmatpush2.msra.mxu0 0.0
    %4343 = vmatprep.subr.mxu0 0.0
    %4344 = vmatpush2.msra.mxu0 0.0
    %4345 = vmatprep.subr.mxu0 0.0
    %4346 = vmatpush2.msra.mxu0 0.0
    %4347 = vmatprep.subr.mxu0 0.0
    %4348 = vmatpush2.msra.mxu0 0.0
    %4349 = vmatprep.subr.mxu0 0.0
    %4350 = vmatpush2.msra.mxu0 0.0
    %4351 = vmatprep.subr.mxu0 0.0
    %4352 = vmatpush2.msra.mxu0 0.0
    %4353 = vmatprep.subr.mxu0 0.0
    %4354 = vmatpush2.msra.mxu0 0.0
    %4355 = vmatprep.subr.mxu0 0.0
    %4356 = vmatpush2.msra.mxu0 0.0
    %4357 = vmatprep.subr.mxu0 0.0
    %4358 = vmatpush2.msra.mxu0 0.0
    %4359 = vmatprep.subr.mxu0 0.0
    %4360 = vmatpush2.msra.mxu0 0.0
    %4361 = vmatprep.mubr.f32.mxu0 0.0
    %4362 = vmatmul.mubr.f32.gmra.mxu0 %v4292
    %v4363 = vpop.f32.mrf.mxu0
    %v4364 = vadd.f32 0.0, %v4363
    %v4365 = vpop.f32.mrf.mxu0
    %4366 = vmatprep.mubr.f32.mxu0 0.0
    %4367 = vmatmul.mubr.f32.gmra.mxu0 %v4295
    %v4368 = vpop.f32.mrf.mxu0
    %v4369 = vadd.f32 0.0, %v4368
    %v4370 = vpop.f32.mrf.mxu0
    %4371 = vdwg.mxu0
    %4374 = vrot.lane.b32.xlu0 %v4364, 32
    %v4375 = vpop.permute.xlu0 %4374
    %4376 = vrot.lane.b32.xlu0 %v4369, 32
    %v4377 = vpop.permute.xlu0 %4376
    %v4380 = vsel %vm144, %v4251, %v4375
    %v4381 = vsel %vm144, %v4256, %v4377
    %v4382 = vmul.f32 %v4116, %v4054
    %v4383 = vmul.f32 %v4117, %v4059
    %v4384 = vadd.f32 %v4380, %v4382
    %v4385 = vadd.f32 %v4381, %v4383
    %v4386 = vlaneseq
    %v4387 = vshrl.u32 %v4386, 7
    %v4388 = vsub.s32 0, %v4387
    %v4389 = vrot.slane %v4153, %v4388
    %v4390 = vmul.f32 %v4389, %v3985
    %v4391 = vmul.f32 %v4389, %v3986
    %v4392 = vmul.f32 %v4140, %v4082
    %v4393 = vmul.f32 %v4141, %v4083
    %4396 = vxpose.xlu0.b32.start [1/16] %v3898, 128
    %4397 = vxpose.xlu0.b32.cont [2/16] %v3900, 128
    %4398 = vxpose.xlu0.b32.cont [3/16] 0.0, 128
    %4399 = vxpose.xlu0.b32.cont [4/16] 0.0, 128
    %4400 = vxpose.xlu0.b32.cont [5/16] 0.0, 128
    %4401 = vxpose.xlu0.b32.cont [6/16] 0.0, 128
    %4402 = vxpose.xlu0.b32.cont [7/16] 0.0, 128
    %4403 = vxpose.xlu0.b32.cont [8/16] 0.0, 128
    %4404 = vxpose.xlu0.b32.cont [9/16] 0.0, 128
    %4405 = vxpose.xlu0.b32.cont [10/16] 0.0, 128
    %4406 = vxpose.xlu0.b32.cont [11/16] 0.0, 128
    %4407 = vxpose.xlu0.b32.cont [12/16] 0.0, 128
    %4408 = vxpose.xlu0.b32.cont [13/16] 0.0, 128
    %4409 = vxpose.xlu0.b32.cont [14/16] 0.0, 128
    %4410 = vxpose.xlu0.b32.cont [15/16] 0.0, 128
    %4411 = vxpose.xlu0.b32.end [16/16] 0.0, 128
    %v4412 = vpop.trf.xlu0
    %v4413 = vpop.trf.xlu0
    %v4414 = vpop.trf.xlu0
    %v4415 = vpop.trf.xlu0
    %v4416 = vpop.trf.xlu0
    %v4417 = vpop.trf.xlu0
    %v4418 = vpop.trf.xlu0
    %v4419 = vpop.trf.xlu0
    %v4420 = vpop.trf.xlu0
    %v4421 = vpop.trf.xlu0
    %v4422 = vpop.trf.xlu0
    %v4423 = vpop.trf.xlu0
    %v4424 = vpop.trf.xlu0
    %v4425 = vpop.trf.xlu0
    %v4426 = vpop.trf.xlu0
    %v4427 = vpop.trf.xlu0
    %v4429 = vsel %vm428, %v4412, 0
    %v4432 = vsel %vm428, %v4413, 0
    %4434 = vmatprep.subr.mxu0 0.0
    %4435 = vmatpush1.msra.mxu0 0.0
    %4436 = vmatprep.subr.mxu0 0.0
    %4437 = vmatpush1.msra.mxu0 0.0
    %4438 = vmatprep.subr.mxu0 0.0
    %4439 = vmatpush1.msra.mxu0 0.0
    %4440 = vmatprep.subr.mxu0 0.0
    %4441 = vmatpush1.msra.mxu0 0.0
    %4442 = vmatprep.subr.mxu0 0.0
    %4443 = vmatpush1.msra.mxu0 0.0
    %4444 = vmatprep.subr.mxu0 0.0
    %4445 = vmatpush1.msra.mxu0 0.0
    %4446 = vmatprep.subr.mxu0 0.0
    %4447 = vmatpush1.msra.mxu0 0.0
    %4448 = vmatprep.subr.mxu0 0.0
    %4449 = vmatpush1.msra.mxu0 0.0
    %4450 = vmatprep.subr.mxu0 0.0
    %4451 = vmatpush1.msra.mxu0 0.0
    %4452 = vmatprep.subr.mxu0 0.0
    %4453 = vmatpush1.msra.mxu0 0.0
    %4454 = vmatprep.subr.mxu0 0.0
    %4455 = vmatpush1.msra.mxu0 0.0
    %4456 = vmatprep.subr.mxu0 0.0
    %4457 = vmatpush1.msra.mxu0 0.0
    %4458 = vmatprep.subr.mxu0 0.0
    %4459 = vmatpush1.msra.mxu0 0.0
    %4460 = vmatprep.subr.mxu0 0.0
    %4461 = vmatpush1.msra.mxu0 0.0
    %4462 = vmatprep.subr.mxu0 0.0
    %4463 = vmatpush1.msra.mxu0 %v4393
    %4464 = vmatprep.subr.mxu0 0.0
    %4465 = vmatpush1.msra.mxu0 %v4392
    %4466 = vmatprep.subr.mxu0 0.0
    %4467 = vmatpush2.msra.mxu0 0.0
    %4468 = vmatprep.subr.mxu0 0.0
    %4469 = vmatpush2.msra.mxu0 0.0
    %4470 = vmatprep.subr.mxu0 0.0
    %4471 = vmatpush2.msra.mxu0 0.0
    %4472 = vmatprep.subr.mxu0 0.0
    %4473 = vmatpush2.msra.mxu0 0.0
    %4474 = vmatprep.subr.mxu0 0.0
    %4475 = vmatpush2.msra.mxu0 0.0
    %4476 = vmatprep.subr.mxu0 0.0
    %4477 = vmatpush2.msra.mxu0 0.0
    %4478 = vmatprep.subr.mxu0 0.0
    %4479 = vmatpush2.msra.mxu0 0.0
    %4480 = vmatprep.subr.mxu0 0.0
    %4481 = vmatpush2.msra.mxu0 0.0
    %4482 = vmatprep.subr.mxu0 0.0
    %4483 = vmatpush2.msra.mxu0 0.0
    %4484 = vmatprep.subr.mxu0 0.0
    %4485 = vmatpush2.msra.mxu0 0.0
    %4486 = vmatprep.subr.mxu0 0.0
    %4487 = vmatpush2.msra.mxu0 0.0
    %4488 = vmatprep.subr.mxu0 0.0
    %4489 = vmatpush2.msra.mxu0 0.0
    %4490 = vmatprep.subr.mxu0 0.0
    %4491 = vmatpush2.msra.mxu0 0.0
    %4492 = vmatprep.subr.mxu0 0.0
    %4493 = vmatpush2.msra.mxu0 0.0
    %4494 = vmatprep.subr.mxu0 0.0
    %4495 = vmatpush2.msra.mxu0 0.0
    %4496 = vmatprep.subr.mxu0 0.0
    %4497 = vmatpush2.msra.mxu0 0.0
    %4498 = vmatprep.mubr.f32.mxu0 0.0
    %4499 = vmatmul.mubr.f32.gmra.mxu0 %v4429
    %v4500 = vpop.f32.mrf.mxu0
    %v4501 = vadd.f32 0.0, %v4500
    %v4502 = vpop.f32.mrf.mxu0
    %4503 = vmatprep.mubr.f32.mxu0 0.0
    %4504 = vmatmul.mubr.f32.gmra.mxu0 %v4432
    %v4505 = vpop.f32.mrf.mxu0
    %v4506 = vadd.f32 0.0, %v4505
    %v4507 = vpop.f32.mrf.mxu0
    %4508 = vdwg.mxu0
    %v4509 = vadd.f32 %v4390, %v4501
    %v4510 = vadd.f32 %v4391, %v4506
    %4511 = vst.msk [vmem:[%s3984] sm:$0xff] %vm302, %v4509
    %4512 = vst.msk [vmem:[%s3984 + $0x8] sm:$0xff] %vm302, %v4510
    %v4513 = vmul.f32 %v3513, %v3690
    %v4514 = vmul.f32 %v3513, %v3691
    %v4515 = vadd.f32 %v4384, %v4513
    %v4516 = vadd.f32 %v4385, %v4514
    %v4517 = vsub.f32 0.0, %v2502
    %v4518 = vsub.f32 0.0, %v2508
    %v4519 = vmul.f32 %v4517, 1.442695
    %v4520 = vpow.pop %v4519
    %v4521 = vmul.f32 %v4518, 1.442695
    %v4522 = vpow.pop %v4521
    %v4523 = vadd.f32 %v4520, 1.0
    %v4524 = vadd.f32 %v4522, 1.0
    %v4525 = vrcp.pop %v4523
    %v4526 = vmul.f32 1.0, %v4525
    %v4527 = vrcp.pop %v4524
    %v4528 = vmul.f32 1.0, %v4527
    %v4529 = vmul.f32 %v2502, %v4526
    %v4530 = vmul.f32 %v2508, %v4528
    %v4531 = vmul.f32 %v4515, %v4529
    %v4532 = vmul.f32 %v4516, %v4530
    %v4533 = vmul.f32 %v4531, %v4531
    %v4534 = vmul.f32 %v4532, %v4532
    %v4535 = vsel %vm302, %v4533, 0.0
    %4536 = vadd.xlane.f32.xlu0 %v4535
    %v4537 = vpop.xlane.xlu0 %4536
    %v4538 = vsel %vm302, %v4534, 0.0
    %4539 = vadd.xlane.f32.xlu0 %v4538
    %v4540 = vpop.xlane.xlu0 %4539
    %v4541 = vmul.f32 %v4537, %v1266
    %v4542 = vmul.f32 %v4540, %v1266
    %v4543 = vadd.f32 %v4541, 1e-05
    %v4544 = vadd.f32 %v4542, 1e-05
    %v4545 = vrsqrt.pop %v4543
    %v4546 = vrsqrt.pop %v4544
    %v4547 = vmul.f32 %v4531, %v4545
    %v4548 = vmul.f32 %v4532, %v4546
    %v4549 = vmul.f32 %v4547, %v3555
    %v4550 = vmul.f32 %v4548, %v3555
    %v4552 = vsel %vm302, %v3557, 0
    %v4555 = vsel %vm302, %v3558, 0
    %v4558 = vsel %vm302, %v4549, 0
    %v4561 = vsel %vm302, %v4550, 0
    %4563 = vmatprep.subr.mxu0 0.0
    %4564 = vmatpush1.msra.mxu0 0.0
    %4565 = vmatprep.subr.mxu0 0.0
    %4566 = vmatpush1.msra.mxu0 0.0
    %4567 = vmatprep.subr.mxu0 0.0
    %4568 = vmatpush1.msra.mxu0 0.0
    %4569 = vmatprep.subr.mxu0 0.0
    %4570 = vmatpush1.msra.mxu0 0.0
    %4571 = vmatprep.subr.mxu0 0.0
    %4572 = vmatpush1.msra.mxu0 0.0
    %4573 = vmatprep.subr.mxu0 0.0
    %4574 = vmatpush1.msra.mxu0 0.0
    %4575 = vmatprep.subr.mxu0 0.0
    %4576 = vmatpush1.msra.mxu0 0.0
    %4577 = vmatprep.subr.mxu0 0.0
    %4578 = vmatpush1.msra.mxu0 0.0
    %4579 = vmatprep.subr.mxu0 0.0
    %4580 = vmatpush1.msra.mxu0 %v2390
    %4581 = vmatprep.subr.mxu0 0.0
    %4582 = vmatpush1.msra.mxu0 %v2389
    %4583 = vmatprep.subr.mxu0 0.0
    %4584 = vmatpush1.msra.mxu0 %v2388
    %4585 = vmatprep.subr.mxu0 0.0
    %4586 = vmatpush1.msra.mxu0 %v2387
    %4587 = vmatprep.subr.mxu0 0.0
    %4588 = vmatpush1.msra.mxu0 %v2386
    %4589 = vmatprep.subr.mxu0 0.0
    %4590 = vmatpush1.msra.mxu0 %v2385
    %4591 = vmatprep.subr.mxu0 0.0
    %4592 = vmatpush1.msra.mxu0 %v2384
    %4593 = vmatprep.subr.mxu0 0.0
    %4594 = vmatpush1.msra.mxu0 %v2383
    %4595 = vmatprep.subr.mxu0 0.0
    %4596 = vmatpush2.msra.mxu0 0.0
    %4597 = vmatprep.subr.mxu0 0.0
    %4598 = vmatpush2.msra.mxu0 0.0
    %4599 = vmatprep.subr.mxu0 0.0
    %4600 = vmatpush2.msra.mxu0 0.0
    %4601 = vmatprep.subr.mxu0 0.0
    %4602 = vmatpush2.msra.mxu0 0.0
    %4603 = vmatprep.subr.mxu0 0.0
    %4604 = vmatpush2.msra.mxu0 0.0
    %4605 = vmatprep.subr.mxu0 0.0
    %4606 = vmatpush2.msra.mxu0 0.0
    %4607 = vmatprep.subr.mxu0 0.0
    %4608 = vmatpush2.msra.mxu0 0.0
    %4609 = vmatprep.subr.mxu0 0.0
    %4610 = vmatpush2.msra.mxu0 0.0
    %4611 = vmatprep.subr.mxu0 0.0
    %4612 = vmatpush2.msra.mxu0 0.0
    %4613 = vmatprep.subr.mxu0 0.0
    %4614 = vmatpush2.msra.mxu0 0.0
    %4615 = vmatprep.subr.mxu0 0.0
    %4616 = vmatpush2.msra.mxu0 0.0
    %4617 = vmatprep.subr.mxu0 0.0
    %4618 = vmatpush2.msra.mxu0 0.0
    %4619 = vmatprep.subr.mxu0 0.0
    %4620 = vmatpush2.msra.mxu0 0.0
    %4621 = vmatprep.subr.mxu0 0.0
    %4622 = vmatpush2.msra.mxu0 0.0
    %4623 = vmatprep.subr.mxu0 0.0
    %4624 = vmatpush2.msra.mxu0 0.0
    %4625 = vmatprep.subr.mxu0 0.0
    %4626 = vmatpush2.msra.mxu0 0.0
    %4627 = vmatprep.mubr.f32.mxu0 0.0
    %4628 = vmatmul.mubr.f32.gmra.mxu0 %v4552
    %v4629 = vpop.f32.mrf.mxu0
    %v4630 = vadd.f32 0.0, %v4629
    %v4631 = vpop.f32.mrf.mxu0
    %4632 = vmatprep.mubr.f32.mxu0 0.0
    %4633 = vmatmul.mubr.f32.gmra.mxu0 %v4555
    %v4634 = vpop.f32.mrf.mxu0
    %v4635 = vadd.f32 0.0, %v4634
    %v4636 = vpop.f32.mrf.mxu0
    %4637 = vmatprep.mubr.f32.mxu0 0.0
    %4638 = vmatmul.mubr.f32.gmra.mxu0 %v4558
    %v4639 = vpop.f32.mrf.mxu0
    %v4640 = vadd.f32 0.0, %v4639
    %v4641 = vpop.f32.mrf.mxu0
    %4642 = vmatprep.mubr.f32.mxu0 0.0
    %4643 = vmatmul.mubr.f32.gmra.mxu0 %v4561
    %v4644 = vpop.f32.mrf.mxu0
    %v4645 = vadd.f32 0.0, %v4644
    %v4646 = vpop.f32.mrf.mxu0
    %4647 = vdwg.mxu0
    %4648 = vst.msk [vmem:[#allocation10] sm:$0xff] %vm144, %v4630
    %4649 = vst.msk [vmem:[#allocation10 + $0x8] sm:$0xff] %vm144, %v4635
    %s4650 = scalar_lea.vmem [#allocation10], 16
    %4651 = vst.msk [vmem:[%s4650] sm:$0xff] %vm144, %v4640
    %4652 = vst.msk [vmem:[%s4650 + $0x8] sm:$0xff] %vm144, %v4645
    // Predicated region
    $region50: #{tpu_custom_call.1} parent=1 // pred_check
      _
    $region51: #{tpu_custom_call.1} parent=1 // pred_check_branch
      %4654 = sbr.rel (0) target = $region53
    $region52: #{tpu_custom_call.1} parent=1 // pred_region
      %s4656 = ssub.s32 512, 512
      %4657 = vsyncadd [#allocation8], %s4656
      %s4658 = sshll.u32 [#allocation9], 4
      %s4659 = int_to_ptr.vmem [resolvable:$true] %s4658
      %4664 = dma.vmem_to_hbm [thread:$0]  %s4659, 512, %s10, [#allocation8], 128, 128, 8
    $region53: #{tpu_custom_call.1} parent=1 // pred_fallthru
      _
    // Predicated region
    $region54: #{tpu_custom_call.1} parent=1 // pred_check
      _
    $region55: #{tpu_custom_call.1} parent=1 // pred_check_branch
      %4666 = sbr.rel (0) target = $region57
    $region56: #{tpu_custom_call.1} parent=1 // pred_region
      %s4667 = ssub.s32 0, 0
      %s4668 = smul.u32 2, %s4667
      %s4670 = ssub.s32 512, 512
      %4671 = vsyncadd [#allocation11], %s4670
      %s4672 = smul.addr %s4668, 128
      %s4673 = scalar_lea.hbm %s11, %s4672
      %s4674 = sshll.u32 [#allocation10], 4
      %s4675 = int_to_ptr.vmem [resolvable:$true] %s4674
      %4680 = dma.vmem_to_hbm [thread:$0]  %s4675, 512, %s4673, [#allocation11], 128, 128, 8
    $region57: #{tpu_custom_call.1} parent=1 // pred_fallthru
      _
    // Predicated region
    $region58: #{tpu_custom_call.1} parent=1 // pred_check
      _
    $region59: #{tpu_custom_call.1} parent=1 // pred_check_branch
      %4682 = sbr.rel (0) target = $region61
    $region60: #{tpu_custom_call.1} parent=1 // pred_region
      %4683 = dma.done [#allocation8], 512
    $region61: #{tpu_custom_call.1} parent=1 // pred_fallthru
      _
    // Predicated region
    $region62: #{tpu_custom_call.1} parent=1 // pred_check
      _
    $region63: #{tpu_custom_call.1} parent=1 // pred_check_branch
      %4685 = sbr.rel (0) target = $region65
    $region64: #{tpu_custom_call.1} parent=1 // pred_region
      %4686 = dma.done [#allocation11], 512
    $region65: #{tpu_custom_call.1} parent=1 // pred_fallthru
      _
    %4687 = vsyncpa [#allocation7], 1
    %4688 = vsyncpa [#allocation8], 1
    %4689 = vsyncpa [#allocation11], 1

</llo_original>
